<compile_context>
chip_gen: v7x
topology: tpu7x:2x2x1
jax: 0.10.0
libtpu: 0.0.40
codegen_flags: <defaults>
</compile_context>

<pallas_src>
import jax
import jax.numpy as jnp
from jax.experimental import pallas as pl
from jax.experimental.pallas import tpu as pltpu

LANE = 128


def _round_up(v, m):
    return (v + m - 1) // m * m


# ----------------------------- Pallas kernel ------------------------------

def _fused_basic_block_kernel(x_top_ref, x_cur_ref, x_bot_ref,
                              w1_ref, b1_ref, w2_ref, b2_ref,
                              out_ref,
                              xp_ref, o1p_ref, p1_ref, p2_ref):
    """One (batch sample, row tile) step of the fused basic block.

    x_top_ref : (1, 2,  W, C)  f32  image rows [r0-2, r0-1]  (ignored at the first tile)
    x_cur_ref : (1, TR, W, C)  f32  image rows [r0, r0+TR)   (also the residual)
    x_bot_ref : (1, 2,  W, C)  f32  image rows [r0+TR, r0+TR+1] (ignored at the last tile)
    w1/w2     : (9*Cp, Cp)     bf16 im2col weights, BN scale folded in
    b1/b2     : (1, Cp)        f32  folded BN biases
    out_ref   : (1, TR, W, C)  f32
    xp_ref    : (TR+4, W+2, Cp) bf16  spatially padded x tile (2-row halo)
    o1p_ref   : (TR+2, W+2, Cp) bf16  spatially padded conv1 output (1-row halo)
    p1_ref    : (TR+2, W, 9*Cp) bf16  im2col patches for conv1
    p2_ref    : (TR,   W, 9*Cp) bf16  im2col patches for conv2
    """
    TR = xp_ref.shape[0] - 4
    W = xp_ref.shape[1] - 2
    Cp = xp_ref.shape[2]
    C = out_ref.shape[3]
    bf16 = jnp.bfloat16

    r = pl.program_id(1)
    is_first = r == 0
    is_last = r == pl.num_programs(1) - 1

    # ---- stage x rows (2-row halo) into the zero-padded VMEM buffer -------------
    # Only the two 1-px halo columns are cleared each step; the interior (all rows,
    # all Cp lanes) is fully overwritten below -> no full-buffer memset.
    top = jnp.where(is_first, jnp.zeros((2, W, C), x_top_ref.dtype), x_top_ref[0])
    bot = jnp.where(is_last, jnp.zeros((2, W, C), x_bot_ref.dtype), x_bot_ref[0])
    cur = x_cur_ref[0]                                           # f32, reused as residual
    stack = jnp.concatenate([top, cur, bot], axis=0).astype(bf16)   # (TR+4, W, C)
    if C < Cp:                                                   # lane-pad channels once
        stack = jnp.concatenate(
            [stack, jnp.zeros((TR + 4, W, Cp - C), bf16)], axis=-1)

    xp_ref[:, pl.ds(0, 1), :] = jnp.zeros((TR + 4, 1, Cp), bf16)
    xp_ref[:, pl.ds(W + 1, 1), :] = jnp.zeros((TR + 4, 1, Cp), bf16)
    xp_ref[:, pl.ds(1, W), :] = stack

    # ---- conv1 + bn1 + relu over TR+2 rows (interior + 1 halo row each side) -----
    # Taps are written straight into an aligned patches scratch (lane offsets are
    # multiples of 128), then a single bf16 MXU matmul with f32 accumulation.
    for tap in range(9):
        dy, dx = tap // 3, tap % 3
        p1_ref[:, :, pl.ds(tap * Cp, Cp)] = xp_ref[pl.ds(dy, TR + 2), pl.ds(dx, W), :]
    y1 = jnp.dot(p1_ref[...].reshape((TR + 2) * W, 9 * Cp), w1_ref[...],
                 preferred_element_type=jnp.float32)
    y1 = jnp.maximum(y1 + b1_ref[...], 0.0)                     # bias + ReLU in f32

    o1p_ref[:, pl.ds(0, 1), :] = jnp.zeros((TR + 2, 1, Cp), bf16)
    o1p_ref[:, pl.ds(W + 1, 1), :] = jnp.zeros((TR + 2, 1, Cp), bf16)
    o1p_ref[:, pl.ds(1, W), :] = y1.astype(bf16).reshape(TR + 2, W, Cp)

    # conv2 must see zero padding rows (not conv1 evaluated past the image) at the
    # image top / bottom.
    @pl.when(is_first)
    def _():
        o1p_ref[pl.ds(0, 1), pl.ds(1, W), :] = jnp.zeros((1, W, Cp), bf16)

    @pl.when(is_last)
    def _():
        o1p_ref[pl.ds(TR + 1, 1), pl.ds(1, W), :] = jnp.zeros((1, W, Cp), bf16)

    # ---- conv2 + bn2 over the TR interior rows ------------------------------------
    for tap in range(9):
        dy, dx = tap // 3, tap % 3
        p2_ref[:, :, pl.ds(tap * Cp, Cp)] = o1p_ref[pl.ds(dy, TR), pl.ds(dx, W), :]
    y2 = jnp.dot(p2_ref[...].reshape(TR * W, 9 * Cp), w2_ref[...],
                 preferred_element_type=jnp.float32)
    y2 = (y2 + b2_ref[...]).reshape(TR, W, Cp)

    # residual add (f32, straight from the resident x tile) + final ReLU.
    out = jnp.maximum(y2[:, :, :C] + cur, 0.0)
    out_ref[0] = out.astype(out_ref.dtype)


# ------------------------------ JAX wrappers --------------------------------

def _fold_bn(gamma, beta, running_mean, running_var, eps=1e-5):
    scale = gamma / jnp.sqrt(running_var + eps)
    bias = beta - running_mean * scale
    return scale, bias


def _prep_weight(w_hwio, scale, c_in, c_out, cp):
    """Fold BN scale into the weight (in f32), pad channels to the lane width, flatten
    to im2col rows (row index = (dy*3+dx)*cp + cin), cast to bf16 for the MXU."""
    w = w_hwio.astype(jnp.float32) * scale.astype(jnp.float32)        # scale over Cout
    wp = jnp.zeros((3, 3, cp, cp), jnp.float32).at[:, :, :c_in, :c_out].set(w)
    return wp.reshape(9 * cp, cp).astype(jnp.bfloat16)


def basic_block_bfp_forward(x_nchw, params):
    """BasicBlock_BFP forward (stride=1, downsample=None). NCHW in / NCHW out."""
    x = jnp.transpose(x_nchw, (0, 2, 3, 1)).astype(jnp.float32)       # -> NHWC
    N, H, W, C = x.shape
    Cp = _round_up(C, LANE)

    s1, b1 = _fold_bn(params["bn1_gamma"], params["bn1_beta"],
                      params["bn1_mean"], params["bn1_var"])
    s2, b2 = _fold_bn(params["bn2_gamma"], params["bn2_beta"],
                      params["bn2_mean"], params["bn2_var"])
    w1 = _prep_weight(params["w1"], s1, C, C, Cp)                     # (9*Cp, Cp) bf16
    w2 = _prep_weight(params["w2"], s2, C, C, Cp)
    b1p = jnp.zeros((1, Cp), jnp.float32).at[0, :C].set(b1.astype(jnp.float32))
    b2p = jnp.zeros((1, Cp), jnp.float32).at[0, :C].set(b2.astype(jnp.float32))

    # Row tiling: TR interior rows per grid step with a 2-row halo.
    TR = next((t for t in (8, 4, 2) if H % t == 0), H)
    R = H // TR

    if R > 1:
        # Halo rows fetched as 2-row blocks of x (index maps clamped in-range; the
        # kernel substitutes zeros at the image top/bottom).
        x_top_in, x_bot_in = x, x
        top_map = lambda n, r: (n, jnp.maximum(r * (TR // 2) - 1, 0), 0, 0)
        bot_map = lambda n, r: (n, jnp.minimum(r * (TR // 2) + TR // 2, H // 2 - 1), 0, 0)
    else:
        # Single row tile (odd or small H): halo contents are never used.
        x_top_in = x_bot_in = jnp.zeros((N, 2, W, C), jnp.float32)
        top_map = bot_map = lambda n, r: (n, 0, 0, 0)

    # Explicit scoped-VMEM budget: per-step working set with headroom.
    bf2, f4 = 2, 4
    scratch_bytes = ((TR + 4) * (W + 2) * Cp + (TR + 2) * (W + 2) * Cp +
                     (TR + 2) * W * 9 * Cp + TR * W * 9 * Cp) * bf2
    block_bytes = ((TR + 4) * W * C + TR * W * C) * f4 * 2            # x/out blocks, 2x buffered
    weight_bytes = 2 * (9 * Cp * Cp * bf2 + Cp * f4) * 2              # w/b (grid-invariant, but 2x buffered)
    vmem_limit = int(min(64 * 1024 * 1024,
                         max(32 * 1024 * 1024,
                             2 * (scratch_bytes + block_bytes + weight_bytes))))

    out = pl.pallas_call(
        _fused_basic_block_kernel,
        out_shape=jax.ShapeDtypeStruct((N, H, W, C), jnp.float32),
        grid_spec=pltpu.PrefetchScalarGridSpec(
            num_scalar_prefetch=0,
            grid=(N, R),
            in_specs=[
                pl.BlockSpec((1, 2, W, C), top_map),                   # top halo rows
                pl.BlockSpec((1, TR, W, C), lambda n, r: (n, r, 0, 0)),  # interior / residual
                pl.BlockSpec((1, 2, W, C), bot_map),                   # bottom halo rows
                # Grid-invariant operands (constant index maps -> fetched once).
                pl.BlockSpec((9 * Cp, Cp), lambda n, r: (0, 0)),       # w1 (BN1 folded)
                pl.BlockSpec((1, Cp), lambda n, r: (0, 0)),            # b1
                pl.BlockSpec((9 * Cp, Cp), lambda n, r: (0, 0)),       # w2 (BN2 folded)
                pl.BlockSpec((1, Cp), lambda n, r: (0, 0)),            # b2
            ],
            out_specs=pl.BlockSpec((1, TR, W, C), lambda n, r: (n, r, 0, 0)),
            scratch_shapes=[
                pltpu.VMEM((TR + 4, W + 2, Cp), jnp.bfloat16),         # padded x tile
                pltpu.VMEM((TR + 2, W + 2, Cp), jnp.bfloat16),         # padded conv1 output
                pltpu.VMEM((TR + 2, W, 9 * Cp), jnp.bfloat16),         # conv1 im2col patches
                pltpu.VMEM((TR, W, 9 * Cp), jnp.bfloat16),             # conv2 im2col patches
            ],
        ),
        compiler_params=pltpu.CompilerParams(
            dimension_semantics=("parallel", "parallel"),
            vmem_limit_bytes=vmem_limit),
    )(x_top_in, x, x_bot_in, w1, b1p, w2, b2p)

    return jnp.transpose(out, (0, 3, 1, 2))                           # -> NCHW


# --------------------------- pure-JAX reference ------------------------------

def _ref_forward(x_nchw, params, bf16_inputs=False):
    """Reference. bf16_inputs=True rounds conv inputs/weights to bf16 (matching the
    kernel's MXU precision) while keeping accumulation, bias, residual and ReLU in f32."""
    def conv(x_nhwc, w_hwio):
        return jax.lax.conv_general_dilated(
            x_nhwc, w_hwio, window_strides=(1, 1), padding=((1, 1), (1, 1)),
            dimension_numbers=("NHWC", "HWIO", "NHWC"),
            precision=jax.lax.Precision.HIGHEST)

    def q(a):
        return a.astype(jnp.bfloat16).astype(jnp.float32) if bf16_inputs else a

    x = jnp.transpose(x_nchw, (0, 2, 3, 1)).astype(jnp.float32)
    residual = x
    s1, b1 = _fold_bn(params["bn1_gamma"], params["bn1_beta"],
                      params["bn1_mean"], params["bn1_var"])
    s2, b2 = _fold_bn(params["bn2_gamma"], params["bn2_beta"],
                      params["bn2_mean"], params["bn2_var"])
    out = jnp.maximum(conv(q(x), q(params["w1"].astype(jnp.float32) * s1)) + b1, 0.0)
    out = conv(q(out), q(params["w2"].astype(jnp.float32) * s2)) + b2 + residual
    out = jnp.maximum(out, 0.0)
    return jnp.transpose(out, (0, 3, 1, 2))


# ---------------------------------- main -------------------------------------

if __name__ == "__main__":
    key = jax.random.PRNGKey(0)
    N, C, H, W = 2, 4, 16, 16     # inplanes == planes == 4, stride=1, downsample=None
    (k_x, k_w1, k_w2, k_g1, k_b1, k_g2, k_b2,
     k_m1, k_v1, k_m2, k_v2) = jax.random.split(key, 11)

    x_nchw = jax.random.normal(k_x, (N, C, H, W), jnp.float32)

    # Conv weights: PyTorch layout (Cout, Cin, 3, 3) -> HWIO.
    w1_oihw = 0.1 * jax.random.normal(k_w1, (C, C, 3, 3), jnp.float32)
    w2_oihw = 0.1 * jax.random.normal(k_w2, (C, C, 3, 3), jnp.float32)
    params = {
        "w1": jnp.transpose(w1_oihw, (2, 3, 1, 0)),
        "w2": jnp.transpose(w2_oihw, (2, 3, 1, 0)),
        "bn1_gamma": 1.0 + 0.1 * jax.random.normal(k_g1, (C,), jnp.float32),
        "bn1_beta": 0.1 * jax.random.normal(k_b1, (C,), jnp.float32),
        "bn1_mean": 0.05 * jax.random.normal(k_m1, (C,), jnp.float32),
        "bn1_var": jnp.abs(1.0 + 0.1 * jax.random.normal(k_v1, (C,), jnp.float32)),
        "bn2_gamma": 1.0 + 0.1 * jax.random.normal(k_g2, (C,), jnp.float32),
        "bn2_beta": 0.1 * jax.random.normal(k_b2, (C,), jnp.float32),
        "bn2_mean": 0.05 * jax.random.normal(k_m2, (C,), jnp.float32),
        "bn2_var": jnp.abs(1.0 + 0.1 * jax.random.normal(k_v2, (C,), jnp.float32)),
    }

    out = jax.block_until_ready(basic_block_bfp_forward(x_nchw, params))
    assert out.shape == (N, C, H, W), out.shape

    # Tight check vs. a reference that applies the same bf16 rounding to conv inputs
    # (isolates kernel bugs from quantization), loose check vs. the exact f32 module.
    ref_q = jax.block_until_ready(_ref_forward(x_nchw, params, bf16_inputs=True))
    ref_f = jax.block_until_ready(_ref_forward(x_nchw, params, bf16_inputs=False))
    err_q = float(jnp.max(jnp.abs(out - ref_q)))
    err_f = float(jnp.max(jnp.abs(out - ref_f)))
    assert err_q < 3e-3, ("kernel vs bf16-rounded reference", err_q)
    assert err_f < 1e-1, ("kernel vs f32 reference", err_f)
    print("KERNEL_OK")
</pallas_src>

<mosaic_0001>
module attributes {stable_mosaic.version = 11 : i64} {
  func.func @_fused_basic_block_kernel(%arg0: i32, %arg1: i32, %arg2: memref<1x2x16x4xf32, #tpu.memory_space<vmem>>, %arg3: memref<1x8x16x4xf32, #tpu.memory_space<vmem>>, %arg4: memref<1x2x16x4xf32, #tpu.memory_space<vmem>>, %arg5: memref<1152x128xbf16, #tpu.memory_space<vmem>>, %arg6: memref<1x128xf32, #tpu.memory_space<vmem>>, %arg7: memref<1152x128xbf16, #tpu.memory_space<vmem>>, %arg8: memref<1x128xf32, #tpu.memory_space<vmem>>, %arg9: memref<1x8x16x4xf32, #tpu.memory_space<vmem>>, %arg10: memref<12x18x128xbf16, #tpu.memory_space<vmem>>, %arg11: memref<10x18x128xbf16, #tpu.memory_space<vmem>>, %arg12: memref<10x16x1152xbf16, #tpu.memory_space<vmem>>, %arg13: memref<8x16x1152xbf16, #tpu.memory_space<vmem>>) attributes {dimension_semantics = [#tpu.dimension_semantics<parallel>, #tpu.dimension_semantics<parallel>], iteration_bounds = array<i64: 2, 2>, scalar_prefetch = 0 : i64, scratch_operands = 4 : i64, tpu.core_type = #tpu.core_type<tc>, window_params = [{transform_indices = @transform_0, window_bounds = array<i64: 1, 2, 16, 4>}, {transform_indices = @transform_1, window_bounds = array<i64: 1, 8, 16, 4>}, {transform_indices = @transform_2, window_bounds = array<i64: 1, 2, 16, 4>}, {pipeline_mode = #tpu.pipeline_mode<synchronous>, transform_indices = @transform_3, window_bounds = array<i64: 1152, 128>}, {pipeline_mode = #tpu.pipeline_mode<synchronous>, transform_indices = @transform_4, window_bounds = array<i64: 1, 128>}, {pipeline_mode = #tpu.pipeline_mode<synchronous>, transform_indices = @transform_5, window_bounds = array<i64: 1152, 128>}, {pipeline_mode = #tpu.pipeline_mode<synchronous>, transform_indices = @transform_6, window_bounds = array<i64: 1, 128>}, {transform_indices = @transform_7, window_bounds = array<i64: 1, 8, 16, 4>}]} {
    %c0_i32 = arith.constant 0 : i32
    %0 = arith.cmpi eq, %arg1, %c0_i32 : i32
    %c1_i32 = arith.constant 1 : i32
    %1 = arith.cmpi eq, %arg1, %c1_i32 : i32
    %cst = arith.constant 0.000000e+00 : f32
    %2 = vector.broadcast %cst : f32 to vector<2x16x4xf32>
    %c0 = arith.constant 0 : index
    %c0_0 = arith.constant 0 : index
    %c0_1 = arith.constant 0 : index
    %c0_2 = arith.constant 0 : index
    %3 = vector.load %arg2[%c0, %c0_0, %c0_1, %c0_2] : memref<1x2x16x4xf32, #tpu.memory_space<vmem>>, vector<1x2x16x4xf32>
    %4 = vector.shape_cast %3 : vector<1x2x16x4xf32> to vector<2x16x4xf32>
    %5 = arith.select %0, %2, %4 : vector<2x16x4xf32>
    %cst_3 = arith.constant 0.000000e+00 : f32
    %6 = vector.broadcast %cst_3 : f32 to vector<2x16x4xf32>
    %c0_4 = arith.constant 0 : index
    %c0_5 = arith.constant 0 : index
    %c0_6 = arith.constant 0 : index
    %c0_7 = arith.constant 0 : index
    %7 = vector.load %arg4[%c0_4, %c0_5, %c0_6, %c0_7] : memref<1x2x16x4xf32, #tpu.memory_space<vmem>>, vector<1x2x16x4xf32>
    %8 = vector.shape_cast %7 : vector<1x2x16x4xf32> to vector<2x16x4xf32>
    %9 = arith.select %1, %6, %8 : vector<2x16x4xf32>
    %c0_8 = arith.constant 0 : index
    %c0_9 = arith.constant 0 : index
    %c0_10 = arith.constant 0 : index
    %c0_11 = arith.constant 0 : index
    %10 = vector.load %arg3[%c0_8, %c0_9, %c0_10, %c0_11] : memref<1x8x16x4xf32, #tpu.memory_space<vmem>>, vector<1x8x16x4xf32>
    %11 = vector.shape_cast %10 : vector<1x8x16x4xf32> to vector<8x16x4xf32>
    %12 = tpu.concatenate %5, %11, %9 in 0 : vector<2x16x4xf32>, vector<8x16x4xf32>, vector<2x16x4xf32> -> vector<12x16x4xf32>
    %13 = arith.truncf %12 : vector<12x16x4xf32> to vector<12x16x4xbf16>
    %cst_12 = arith.constant 0.000000e+00 : bf16
    %14 = vector.broadcast %cst_12 : bf16 to vector<12x16x124xbf16>
    %15 = tpu.concatenate %13, %14 in 2 : vector<12x16x4xbf16>, vector<12x16x124xbf16> -> vector<12x16x128xbf16>
    %cst_13 = arith.constant 0.000000e+00 : bf16
    %16 = vector.broadcast %cst_13 : bf16 to vector<12x1x128xbf16>
    %c0_14 = arith.constant 0 : index
    %c0_15 = arith.constant 0 : index
    %c0_16 = arith.constant 0 : index
    %17 = vector.load %arg10[%c0_14, %c0_15, %c0_16] : memref<12x18x128xbf16, #tpu.memory_space<vmem>>, vector<12x1x128xbf16>
    tpu.vector_store %arg10[%c0_14, %c0_15, %c0_16], %16 {strides = array<i32>} : memref<12x18x128xbf16, #tpu.memory_space<vmem>>, vector<12x1x128xbf16>,
    %cst_17 = arith.constant 0.000000e+00 : bf16
    %18 = vector.broadcast %cst_17 : bf16 to vector<12x1x128xbf16>
    %c0_18 = arith.constant 0 : index
    %c17 = arith.constant 17 : index
    %c0_19 = arith.constant 0 : index
    %19 = vector.load %arg10[%c0_18, %c17, %c0_19] : memref<12x18x128xbf16, #tpu.memory_space<vmem>>, vector<12x1x128xbf16>
    tpu.vector_store %arg10[%c0_18, %c17, %c0_19], %18 {strides = array<i32>} : memref<12x18x128xbf16, #tpu.memory_space<vmem>>, vector<12x1x128xbf16>,
    %c0_20 = arith.constant 0 : index
    %c1 = arith.constant 1 : index
    %c0_21 = arith.constant 0 : index
    %20 = vector.load %arg10[%c0_20, %c1, %c0_21] : memref<12x18x128xbf16, #tpu.memory_space<vmem>>, vector<12x16x128xbf16>
    tpu.vector_store %arg10[%c0_20, %c1, %c0_21], %15 {strides = array<i32>} : memref<12x18x128xbf16, #tpu.memory_space<vmem>>, vector<12x16x128xbf16>,
    %c0_22 = arith.constant 0 : index
    %c0_23 = arith.constant 0 : index
    %c0_24 = arith.constant 0 : index
    %21 = vector.load %arg10[%c0_22, %c0_23, %c0_24] : memref<12x18x128xbf16, #tpu.memory_space<vmem>>, vector<10x16x128xbf16>
    %c0_25 = arith.constant 0 : index
    %c0_26 = arith.constant 0 : index
    %c0_27 = arith.constant 0 : index
    %22 = vector.load %arg12[%c0_25, %c0_26, %c0_27] : memref<10x16x1152xbf16, #tpu.memory_space<vmem>>, vector<10x16x128xbf16>
    tpu.vector_store %arg12[%c0_25, %c0_26, %c0_27], %21 {strides = array<i32>} : memref<10x16x1152xbf16, #tpu.memory_space<vmem>>, vector<10x16x128xbf16>,
    %c0_28 = arith.constant 0 : index
    %c1_29 = arith.constant 1 : index
    %c0_30 = arith.constant 0 : index
    %23 = vector.load %arg10[%c0_28, %c1_29, %c0_30] : memref<12x18x128xbf16, #tpu.memory_space<vmem>>, vector<10x16x128xbf16>
    %c0_31 = arith.constant 0 : index
    %c0_32 = arith.constant 0 : index
    %c128 = arith.constant 128 : index
    %24 = vector.load %arg12[%c0_31, %c0_32, %c128] : memref<10x16x1152xbf16, #tpu.memory_space<vmem>>, vector<10x16x128xbf16>
    tpu.vector_store %arg12[%c0_31, %c0_32, %c128], %23 {strides = array<i32>} : memref<10x16x1152xbf16, #tpu.memory_space<vmem>>, vector<10x16x128xbf16>,
    %c0_33 = arith.constant 0 : index
    %c2 = arith.constant 2 : index
    %c0_34 = arith.constant 0 : index
    %25 = vector.load %arg10[%c0_33, %c2, %c0_34] : memref<12x18x128xbf16, #tpu.memory_space<vmem>>, vector<10x16x128xbf16>
    %c0_35 = arith.constant 0 : index
    %c0_36 = arith.constant 0 : index
    %c256 = arith.constant 256 : index
    %26 = vector.load %arg12[%c0_35, %c0_36, %c256] : memref<10x16x1152xbf16, #tpu.memory_space<vmem>>, vector<10x16x128xbf16>
    tpu.vector_store %arg12[%c0_35, %c0_36, %c256], %25 {strides = array<i32>} : memref<10x16x1152xbf16, #tpu.memory_space<vmem>>, vector<10x16x128xbf16>,
    %c1_37 = arith.constant 1 : index
    %c0_38 = arith.constant 0 : index
    %c0_39 = arith.constant 0 : index
    %27 = vector.load %arg10[%c1_37, %c0_38, %c0_39] : memref<12x18x128xbf16, #tpu.memory_space<vmem>>, vector<10x16x128xbf16>
    %c0_40 = arith.constant 0 : index
    %c0_41 = arith.constant 0 : index
    %c384 = arith.constant 384 : index
    %28 = vector.load %arg12[%c0_40, %c0_41, %c384] : memref<10x16x1152xbf16, #tpu.memory_space<vmem>>, vector<10x16x128xbf16>
    tpu.vector_store %arg12[%c0_40, %c0_41, %c384], %27 {strides = array<i32>} : memref<10x16x1152xbf16, #tpu.memory_space<vmem>>, vector<10x16x128xbf16>,
    %c1_42 = arith.constant 1 : index
    %c1_43 = arith.constant 1 : index
    %c0_44 = arith.constant 0 : index
    %29 = vector.load %arg10[%c1_42, %c1_43, %c0_44] : memref<12x18x128xbf16, #tpu.memory_space<vmem>>, vector<10x16x128xbf16>
    %c0_45 = arith.constant 0 : index
    %c0_46 = arith.constant 0 : index
    %c512 = arith.constant 512 : index
    %30 = vector.load %arg12[%c0_45, %c0_46, %c512] : memref<10x16x1152xbf16, #tpu.memory_space<vmem>>, vector<10x16x128xbf16>
    tpu.vector_store %arg12[%c0_45, %c0_46, %c512], %29 {strides = array<i32>} : memref<10x16x1152xbf16, #tpu.memory_space<vmem>>, vector<10x16x128xbf16>,
    %c1_47 = arith.constant 1 : index
    %c2_48 = arith.constant 2 : index
    %c0_49 = arith.constant 0 : index
    %31 = vector.load %arg10[%c1_47, %c2_48, %c0_49] : memref<12x18x128xbf16, #tpu.memory_space<vmem>>, vector<10x16x128xbf16>
    %c0_50 = arith.constant 0 : index
    %c0_51 = arith.constant 0 : index
    %c640 = arith.constant 640 : index
    %32 = vector.load %arg12[%c0_50, %c0_51, %c640] : memref<10x16x1152xbf16, #tpu.memory_space<vmem>>, vector<10x16x128xbf16>
    tpu.vector_store %arg12[%c0_50, %c0_51, %c640], %31 {strides = array<i32>} : memref<10x16x1152xbf16, #tpu.memory_space<vmem>>, vector<10x16x128xbf16>,
    %c2_52 = arith.constant 2 : index
    %c0_53 = arith.constant 0 : index
    %c0_54 = arith.constant 0 : index
    %33 = vector.load %arg10[%c2_52, %c0_53, %c0_54] : memref<12x18x128xbf16, #tpu.memory_space<vmem>>, vector<10x16x128xbf16>
    %c0_55 = arith.constant 0 : index
    %c0_56 = arith.constant 0 : index
    %c768 = arith.constant 768 : index
    %34 = vector.load %arg12[%c0_55, %c0_56, %c768] : memref<10x16x1152xbf16, #tpu.memory_space<vmem>>, vector<10x16x128xbf16>
    tpu.vector_store %arg12[%c0_55, %c0_56, %c768], %33 {strides = array<i32>} : memref<10x16x1152xbf16, #tpu.memory_space<vmem>>, vector<10x16x128xbf16>,
    %c2_57 = arith.constant 2 : index
    %c1_58 = arith.constant 1 : index
    %c0_59 = arith.constant 0 : index
    %35 = vector.load %arg10[%c2_57, %c1_58, %c0_59] : memref<12x18x128xbf16, #tpu.memory_space<vmem>>, vector<10x16x128xbf16>
    %c0_60 = arith.constant 0 : index
    %c0_61 = arith.constant 0 : index
    %c896 = arith.constant 896 : index
    %36 = vector.load %arg12[%c0_60, %c0_61, %c896] : memref<10x16x1152xbf16, #tpu.memory_space<vmem>>, vector<10x16x128xbf16>
    tpu.vector_store %arg12[%c0_60, %c0_61, %c896], %35 {strides = array<i32>} : memref<10x16x1152xbf16, #tpu.memory_space<vmem>>, vector<10x16x128xbf16>,
    %c2_62 = arith.constant 2 : index
    %c2_63 = arith.constant 2 : index
    %c0_64 = arith.constant 0 : index
    %37 = vector.load %arg10[%c2_62, %c2_63, %c0_64] : memref<12x18x128xbf16, #tpu.memory_space<vmem>>, vector<10x16x128xbf16>
    %c0_65 = arith.constant 0 : index
    %c0_66 = arith.constant 0 : index
    %c1024 = arith.constant 1024 : index
    %38 = vector.load %arg12[%c0_65, %c0_66, %c1024] : memref<10x16x1152xbf16, #tpu.memory_space<vmem>>, vector<10x16x128xbf16>
    tpu.vector_store %arg12[%c0_65, %c0_66, %c1024], %37 {strides = array<i32>} : memref<10x16x1152xbf16, #tpu.memory_space<vmem>>, vector<10x16x128xbf16>,
    %c0_67 = arith.constant 0 : index
    %c0_68 = arith.constant 0 : index
    %c0_69 = arith.constant 0 : index
    %39 = vector.load %arg12[%c0_67, %c0_68, %c0_69] : memref<10x16x1152xbf16, #tpu.memory_space<vmem>>, vector<10x16x1152xbf16>
    %40 = vector.shape_cast %39 : vector<10x16x1152xbf16> to vector<160x1152xbf16>
    %c0_70 = arith.constant 0 : index
    %c0_71 = arith.constant 0 : index
    %41 = vector.load %arg5[%c0_70, %c0_71] : memref<1152x128xbf16, #tpu.memory_space<vmem>>, vector<1152x128xbf16>
    %cst_72 = arith.constant dense<0.000000e+00> : vector<160x128xf32>
    %42 = tpu.matmul %40, %41, %cst_72 {dimension_numbers = #tpu.dot_dimension_numbers<[1], [0], [0], [1], [0, 0, 1, 1], [], []>} : vector<160x1152xbf16>, vector<1152x128xbf16>, vector<160x128xf32> -> vector<160x128xf32>
    %c0_73 = arith.constant 0 : index
    %c0_74 = arith.constant 0 : index
    %43 = vector.load %arg6[%c0_73, %c0_74] : memref<1x128xf32, #tpu.memory_space<vmem>>, vector<1x128xf32>
    %44 = vector.broadcast %43 : vector<1x128xf32> to vector<160x128xf32>
    %45 = arith.addf %42, %44 : vector<160x128xf32>
    %cst_75 = arith.constant 0.000000e+00 : f32
    %46 = vector.broadcast %cst_75 : f32 to vector<160x128xf32>
    %47 = arith.maximumf %45, %46 : vector<160x128xf32>
    %cst_76 = arith.constant 0.000000e+00 : bf16
    %48 = vector.broadcast %cst_76 : bf16 to vector<10x1x128xbf16>
    %c0_77 = arith.constant 0 : index
    %c0_78 = arith.constant 0 : index
    %c0_79 = arith.constant 0 : index
    %49 = vector.load %arg11[%c0_77, %c0_78, %c0_79] : memref<10x18x128xbf16, #tpu.memory_space<vmem>>, vector<10x1x128xbf16>
    tpu.vector_store %arg11[%c0_77, %c0_78, %c0_79], %48 {strides = array<i32>} : memref<10x18x128xbf16, #tpu.memory_space<vmem>>, vector<10x1x128xbf16>,
    %cst_80 = arith.constant 0.000000e+00 : bf16
    %50 = vector.broadcast %cst_80 : bf16 to vector<10x1x128xbf16>
    %c0_81 = arith.constant 0 : index
    %c17_82 = arith.constant 17 : index
    %c0_83 = arith.constant 0 : index
    %51 = vector.load %arg11[%c0_81, %c17_82, %c0_83] : memref<10x18x128xbf16, #tpu.memory_space<vmem>>, vector<10x1x128xbf16>
    tpu.vector_store %arg11[%c0_81, %c17_82, %c0_83], %50 {strides = array<i32>} : memref<10x18x128xbf16, #tpu.memory_space<vmem>>, vector<10x1x128xbf16>,
    %52 = arith.truncf %47 : vector<160x128xf32> to vector<160x128xbf16>
    %53 = vector.shape_cast %52 : vector<160x128xbf16> to vector<10x16x128xbf16>
    %c0_84 = arith.constant 0 : index
    %c1_85 = arith.constant 1 : index
    %c0_86 = arith.constant 0 : index
    %54 = vector.load %arg11[%c0_84, %c1_85, %c0_86] : memref<10x18x128xbf16, #tpu.memory_space<vmem>>, vector<10x16x128xbf16>
    tpu.vector_store %arg11[%c0_84, %c1_85, %c0_86], %53 {strides = array<i32>} : memref<10x18x128xbf16, #tpu.memory_space<vmem>>, vector<10x16x128xbf16>,
    %55 = arith.extui %0 : i1 to i32
    %c0_i32_87 = arith.constant 0 : i32
    %56 = arith.cmpi ne, %55, %c0_i32_87 : i32
    scf.if %56 {
      %cst_156 = arith.constant 0.000000e+00 : bf16
      %92 = vector.broadcast %cst_156 : bf16 to vector<1x16x128xbf16>
      %c0_157 = arith.constant 0 : index
      %c1_158 = arith.constant 1 : index
      %c0_159 = arith.constant 0 : index
      %93 = vector.load %arg11[%c0_157, %c1_158, %c0_159] : memref<10x18x128xbf16, #tpu.memory_space<vmem>>, vector<1x16x128xbf16>
      tpu.vector_store %arg11[%c0_157, %c1_158, %c0_159], %92 {strides = array<i32>} : memref<10x18x128xbf16, #tpu.memory_space<vmem>>, vector<1x16x128xbf16>,
    } else {
    }
    %57 = arith.extui %1 : i1 to i32
    %c0_i32_88 = arith.constant 0 : i32
    %58 = arith.cmpi ne, %57, %c0_i32_88 : i32
    scf.if %58 {
      %cst_156 = arith.constant 0.000000e+00 : bf16
      %92 = vector.broadcast %cst_156 : bf16 to vector<1x16x128xbf16>
      %c9 = arith.constant 9 : index
      %c1_157 = arith.constant 1 : index
      %c0_158 = arith.constant 0 : index
      %93 = vector.load %arg11[%c9, %c1_157, %c0_158] : memref<10x18x128xbf16, #tpu.memory_space<vmem>>, vector<1x16x128xbf16>
      tpu.vector_store %arg11[%c9, %c1_157, %c0_158], %92 {strides = array<i32>} : memref<10x18x128xbf16, #tpu.memory_space<vmem>>, vector<1x16x128xbf16>,
    } else {
    }
    %c0_89 = arith.constant 0 : index
    %c0_90 = arith.constant 0 : index
    %c0_91 = arith.constant 0 : index
    %59 = vector.load %arg11[%c0_89, %c0_90, %c0_91] : memref<10x18x128xbf16, #tpu.memory_space<vmem>>, vector<8x16x128xbf16>
    %c0_92 = arith.constant 0 : index
    %c0_93 = arith.constant 0 : index
    %c0_94 = arith.constant 0 : index
    %60 = vector.load %arg13[%c0_92, %c0_93, %c0_94] : memref<8x16x1152xbf16, #tpu.memory_space<vmem>>, vector<8x16x128xbf16>
    tpu.vector_store %arg13[%c0_92, %c0_93, %c0_94], %59 {strides = array<i32>} : memref<8x16x1152xbf16, #tpu.memory_space<vmem>>, vector<8x16x128xbf16>,
    %c0_95 = arith.constant 0 : index
    %c1_96 = arith.constant 1 : index
    %c0_97 = arith.constant 0 : index
    %61 = vector.load %arg11[%c0_95, %c1_96, %c0_97] : memref<10x18x128xbf16, #tpu.memory_space<vmem>>, vector<8x16x128xbf16>
    %c0_98 = arith.constant 0 : index
    %c0_99 = arith.constant 0 : index
    %c128_100 = arith.constant 128 : index
    %62 = vector.load %arg13[%c0_98, %c0_99, %c128_100] : memref<8x16x1152xbf16, #tpu.memory_space<vmem>>, vector<8x16x128xbf16>
    tpu.vector_store %arg13[%c0_98, %c0_99, %c128_100], %61 {strides = array<i32>} : memref<8x16x1152xbf16, #tpu.memory_space<vmem>>, vector<8x16x128xbf16>,
    %c0_101 = arith.constant 0 : index
    %c2_102 = arith.constant 2 : index
    %c0_103 = arith.constant 0 : index
    %63 = vector.load %arg11[%c0_101, %c2_102, %c0_103] : memref<10x18x128xbf16, #tpu.memory_space<vmem>>, vector<8x16x128xbf16>
    %c0_104 = arith.constant 0 : index
    %c0_105 = arith.constant 0 : index
    %c256_106 = arith.constant 256 : index
    %64 = vector.load %arg13[%c0_104, %c0_105, %c256_106] : memref<8x16x1152xbf16, #tpu.memory_space<vmem>>, vector<8x16x128xbf16>
    tpu.vector_store %arg13[%c0_104, %c0_105, %c256_106], %63 {strides = array<i32>} : memref<8x16x1152xbf16, #tpu.memory_space<vmem>>, vector<8x16x128xbf16>,
    %c1_107 = arith.constant 1 : index
    %c0_108 = arith.constant 0 : index
    %c0_109 = arith.constant 0 : index
    %65 = vector.load %arg11[%c1_107, %c0_108, %c0_109] : memref<10x18x128xbf16, #tpu.memory_space<vmem>>, vector<8x16x128xbf16>
    %c0_110 = arith.constant 0 : index
    %c0_111 = arith.constant 0 : index
    %c384_112 = arith.constant 384 : index
    %66 = vector.load %arg13[%c0_110, %c0_111, %c384_112] : memref<8x16x1152xbf16, #tpu.memory_space<vmem>>, vector<8x16x128xbf16>
    tpu.vector_store %arg13[%c0_110, %c0_111, %c384_112], %65 {strides = array<i32>} : memref<8x16x1152xbf16, #tpu.memory_space<vmem>>, vector<8x16x128xbf16>,
    %c1_113 = arith.constant 1 : index
    %c1_114 = arith.constant 1 : index
    %c0_115 = arith.constant 0 : index
    %67 = vector.load %arg11[%c1_113, %c1_114, %c0_115] : memref<10x18x128xbf16, #tpu.memory_space<vmem>>, vector<8x16x128xbf16>
    %c0_116 = arith.constant 0 : index
    %c0_117 = arith.constant 0 : index
    %c512_118 = arith.constant 512 : index
    %68 = vector.load %arg13[%c0_116, %c0_117, %c512_118] : memref<8x16x1152xbf16, #tpu.memory_space<vmem>>, vector<8x16x128xbf16>
    tpu.vector_store %arg13[%c0_116, %c0_117, %c512_118], %67 {strides = array<i32>} : memref<8x16x1152xbf16, #tpu.memory_space<vmem>>, vector<8x16x128xbf16>,
    %c1_119 = arith.constant 1 : index
    %c2_120 = arith.constant 2 : index
    %c0_121 = arith.constant 0 : index
    %69 = vector.load %arg11[%c1_119, %c2_120, %c0_121] : memref<10x18x128xbf16, #tpu.memory_space<vmem>>, vector<8x16x128xbf16>
    %c0_122 = arith.constant 0 : index
    %c0_123 = arith.constant 0 : index
    %c640_124 = arith.constant 640 : index
    %70 = vector.load %arg13[%c0_122, %c0_123, %c640_124] : memref<8x16x1152xbf16, #tpu.memory_space<vmem>>, vector<8x16x128xbf16>
    tpu.vector_store %arg13[%c0_122, %c0_123, %c640_124], %69 {strides = array<i32>} : memref<8x16x1152xbf16, #tpu.memory_space<vmem>>, vector<8x16x128xbf16>,
    %c2_125 = arith.constant 2 : index
    %c0_126 = arith.constant 0 : index
    %c0_127 = arith.constant 0 : index
    %71 = vector.load %arg11[%c2_125, %c0_126, %c0_127] : memref<10x18x128xbf16, #tpu.memory_space<vmem>>, vector<8x16x128xbf16>
    %c0_128 = arith.constant 0 : index
    %c0_129 = arith.constant 0 : index
    %c768_130 = arith.constant 768 : index
    %72 = vector.load %arg13[%c0_128, %c0_129, %c768_130] : memref<8x16x1152xbf16, #tpu.memory_space<vmem>>, vector<8x16x128xbf16>
    tpu.vector_store %arg13[%c0_128, %c0_129, %c768_130], %71 {strides = array<i32>} : memref<8x16x1152xbf16, #tpu.memory_space<vmem>>, vector<8x16x128xbf16>,
    %c2_131 = arith.constant 2 : index
    %c1_132 = arith.constant 1 : index
    %c0_133 = arith.constant 0 : index
    %73 = vector.load %arg11[%c2_131, %c1_132, %c0_133] : memref<10x18x128xbf16, #tpu.memory_space<vmem>>, vector<8x16x128xbf16>
    %c0_134 = arith.constant 0 : index
    %c0_135 = arith.constant 0 : index
    %c896_136 = arith.constant 896 : index
    %74 = vector.load %arg13[%c0_134, %c0_135, %c896_136] : memref<8x16x1152xbf16, #tpu.memory_space<vmem>>, vector<8x16x128xbf16>
    tpu.vector_store %arg13[%c0_134, %c0_135, %c896_136], %73 {strides = array<i32>} : memref<8x16x1152xbf16, #tpu.memory_space<vmem>>, vector<8x16x128xbf16>,
    %c2_137 = arith.constant 2 : index
    %c2_138 = arith.constant 2 : index
    %c0_139 = arith.constant 0 : index
    %75 = vector.load %arg11[%c2_137, %c2_138, %c0_139] : memref<10x18x128xbf16, #tpu.memory_space<vmem>>, vector<8x16x128xbf16>
    %c0_140 = arith.constant 0 : index
    %c0_141 = arith.constant 0 : index
    %c1024_142 = arith.constant 1024 : index
    %76 = vector.load %arg13[%c0_140, %c0_141, %c1024_142] : memref<8x16x1152xbf16, #tpu.memory_space<vmem>>, vector<8x16x128xbf16>
    tpu.vector_store %arg13[%c0_140, %c0_141, %c1024_142], %75 {strides = array<i32>} : memref<8x16x1152xbf16, #tpu.memory_space<vmem>>, vector<8x16x128xbf16>,
    %c0_143 = arith.constant 0 : index
    %c0_144 = arith.constant 0 : index
    %c0_145 = arith.constant 0 : index
    %77 = vector.load %arg13[%c0_143, %c0_144, %c0_145] : memref<8x16x1152xbf16, #tpu.memory_space<vmem>>, vector<8x16x1152xbf16>
    %78 = vector.shape_cast %77 : vector<8x16x1152xbf16> to vector<128x1152xbf16>
    %c0_146 = arith.constant 0 : index
    %c0_147 = arith.constant 0 : index
    %79 = vector.load %arg7[%c0_146, %c0_147] : memref<1152x128xbf16, #tpu.memory_space<vmem>>, vector<1152x128xbf16>
    %cst_148 = arith.constant dense<0.000000e+00> : vector<128x128xf32>
    %80 = tpu.matmul %78, %79, %cst_148 {dimension_numbers = #tpu.dot_dimension_numbers<[1], [0], [0], [1], [0, 0, 1, 1], [], []>} : vector<128x1152xbf16>, vector<1152x128xbf16>, vector<128x128xf32> -> vector<128x128xf32>
    %c0_149 = arith.constant 0 : index
    %c0_150 = arith.constant 0 : index
    %81 = vector.load %arg8[%c0_149, %c0_150] : memref<1x128xf32, #tpu.memory_space<vmem>>, vector<1x128xf32>
    %82 = vector.broadcast %81 : vector<1x128xf32> to vector<128x128xf32>
    %83 = arith.addf %80, %82 : vector<128x128xf32>
    %84 = vector.shape_cast %83 : vector<128x128xf32> to vector<8x16x128xf32>
    %85 = vector.extract_strided_slice %84 {offsets = [0, 0, 0], sizes = [8, 16, 4], strides = [1, 1, 1]} : vector<8x16x128xf32> to vector<8x16x4xf32>
    %86 = arith.addf %85, %11 : vector<8x16x4xf32>
    %cst_151 = arith.constant 0.000000e+00 : f32
    %87 = vector.broadcast %cst_151 : f32 to vector<8x16x4xf32>
    %88 = arith.maximumf %86, %87 : vector<8x16x4xf32>
    %c0_152 = arith.constant 0 : index
    %c0_153 = arith.constant 0 : index
    %c0_154 = arith.constant 0 : index
    %c0_155 = arith.constant 0 : index
    %89 = vector.load %arg9[%c0_152, %c0_153, %c0_154, %c0_155] : memref<1x8x16x4xf32, #tpu.memory_space<vmem>>, vector<1x8x16x4xf32>
    %90 = vector.shape_cast %89 : vector<1x8x16x4xf32> to vector<8x16x4xf32>
    %91 = vector.shape_cast %88 : vector<8x16x4xf32> to vector<1x8x16x4xf32>
    tpu.vector_store %arg9[%c0_152, %c0_153, %c0_154, %c0_155], %91 {strides = array<i32>} : memref<1x8x16x4xf32, #tpu.memory_space<vmem>>, vector<1x8x16x4xf32>,
    return
  }
  func.func @transform_0(%arg0: i32, %arg1: i32) -> (i32, i32, i32, i32) {
    %c4_i32 = arith.constant 4 : i32
    %0 = arith.muli %arg1, %c4_i32 : i32
    %c1_i32 = arith.constant 1 : i32
    %1 = arith.subi %0, %c1_i32 : i32
    %c0_i32 = arith.constant 0 : i32
    %2 = arith.maxsi %1, %c0_i32 : i32
    %c0_i32_0 = arith.constant 0 : i32
    %c0_i32_1 = arith.constant 0 : i32
    %c0_i32_2 = arith.constant 0 : i32
    return %arg0, %2, %c0_i32_0, %c0_i32_1 : i32, i32, i32, i32
  }
  func.func @transform_1(%arg0: i32, %arg1: i32) -> (i32, i32, i32, i32) {
    %c0_i32 = arith.constant 0 : i32
    %c0_i32_0 = arith.constant 0 : i32
    %c0_i32_1 = arith.constant 0 : i32
    return %arg0, %arg1, %c0_i32, %c0_i32_0 : i32, i32, i32, i32
  }
  func.func @transform_2(%arg0: i32, %arg1: i32) -> (i32, i32, i32, i32) {
    %c4_i32 = arith.constant 4 : i32
    %0 = arith.muli %arg1, %c4_i32 : i32
    %c4_i32_0 = arith.constant 4 : i32
    %1 = arith.addi %0, %c4_i32_0 : i32
    %c7_i32 = arith.constant 7 : i32
    %2 = arith.minsi %1, %c7_i32 : i32
    %c0_i32 = arith.constant 0 : i32
    %c0_i32_1 = arith.constant 0 : i32
    %c0_i32_2 = arith.constant 0 : i32
    return %arg0, %2, %c0_i32, %c0_i32_1 : i32, i32, i32, i32
  }
  func.func @transform_3(%arg0: i32, %arg1: i32) -> (i32, i32) {
    %c0_i32 = arith.constant 0 : i32
    %c0_i32_0 = arith.constant 0 : i32
    %c0_i32_1 = arith.constant 0 : i32
    return %c0_i32, %c0_i32_0 : i32, i32
  }
  func.func @transform_4(%arg0: i32, %arg1: i32) -> (i32, i32) {
    %c0_i32 = arith.constant 0 : i32
    %c0_i32_0 = arith.constant 0 : i32
    %c0_i32_1 = arith.constant 0 : i32
    return %c0_i32, %c0_i32_0 : i32, i32
  }
  func.func @transform_5(%arg0: i32, %arg1: i32) -> (i32, i32) {
    %c0_i32 = arith.constant 0 : i32
    %c0_i32_0 = arith.constant 0 : i32
    %c0_i32_1 = arith.constant 0 : i32
    return %c0_i32, %c0_i32_0 : i32, i32
  }
  func.func @transform_6(%arg0: i32, %arg1: i32) -> (i32, i32) {
    %c0_i32 = arith.constant 0 : i32
    %c0_i32_0 = arith.constant 0 : i32
    %c0_i32_1 = arith.constant 0 : i32
    return %c0_i32, %c0_i32_0 : i32, i32
  }
  func.func @transform_7(%arg0: i32, %arg1: i32) -> (i32, i32, i32, i32) {
    %c0_i32 = arith.constant 0 : i32
    %c0_i32_0 = arith.constant 0 : i32
    %c0_i32_1 = arith.constant 0 : i32
    return %arg0, %arg1, %c0_i32, %c0_i32_0 : i32, i32, i32, i32
  }
}

</mosaic_0001>

<llo_original>
// kernel: tpu_custom_call.1
$region0: #{tpu_custom_call.1}
  #allocation0 [shape = 'u32[]', space=smem, size = 0x4, offset = 0x4, fixed_abs, tag = 'smem constant byte address 0x4 - core index']
  #allocation1 [shape = 'u32[144,128]{1,0:T(1,128)}', space=vmem, size = 0x12000, scoped, tag = 'internal scratch']
  #allocation2 [shape = 'bf16[12,18,128]{2,1,0:T(8,128)(2,1)}', space=vmem, size = 0x12000, scoped, tag = 'scratch operand']
  #allocation3 [shape = 'bf16[10,18,128]{2,1,0:T(8,128)(2,1)}', space=vmem, size = 0xf000, scoped, tag = 'scratch operand']
  #allocation4 [shape = 'bf16[10,16,1152]{2,1,0:T(16,128)(2,1)}', space=vmem, size = 0x5a000, scoped, tag = 'scratch operand']
  #allocation5 [shape = 'bf16[8,16,1152]{2,1,0:T(16,128)(2,1)}', space=vmem, size = 0x48000, scoped, tag = 'scratch operand']
  %s0 = inlined_call_operand.vmem [shape: f32[2,16,16,4], index: 0, kind: input, shape index: {}]
  %s1 = inlined_call_operand.vmem [shape: f32[2,16,16,4], index: 1, kind: input, shape index: {}]
  %s2 = inlined_call_operand.vmem [shape: f32[2,16,16,4], index: 2, kind: input, shape index: {}]
  %s3 = inlined_call_operand.vmem [shape: bf16[1152,128], index: 3, kind: input, shape index: {}]
  %s4 = inlined_call_operand.vmem [shape: f32[1,128], index: 4, kind: input, shape index: {}]
  %s5 = inlined_call_operand.vmem [shape: bf16[1152,128], index: 5, kind: input, shape index: {}]
  %s6 = inlined_call_operand.vmem [shape: f32[1,128], index: 6, kind: input, shape index: {}]
  %s7 = inlined_call_operand.vmem [shape: f32[2,16,16,4], index: 7, kind: output, shape index: {}]
  %s8 = sld [smem:[#allocation0]]
  $region69: #{tpu_custom_call.1} parent=0
    _
  %s10 = ssub.s32 1, %s8
  %s11 = scalar_select 0, %s10, %s8
  loop: start=0, step=1, limit=6
  $region2: #{tpu_custom_call.1} parent=0 // loop_pre_header
    _
  $region3: #{tpu_custom_call.1} parent=0 // loop_header
    %s13 = sphi 0, %s17
    %p14 = scmp.ge.s32.totalorder %s13, 6
    %s20 = sphi 0, %s32
    %s21 = sphi 0, %s28
    %s22 = sphi 0, %s20
    %s23 = sphi 0, %s21
    %s24 = sphi 0, %s22
    %s25 = sphi 0, %s23
    %s45 = sphi 0, %s47
    %s48 = sphi 0, %s45
    %s49 = sphi 0, %s48
    %s65 = sphi 0, %s49
    %s73 = sphi 0, %s75
    %s76 = sphi 0, %s73
    %s77 = sphi 0, %s76
    %s93 = sphi 0, %s77
    %s109 = sphi 0, %s111
    %s112 = sphi 0, %s109
    %s113 = sphi 0, %s112
    %s129 = sphi 0, %s113
    %s133 = sphi 0, %s133
    %s135 = sphi 0, %s133
    %s136 = sphi 0, %s135
    %s150 = sphi 0, %s136
    %s154 = sphi 0, %s154
    %s156 = sphi 0, %s154
    %s157 = sphi 0, %s156
    %s171 = sphi 0, %s157
    %s175 = sphi 0, %s175
    %s177 = sphi 0, %s175
    %s178 = sphi 0, %s177
    %s192 = sphi 0, %s178
    %s196 = sphi 0, %s196
    %s198 = sphi 0, %s196
    %s199 = sphi 0, %s198
    %s213 = sphi 0, %s199
    %s221 = sphi 0, %s223
    %s224 = sphi 0, %s221
    %s225 = sphi 0, %s224
    %s241 = sphi 0, %s225
  $region4: #{tpu_custom_call.1} parent=0 // loop_header_branch
    %16 = sbr.rel (%p14) target = $region8
  $region5: #{tpu_custom_call.1} parent=0 // loop_body
    %s18 = ssub.s32 %s13, 1
    %s19 = ssub.s32 %s13, 2
    %s26 = sadd.s32 1, %s21
    %p27 = scmp.ge.s32.totalorder %s26, 2
    %s28 = scalar_select %p27, 0, %s26
    %s29 = sadd.s32 1, %s20
    %s30 = scalar_select %p27, %s29, %s20
    %p31 = scmp.ge.s32.totalorder %s30, 2
    %s32 = scalar_select %p31, 0, %s30
    %s33 = smul.u32 %s21, 4
    %s34 = ssub.s32 %s33, 1
    %p35 = scmp.gt.s32.totalorder %s34, 0
    %s36 = scalar_select %p35, %s34, 0
    %s37 = smul.u32 %s28, 4
    %s38 = ssub.s32 %s37, 1
    %p39 = scmp.gt.s32.totalorder %s38, 0
    %s40 = scalar_select %p39, %s38, 0
    %s41 = ssub.s32 %s20, %s32
    %s42 = ssub.s32 %s36, %s40
    %s43 = sor.u32 %s41, %s42
    %p44 = scmp.eq.s32.totalorder %s43, 0
    %s46 = sadd.s32 %s45, 1
    %s47 = scalar_select %p44, %s45, %s46
    %p50 = pneg %p44
    %p51 = scmp.eq.s32.totalorder %s13, 3
    %p52 = por %p50, %p51
    %p53 = scmp.ne.s32.totalorder %s45, %s48
    %p54 = scmp.eq.s32.totalorder %s13, 0
    %p55 = por %p53, %p54
    %p56 = scmp.ne.s32.totalorder %s45, %s48
    %p57 = scmp.eq.s32.totalorder %s18, 3
    %p58 = por %p56, %p57
    %p59 = scmp.ne.s32.totalorder %s48, %s49
    %p60 = scmp.eq.s32.totalorder %s18, 0
    %p61 = por %p59, %p60
    %p62 = scmp.ne.s32.totalorder %s48, %s49
    %p63 = scmp.eq.s32.totalorder %s19, 3
    %p64 = por %p62, %p63
    %p66 = scmp.ne.s32.totalorder %s49, %s65
    %p67 = scmp.eq.s32.totalorder %s19, 0
    %p68 = por %p66, %p67
    %s69 = ssub.s32 %s20, %s32
    %s70 = ssub.s32 %s21, %s28
    %s71 = sor.u32 %s69, %s70
    %p72 = scmp.eq.s32.totalorder %s71, 0
    %s74 = sadd.s32 %s73, 1
    %s75 = scalar_select %p72, %s73, %s74
    %p78 = pneg %p72
    %p79 = scmp.eq.s32.totalorder %s13, 3
    %p80 = por %p78, %p79
    %p81 = scmp.ne.s32.totalorder %s73, %s76
    %p82 = scmp.eq.s32.totalorder %s13, 0
    %p83 = por %p81, %p82
    %p84 = scmp.ne.s32.totalorder %s73, %s76
    %p85 = scmp.eq.s32.totalorder %s18, 3
    %p86 = por %p84, %p85
    %p87 = scmp.ne.s32.totalorder %s76, %s77
    %p88 = scmp.eq.s32.totalorder %s18, 0
    %p89 = por %p87, %p88
    %p90 = scmp.ne.s32.totalorder %s76, %s77
    %p91 = scmp.eq.s32.totalorder %s19, 3
    %p92 = por %p90, %p91
    %p94 = scmp.ne.s32.totalorder %s77, %s93
    %p95 = scmp.eq.s32.totalorder %s19, 0
    %p96 = por %p94, %p95
    %s97 = smul.u32 %s21, 4
    %s98 = sadd.s32 %s97, 4
    %p99 = scmp.lt.s32.totalorder %s98, 7
    %s100 = scalar_select %p99, %s98, 7
    %s101 = smul.u32 %s28, 4
    %s102 = sadd.s32 %s101, 4
    %p103 = scmp.lt.s32.totalorder %s102, 7
    %s104 = scalar_select %p103, %s102, 7
    %s105 = ssub.s32 %s20, %s32
    %s106 = ssub.s32 %s100, %s104
    %s107 = sor.u32 %s105, %s106
    %p108 = scmp.eq.s32.totalorder %s107, 0
    %s110 = sadd.s32 %s109, 1
    %s111 = scalar_select %p108, %s109, %s110
    %p114 = pneg %p108
    %p115 = scmp.eq.s32.totalorder %s13, 3
    %p116 = por %p114, %p115
    %p117 = scmp.ne.s32.totalorder %s109, %s112
    %p118 = scmp.eq.s32.totalorder %s13, 0
    %p119 = por %p117, %p118
    %p120 = scmp.ne.s32.totalorder %s109, %s112
    %p121 = scmp.eq.s32.totalorder %s18, 3
    %p122 = por %p120, %p121
    %p123 = scmp.ne.s32.totalorder %s112, %s113
    %p124 = scmp.eq.s32.totalorder %s18, 0
    %p125 = por %p123, %p124
    %p126 = scmp.ne.s32.totalorder %s112, %s113
    %p127 = scmp.eq.s32.totalorder %s19, 3
    %p128 = por %p126, %p127
    %p130 = scmp.ne.s32.totalorder %s113, %s129
    %p131 = scmp.eq.s32.totalorder %s19, 0
    %p132 = por %p130, %p131
    %s134 = sadd.s32 %s133, 1
    %p137 = scmp.eq.s32.totalorder %s13, 3
    %p138 = scmp.ne.s32.totalorder %s133, %s135
    %p139 = scmp.eq.s32.totalorder %s13, 0
    %p140 = por %p138, %p139
    %p141 = scmp.ne.s32.totalorder %s133, %s135
    %p142 = scmp.eq.s32.totalorder %s18, 3
    %p143 = por %p141, %p142
    %p144 = scmp.ne.s32.totalorder %s135, %s136
    %p145 = scmp.eq.s32.totalorder %s18, 0
    %p146 = por %p144, %p145
    %p147 = scmp.ne.s32.totalorder %s135, %s136
    %p148 = scmp.eq.s32.totalorder %s19, 3
    %p149 = por %p147, %p148
    %p151 = scmp.ne.s32.totalorder %s136, %s150
    %p152 = scmp.eq.s32.totalorder %s19, 0
    %p153 = por %p151, %p152
    %s155 = sadd.s32 %s154, 1
    %p158 = scmp.eq.s32.totalorder %s13, 3
    %p159 = scmp.ne.s32.totalorder %s154, %s156
    %p160 = scmp.eq.s32.totalorder %s13, 0
    %p161 = por %p159, %p160
    %p162 = scmp.ne.s32.totalorder %s154, %s156
    %p163 = scmp.eq.s32.totalorder %s18, 3
    %p164 = por %p162, %p163
    %p165 = scmp.ne.s32.totalorder %s156, %s157
    %p166 = scmp.eq.s32.totalorder %s18, 0
    %p167 = por %p165, %p166
    %p168 = scmp.ne.s32.totalorder %s156, %s157
    %p169 = scmp.eq.s32.totalorder %s19, 3
    %p170 = por %p168, %p169
    %p172 = scmp.ne.s32.totalorder %s157, %s171
    %p173 = scmp.eq.s32.totalorder %s19, 0
    %p174 = por %p172, %p173
    %s176 = sadd.s32 %s175, 1
    %p179 = scmp.eq.s32.totalorder %s13, 3
    %p180 = scmp.ne.s32.totalorder %s175, %s177
    %p181 = scmp.eq.s32.totalorder %s13, 0
    %p182 = por %p180, %p181
    %p183 = scmp.ne.s32.totalorder %s175, %s177
    %p184 = scmp.eq.s32.totalorder %s18, 3
    %p185 = por %p183, %p184
    %p186 = scmp.ne.s32.totalorder %s177, %s178
    %p187 = scmp.eq.s32.totalorder %s18, 0
    %p188 = por %p186, %p187
    %p189 = scmp.ne.s32.totalorder %s177, %s178
    %p190 = scmp.eq.s32.totalorder %s19, 3
    %p191 = por %p189, %p190
    %p193 = scmp.ne.s32.totalorder %s178, %s192
    %p194 = scmp.eq.s32.totalorder %s19, 0
    %p195 = por %p193, %p194
    %s197 = sadd.s32 %s196, 1
    %p200 = scmp.eq.s32.totalorder %s13, 3
    %p201 = scmp.ne.s32.totalorder %s196, %s198
    %p202 = scmp.eq.s32.totalorder %s13, 0
    %p203 = por %p201, %p202
    %p204 = scmp.ne.s32.totalorder %s196, %s198
    %p205 = scmp.eq.s32.totalorder %s18, 3
    %p206 = por %p204, %p205
    %p207 = scmp.ne.s32.totalorder %s198, %s199
    %p208 = scmp.eq.s32.totalorder %s18, 0
    %p209 = por %p207, %p208
    %p210 = scmp.ne.s32.totalorder %s198, %s199
    %p211 = scmp.eq.s32.totalorder %s19, 3
    %p212 = por %p210, %p211
    %p214 = scmp.ne.s32.totalorder %s199, %s213
    %p215 = scmp.eq.s32.totalorder %s19, 0
    %p216 = por %p214, %p215
    %s217 = ssub.s32 %s20, %s32
    %s218 = ssub.s32 %s21, %s28
    %s219 = sor.u32 %s217, %s218
    %p220 = scmp.eq.s32.totalorder %s219, 0
    %s222 = sadd.s32 %s221, 1
    %s223 = scalar_select %p220, %s221, %s222
    %p226 = pneg %p220
    %p227 = scmp.eq.s32.totalorder %s13, 3
    %p228 = por %p226, %p227
    %p229 = scmp.ne.s32.totalorder %s221, %s224
    %p230 = scmp.eq.s32.totalorder %s13, 0
    %p231 = por %p229, %p230
    %p232 = scmp.ne.s32.totalorder %s221, %s224
    %p233 = scmp.eq.s32.totalorder %s18, 3
    %p234 = por %p232, %p233
    %p235 = scmp.ne.s32.totalorder %s224, %s225
    %p236 = scmp.eq.s32.totalorder %s18, 0
    %p237 = por %p235, %p236
    %p238 = scmp.ne.s32.totalorder %s224, %s225
    %p239 = scmp.eq.s32.totalorder %s19, 3
    %p240 = por %p238, %p239
    %p242 = scmp.ne.s32.totalorder %s225, %s241
    %p243 = scmp.eq.s32.totalorder %s19, 0
    %p244 = por %p242, %p243
    %p245 = scmp.le.s32.totalorder 1, %s13
    %p246 = scmp.lt.s32.totalorder %s13, 5
    %p247 = pnand %p245, %p246
    %p248 = pneg %p247
    // Predicated region
    $region9: #{tpu_custom_call.1} parent=5 // pred_check
      _
    $region10: #{tpu_custom_call.1} parent=5 // pred_check_branch
      %250 = sbr.rel (%p247) target = $region12
    $region11: #{tpu_custom_call.1} parent=5 // pred_region
      %s251 = ssub.s32 %s13, 1
      // Predicated region
      $region13: #{tpu_custom_call.1} parent=11 // pred_check
        %p252 = pneg %p146
      $region14: #{tpu_custom_call.1} parent=11 // pred_check_branch
        %254 = sbr.rel (%p252) target = $region16
      $region15: #{tpu_custom_call.1} parent=11 // pred_region
        _
      $region16: #{tpu_custom_call.1} parent=11 // pred_fallthru
        _
      // Predicated region
      $region17: #{tpu_custom_call.1} parent=11 // pred_check
        %p255 = pneg %p167
      $region18: #{tpu_custom_call.1} parent=11 // pred_check_branch
        %257 = sbr.rel (%p255) target = $region20
      $region19: #{tpu_custom_call.1} parent=11 // pred_region
        _
      $region20: #{tpu_custom_call.1} parent=11 // pred_fallthru
        _
      // Predicated region
      $region21: #{tpu_custom_call.1} parent=11 // pred_check
        %p258 = pneg %p188
      $region22: #{tpu_custom_call.1} parent=11 // pred_check_branch
        %260 = sbr.rel (%p258) target = $region24
      $region23: #{tpu_custom_call.1} parent=11 // pred_region
        _
      $region24: #{tpu_custom_call.1} parent=11 // pred_fallthru
        _
      // Predicated region
      $region25: #{tpu_custom_call.1} parent=11 // pred_check
        %p261 = pneg %p209
      $region26: #{tpu_custom_call.1} parent=11 // pred_check_branch
        %263 = sbr.rel (%p261) target = $region28
      $region27: #{tpu_custom_call.1} parent=11 // pred_region
        _
      $region28: #{tpu_custom_call.1} parent=11 // pred_fallthru
        _
    $region12: #{tpu_custom_call.1} parent=5 // pred_fallthru
      _
    %p264 = scmp.lt.s32.totalorder %s13, 4
    // Predicated region
    $region29: #{tpu_custom_call.1} parent=5 // pred_check
      %p265 = pneg %p264
    $region30: #{tpu_custom_call.1} parent=5 // pred_check_branch
      %267 = sbr.rel (%p265) target = $region32
    $region31: #{tpu_custom_call.1} parent=5 // pred_region
      // Predicated region
      $region33: #{tpu_custom_call.1} parent=31 // pred_check
        %p268 = pneg %p55
      $region34: #{tpu_custom_call.1} parent=31 // pred_check_branch
        %270 = sbr.rel (%p268) target = $region36
      $region35: #{tpu_custom_call.1} parent=31 // pred_region
        %s271 = smul.u32 %s21, 4
        %s272 = ssub.s32 %s271, 1
        %p273 = scmp.gt.s32.totalorder %s272, 0
        %s274 = scalar_select %p273, %s272, 0
        %s275 = smul.u32 2, %s274
        %p276 = scmp.lt.s32.totalorder %s20, 1
        %s277 = scalar_select %p276, %s20, 1
        %p278 = scmp.lt.s32.totalorder %s275, 15
        %s279 = scalar_select %p278, %s275, 15
        %s280 = smul.addr %s279, 2
        %s281 = smul.addr %s277, 32
        %s282 = sadd.s32 %s280, %s281
        %s283 = smul.addr %s282, 8
        %s284 = scalar_lea.vmem %s0, %s283
        %s285 = smul.u32 %s21, 4
        %s286 = ssub.s32 %s285, 1
        %p287 = scmp.gt.s32.totalorder %s286, 0
        %s288 = scalar_select %p287, %s286, 0
        %s289 = smul.u32 2, %s288
      $region36: #{tpu_custom_call.1} parent=31 // pred_fallthru
        _
      // Predicated region
      $region37: #{tpu_custom_call.1} parent=31 // pred_check
        %p290 = pneg %p83
      $region38: #{tpu_custom_call.1} parent=31 // pred_check_branch
        %292 = sbr.rel (%p290) target = $region40
      $region39: #{tpu_custom_call.1} parent=31 // pred_region
        %s293 = smul.u32 8, %s21
        %p294 = scmp.lt.s32.totalorder %s20, 1
        %s295 = scalar_select %p294, %s20, 1
        %p296 = scmp.lt.s32.totalorder %s293, 15
        %s297 = scalar_select %p296, %s293, 15
        %s298 = smul.addr %s297, 2
        %s299 = smul.addr %s295, 32
        %s300 = sadd.s32 %s298, %s299
        %s301 = smul.addr %s300, 8
        %s302 = scalar_lea.vmem %s1, %s301
        %s303 = smul.u32 8, %s21
      $region40: #{tpu_custom_call.1} parent=31 // pred_fallthru
        _
      // Predicated region
      $region41: #{tpu_custom_call.1} parent=31 // pred_check
        %p304 = pneg %p119
      $region42: #{tpu_custom_call.1} parent=31 // pred_check_branch
        %306 = sbr.rel (%p304) target = $region44
      $region43: #{tpu_custom_call.1} parent=31 // pred_region
        %s307 = smul.u32 %s21, 4
        %s308 = sadd.s32 %s307, 4
        %p309 = scmp.lt.s32.totalorder %s308, 7
        %s310 = scalar_select %p309, %s308, 7
        %s311 = smul.u32 2, %s310
        %p312 = scmp.lt.s32.totalorder %s20, 1
        %s313 = scalar_select %p312, %s20, 1
        %p314 = scmp.lt.s32.totalorder %s311, 15
        %s315 = scalar_select %p314, %s311, 15
        %s316 = smul.addr %s315, 2
        %s317 = smul.addr %s313, 32
        %s318 = sadd.s32 %s316, %s317
        %s319 = smul.addr %s318, 8
        %s320 = scalar_lea.vmem %s2, %s319
        %s321 = smul.u32 %s21, 4
        %s322 = sadd.s32 %s321, 4
        %p323 = scmp.lt.s32.totalorder %s322, 7
        %s324 = scalar_select %p323, %s322, 7
        %s325 = smul.u32 2, %s324
      $region44: #{tpu_custom_call.1} parent=31 // pred_fallthru
        _
    $region32: #{tpu_custom_call.1} parent=5 // pred_fallthru
      _
    %p326 = scmp.le.s32.totalorder 1, %s13
    %p327 = scmp.lt.s32.totalorder %s13, 5
    %p328 = pnand %p326, %p327
    %p329 = pneg %p328
    // Predicated region
    $region45: #{tpu_custom_call.1} parent=5 // pred_check
      _
    $region46: #{tpu_custom_call.1} parent=5 // pred_check_branch
      %331 = sbr.rel (%p328) target = $region48
    $region47: #{tpu_custom_call.1} parent=5 // pred_region
      %s332 = ssub.s32 %s13, 1
      %s333 = smul.u32 %s23, 4
      %s334 = ssub.s32 %s333, 1
      %p335 = scmp.gt.s32.totalorder %s334, 0
      %s336 = scalar_select %p335, %s334, 0
      %s337 = smul.u32 2, %s336
      %p338 = scmp.lt.s32.totalorder %s22, 1
      %s339 = scalar_select %p338, %s22, 1
      %p340 = scmp.lt.s32.totalorder %s337, 15
      %s341 = scalar_select %p340, %s337, 15
      %s342 = smul.addr %s341, 2
      %s343 = smul.addr %s339, 32
      %s344 = sadd.s32 %s342, %s343
      %s345 = smul.addr %s344, 8
      %s346 = scalar_lea.vmem %s0, %s345
      %p347 = pneg %p61
      %p348 = pneg %p58
      %s349 = smul.u32 8, %s23
      %p350 = scmp.lt.s32.totalorder %s22, 1
      %s351 = scalar_select %p350, %s22, 1
      %p352 = scmp.lt.s32.totalorder %s349, 15
      %s353 = scalar_select %p352, %s349, 15
      %s354 = smul.addr %s353, 2
      %s355 = smul.addr %s351, 32
      %s356 = sadd.s32 %s354, %s355
      %s357 = smul.addr %s356, 8
      %s358 = scalar_lea.vmem %s1, %s357
      %p359 = pneg %p89
      %p360 = pneg %p86
      %s361 = smul.u32 %s23, 4
      %s362 = sadd.s32 %s361, 4
      %p363 = scmp.lt.s32.totalorder %s362, 7
      %s364 = scalar_select %p363, %s362, 7
      %s365 = smul.u32 2, %s364
      %p366 = scmp.lt.s32.totalorder %s22, 1
      %s367 = scalar_select %p366, %s22, 1
      %p368 = scmp.lt.s32.totalorder %s365, 15
      %s369 = scalar_select %p368, %s365, 15
      %s370 = smul.addr %s369, 2
      %s371 = smul.addr %s367, 32
      %s372 = sadd.s32 %s370, %s371
      %s373 = smul.addr %s372, 8
      %s374 = scalar_lea.vmem %s2, %s373
      %p375 = pneg %p125
      %p376 = pneg %p122
      %p377 = pneg %p146
      %p378 = pneg %p143
      %p379 = pneg %p167
      %p380 = pneg %p164
      %p381 = pneg %p188
      %p382 = pneg %p185
      %p383 = pneg %p209
      %p384 = pneg %p206
      %p385 = pneg %p237
      %p386 = pneg %p234
      %s387 = smul.u32 8, %s23
      %p388 = scmp.lt.s32.totalorder %s22, 1
      %s389 = scalar_select %p388, %s22, 1
      %p390 = scmp.lt.s32.totalorder %s387, 15
      %s391 = scalar_select %p390, %s387, 15
      %s392 = smul.addr %s391, 2
      %s393 = smul.addr %s389, 32
      %s394 = sadd.s32 %s392, %s393
      %s395 = smul.addr %s394, 8
      %s396 = scalar_lea.vmem %s7, %s395
      %s397 = smul.u32 %s23, 4
      %s398 = ssub.s32 %s397, 1
      %p399 = scmp.gt.s32.totalorder %s398, 0
      %s400 = scalar_select %p399, %s398, 0
      %s401 = smul.u32 2, %s400
      %p402 = scmp.lt.s32.totalorder %s22, 1
      %s403 = scalar_select %p402, %s22, 1
      %p404 = scmp.lt.s32.totalorder %s401, 15
      %s405 = scalar_select %p404, %s401, 15
      %s406 = smul.addr %s405, 2
      %s407 = smul.addr %s403, 32
      %s408 = sadd.s32 %s406, %s407
      %s409 = smul.addr %s408, 8
      %s410 = scalar_lea.vmem %s0, %s409
      %s411 = smul.u32 %s23, 4
      %s412 = ssub.s32 %s411, 1
      %p413 = scmp.gt.s32.totalorder %s412, 0
      %s414 = scalar_select %p413, %s412, 0
      %s415 = smul.u32 2, %s414
      %s416 = smul.u32 8, %s23
      %p417 = scmp.lt.s32.totalorder %s22, 1
      %s418 = scalar_select %p417, %s22, 1
      %p419 = scmp.lt.s32.totalorder %s416, 15
      %s420 = scalar_select %p419, %s416, 15
      %s421 = smul.addr %s420, 2
      %s422 = smul.addr %s418, 32
      %s423 = sadd.s32 %s421, %s422
      %s424 = smul.addr %s423, 8
      %s425 = scalar_lea.vmem %s1, %s424
      %s426 = smul.u32 8, %s23
      %s427 = smul.u32 %s23, 4
      %s428 = sadd.s32 %s427, 4
      %p429 = scmp.lt.s32.totalorder %s428, 7
      %s430 = scalar_select %p429, %s428, 7
      %s431 = smul.u32 2, %s430
      %p432 = scmp.lt.s32.totalorder %s22, 1
      %s433 = scalar_select %p432, %s22, 1
      %p434 = scmp.lt.s32.totalorder %s431, 15
      %s435 = scalar_select %p434, %s431, 15
      %s436 = smul.addr %s435, 2
      %s437 = smul.addr %s433, 32
      %s438 = sadd.s32 %s436, %s437
      %s439 = smul.addr %s438, 8
      %s440 = scalar_lea.vmem %s2, %s439
      %s441 = smul.u32 %s23, 4
      %s442 = sadd.s32 %s441, 4
      %p443 = scmp.lt.s32.totalorder %s442, 7
      %s444 = scalar_select %p443, %s442, 7
      %s445 = smul.u32 2, %s444
      %s446 = smul.u32 8, %s23
      %p447 = scmp.lt.s32.totalorder %s22, 1
      %s448 = scalar_select %p447, %s22, 1
      %p449 = scmp.lt.s32.totalorder %s446, 15
      %s450 = scalar_select %p449, %s446, 15
      %s451 = smul.addr %s450, 2
      %s452 = smul.addr %s448, 32
      %s453 = sadd.s32 %s451, %s452
      %s454 = smul.addr %s453, 8
      %s455 = scalar_lea.vmem %s7, %s454
      %s456 = smul.u32 8, %s23
      %p458 = scmp.eq.s32.totalorder %s23, 0
      %p459 = scmp.eq.s32.totalorder %s23, 1
      %v460 = vld [vmem:[%s410] sm:$0xff]
      %v461 = vld [vmem:[%s410 + $0x8] sm:$0xff]
      %v462 = vld [vmem:[%s410 + $0x10] sm:$0xff]
      %v463 = vld [vmem:[%s410 + $0x18] sm:$0xff]
      %s464 = scalar_select %p458, 1, 0
      %v465 = vstv %s464
      %vm466 = vcmp.eq.s32.totalorder %v465, 1
      %v467 = vsel %vm466, 0.0, %v460
      %v468 = vsel %vm466, 0.0, %v461
      %v469 = vsel %vm466, 0.0, %v462
      %v470 = vsel %vm466, 0.0, %v463
      %v471 = vld [vmem:[%s440] sm:$0xff]
      %v472 = vld [vmem:[%s440 + $0x8] sm:$0xff]
      %v473 = vld [vmem:[%s440 + $0x10] sm:$0xff]
      %v474 = vld [vmem:[%s440 + $0x18] sm:$0xff]
      %s475 = scalar_select %p459, 1, 0
      %v476 = vstv %s475
      %vm477 = vcmp.eq.s32.totalorder %v476, 1
      %v478 = vsel %vm477, 0.0, %v471
      %v479 = vsel %vm477, 0.0, %v472
      %v480 = vsel %vm477, 0.0, %v473
      %v481 = vsel %vm477, 0.0, %v474
      %v482 = vld [vmem:[%s425] sm:$0xff]
      %v483 = vld [vmem:[%s425 + $0x8] sm:$0xff]
      %v484 = vld [vmem:[%s425 + $0x10] sm:$0xff]
      %v485 = vld [vmem:[%s425 + $0x18] sm:$0xff]
      %v486 = vld [vmem:[%s425 + $0x20] sm:$0xff]
      %v487 = vld [vmem:[%s425 + $0x28] sm:$0xff]
      %v488 = vld [vmem:[%s425 + $0x30] sm:$0xff]
      %v489 = vld [vmem:[%s425 + $0x38] sm:$0xff]
      %v490 = vld [vmem:[%s425 + $0x40] sm:$0xff]
      %v491 = vld [vmem:[%s425 + $0x48] sm:$0xff]
      %v492 = vld [vmem:[%s425 + $0x50] sm:$0xff]
      %v493 = vld [vmem:[%s425 + $0x58] sm:$0xff]
      %v494 = vld [vmem:[%s425 + $0x60] sm:$0xff]
      %v495 = vld [vmem:[%s425 + $0x68] sm:$0xff]
      %v496 = vld [vmem:[%s425 + $0x70] sm:$0xff]
      %v497 = vld [vmem:[%s425 + $0x78] sm:$0xff]
      %v498 = vpack.c.bf16 %v468, %v467
      %v499 = vpack.c.bf16 %v470, %v469
      %v500 = vpack.c.bf16 %v483, %v482
      %v501 = vpack.c.bf16 %v485, %v484
      %v502 = vpack.c.bf16 %v487, %v486
      %v503 = vpack.c.bf16 %v489, %v488
      %v504 = vpack.c.bf16 %v491, %v490
      %v505 = vpack.c.bf16 %v493, %v492
      %v506 = vpack.c.bf16 %v495, %v494
      %v507 = vpack.c.bf16 %v497, %v496
      %v508 = vpack.c.bf16 %v479, %v478
      %v509 = vpack.c.bf16 %v481, %v480
      %vm510 = vcmask 31744
      %v513 = vsel %vm510, %v498, 0
      %v515 = vsel %vm510, %v499, 0
      %v517 = vsel %vm510, %v500, 0
      %v519 = vsel %vm510, %v501, 0
      %v521 = vsel %vm510, %v502, 0
      %v523 = vsel %vm510, %v503, 0
      %v525 = vsel %vm510, %v504, 0
      %v527 = vsel %vm510, %v505, 0
      %v529 = vsel %vm510, %v506, 0
      %v531 = vsel %vm510, %v507, 0
      %v533 = vsel %vm510, %v508, 0
      %v535 = vsel %vm510, %v509, 0
      %vm536 = vcmask 1040384
      %vm537 = vsmask.f32 256
      %vm538 = vmand %vm536, %vm537
      %v539 = vld [vmem:[#allocation2] sm:$0x1]
      %v540 = vsel %vm538, 0, %v539
      %541 = vst [vmem:[#allocation2] sm:$0x1] %v540
      %v542 = vld [vmem:[#allocation2 + $0xc] sm:$0x1]
      %v543 = vsel %vm538, 0, %v542
      %544 = vst [vmem:[#allocation2 + $0xc] sm:$0x1] %v543
      %v545 = vld [vmem:[#allocation2 + $0x18] sm:$0x1]
      %v546 = vsel %vm538, 0, %v545
      %547 = vst [vmem:[#allocation2 + $0x18] sm:$0x1] %v546
      %v548 = vld [vmem:[#allocation2 + $0x24] sm:$0x1]
      %v549 = vsel %vm538, 0, %v548
      %550 = vst [vmem:[#allocation2 + $0x24] sm:$0x1] %v549
      %v551 = vld [vmem:[#allocation2 + $0x30] sm:$0x1]
      %v552 = vsel %vm538, 0, %v551
      %553 = vst [vmem:[#allocation2 + $0x30] sm:$0x1] %v552
      %v554 = vld [vmem:[#allocation2 + $0x3c] sm:$0x1]
      %v555 = vsel %vm538, 0, %v554
      %556 = vst [vmem:[#allocation2 + $0x3c] sm:$0x1] %v555
      %v557 = vld [vmem:[#allocation2 + $0x48] sm:$0x1]
      %v558 = vsel %vm538, 0, %v557
      %559 = vst [vmem:[#allocation2 + $0x48] sm:$0x1] %v558
      %v560 = vld [vmem:[#allocation2 + $0x54] sm:$0x1]
      %v561 = vsel %vm538, 0, %v560
      %562 = vst [vmem:[#allocation2 + $0x54] sm:$0x1] %v561
      %v563 = vld [vmem:[#allocation2 + $0x60] sm:$0x1]
      %v564 = vsel %vm538, 0, %v563
      %565 = vst [vmem:[#allocation2 + $0x60] sm:$0x1] %v564
      %v566 = vld [vmem:[#allocation2 + $0x6c] sm:$0x1]
      %v567 = vsel %vm538, 0, %v566
      %568 = vst [vmem:[#allocation2 + $0x6c] sm:$0x1] %v567
      %v569 = vld [vmem:[#allocation2 + $0x78] sm:$0x1]
      %v570 = vsel %vm538, 0, %v569
      %571 = vst [vmem:[#allocation2 + $0x78] sm:$0x1] %v570
      %v572 = vld [vmem:[#allocation2 + $0x84] sm:$0x1]
      %v573 = vsel %vm538, 0, %v572
      %574 = vst [vmem:[#allocation2 + $0x84] sm:$0x1] %v573
      %vm575 = vsmask.f32 7938
      %vm576 = vmand %vm536, %vm575
      %v577 = vld [vmem:[#allocation2 + $0x8] sm:$0x1]
      %v578 = vsel %vm576, 0, %v577
      %579 = vst [vmem:[#allocation2 + $0x8] sm:$0x1] %v578
      %v580 = vld [vmem:[#allocation2 + $0x14] sm:$0x1]
      %v581 = vsel %vm576, 0, %v580
      %582 = vst [vmem:[#allocation2 + $0x14] sm:$0x1] %v581
      %v583 = vld [vmem:[#allocation2 + $0x20] sm:$0x1]
      %v584 = vsel %vm576, 0, %v583
      %585 = vst [vmem:[#allocation2 + $0x20] sm:$0x1] %v584
      %v586 = vld [vmem:[#allocation2 + $0x2c] sm:$0x1]
      %v587 = vsel %vm576, 0, %v586
      %588 = vst [vmem:[#allocation2 + $0x2c] sm:$0x1] %v587
      %v589 = vld [vmem:[#allocation2 + $0x38] sm:$0x1]
      %v590 = vsel %vm576, 0, %v589
      %591 = vst [vmem:[#allocation2 + $0x38] sm:$0x1] %v590
      %v592 = vld [vmem:[#allocation2 + $0x44] sm:$0x1]
      %v593 = vsel %vm576, 0, %v592
      %594 = vst [vmem:[#allocation2 + $0x44] sm:$0x1] %v593
      %v595 = vld [vmem:[#allocation2 + $0x50] sm:$0x1]
      %v596 = vsel %vm576, 0, %v595
      %597 = vst [vmem:[#allocation2 + $0x50] sm:$0x1] %v596
      %v598 = vld [vmem:[#allocation2 + $0x5c] sm:$0x1]
      %v599 = vsel %vm576, 0, %v598
      %600 = vst [vmem:[#allocation2 + $0x5c] sm:$0x1] %v599
      %v601 = vld [vmem:[#allocation2 + $0x68] sm:$0x1]
      %v602 = vsel %vm576, 0, %v601
      %603 = vst [vmem:[#allocation2 + $0x68] sm:$0x1] %v602
      %v604 = vld [vmem:[#allocation2 + $0x74] sm:$0x1]
      %v605 = vsel %vm576, 0, %v604
      %606 = vst [vmem:[#allocation2 + $0x74] sm:$0x1] %v605
      %v607 = vld [vmem:[#allocation2 + $0x80] sm:$0x1]
      %v608 = vsel %vm576, 0, %v607
      %609 = vst [vmem:[#allocation2 + $0x80] sm:$0x1] %v608
      %v610 = vld [vmem:[#allocation2 + $0x8c] sm:$0x1]
      %v611 = vsel %vm576, 0, %v610
      %612 = vst [vmem:[#allocation2 + $0x8c] sm:$0x1] %v611
      %v625 = vunpack.c.l.b16 %v513
      %v626 = vunpack.c.h.b16 %v513
      %v627 = vunpack.c.l.b16 %v515
      %v628 = vunpack.c.h.b16 %v515
      %v629 = vunpack.c.l.b16 %v517
      %v630 = vunpack.c.h.b16 %v517
      %v631 = vunpack.c.l.b16 %v519
      %v632 = vunpack.c.h.b16 %v519
      %v633 = vunpack.c.l.b16 %v521
      %v634 = vunpack.c.h.b16 %v521
      %v635 = vunpack.c.l.b16 %v523
      %v636 = vunpack.c.h.b16 %v523
      %v637 = vunpack.c.l.b16 %v525
      %v638 = vunpack.c.h.b16 %v525
      %v639 = vunpack.c.l.b16 %v527
      %v640 = vunpack.c.h.b16 %v527
      %v641 = vunpack.c.l.b16 %v529
      %v642 = vunpack.c.h.b16 %v529
      %v643 = vunpack.c.l.b16 %v531
      %v644 = vunpack.c.h.b16 %v531
      %v645 = vunpack.c.l.b16 %v533
      %v646 = vunpack.c.h.b16 %v533
      %v647 = vunpack.c.l.b16 %v535
      %v648 = vunpack.c.h.b16 %v535
      %v649 = vpack.c.b16 %v625, %v625
      %v650 = vpack.c.b16 %v626, %v626
      %v651 = vpack.c.b16 %v627, %v627
      %v652 = vpack.c.b16 %v628, %v628
      %v653 = vpack.c.b16 %v629, %v629
      %v654 = vpack.c.b16 %v630, %v630
      %v655 = vpack.c.b16 %v631, %v631
      %v656 = vpack.c.b16 %v632, %v632
      %v657 = vpack.c.b16 %v633, %v633
      %v658 = vpack.c.b16 %v634, %v634
      %v659 = vpack.c.b16 %v635, %v635
      %v660 = vpack.c.b16 %v636, %v636
      %v661 = vpack.c.b16 %v637, %v637
      %v662 = vpack.c.b16 %v638, %v638
      %v663 = vpack.c.b16 %v639, %v639
      %v664 = vpack.c.b16 %v640, %v640
      %v665 = vpack.c.b16 %v641, %v641
      %v666 = vpack.c.b16 %v642, %v642
      %v667 = vpack.c.b16 %v643, %v643
      %v668 = vpack.c.b16 %v644, %v644
      %v669 = vpack.c.b16 %v645, %v645
      %v670 = vpack.c.b16 %v646, %v646
      %v671 = vpack.c.b16 %v647, %v647
      %v672 = vpack.c.b16 %v648, %v648
      %vm673 = vsmask.f32 4368
      %vm674 = vmor %vm537, %vm673
      %v676 = vshrl.u32 %v649, 16
      %v678 = vrot.slane %v676, 7
      %v679 = vshll.u32 %v649, 16
      %v681 = vor.u32 %v678, %v679
      %v682 = vrot.slane %v678, 4
      %v684 = vshrl.u32 %v650, 16
      %v686 = vrot.slane %v684, 7
      %v687 = vshll.u32 %v650, 16
      %v689 = vor.u32 %v686, %v687
      %v690 = vsel %vm674, %v682, %v689
      %v691 = vrot.slane %v686, 4
      %v693 = vshrl.u32 %v651, 16
      %v695 = vrot.slane %v693, 7
      %v696 = vshll.u32 %v651, 16
      %v698 = vor.u32 %v695, %v696
      %v699 = vrot.slane %v695, 4
      %v701 = vshrl.u32 %v652, 16
      %v703 = vrot.slane %v701, 7
      %v704 = vshll.u32 %v652, 16
      %v706 = vor.u32 %v703, %v704
      %v707 = vsel %vm674, %v699, %v706
      %v708 = vrot.slane %v703, 4
      %v710 = vshrl.u32 %v653, 16
      %v712 = vrot.slane %v710, 7
      %v713 = vshll.u32 %v653, 16
      %v715 = vor.u32 %v712, %v713
      %v716 = vrot.slane %v712, 4
      %v718 = vshrl.u32 %v654, 16
      %v720 = vrot.slane %v718, 7
      %v721 = vshll.u32 %v654, 16
      %v723 = vor.u32 %v720, %v721
      %v724 = vsel %vm674, %v716, %v723
      %v725 = vrot.slane %v720, 4
      %v727 = vshrl.u32 %v655, 16
      %v729 = vrot.slane %v727, 7
      %v730 = vshll.u32 %v655, 16
      %v732 = vor.u32 %v729, %v730
      %v733 = vrot.slane %v729, 4
      %v735 = vshrl.u32 %v656, 16
      %v737 = vrot.slane %v735, 7
      %v738 = vshll.u32 %v656, 16
      %v740 = vor.u32 %v737, %v738
      %v741 = vsel %vm674, %v733, %v740
      %v742 = vrot.slane %v737, 4
      %v744 = vshrl.u32 %v657, 16
      %v746 = vrot.slane %v744, 7
      %v747 = vshll.u32 %v657, 16
      %v749 = vor.u32 %v746, %v747
      %v750 = vrot.slane %v746, 4
      %v752 = vshrl.u32 %v658, 16
      %v754 = vrot.slane %v752, 7
      %v755 = vshll.u32 %v658, 16
      %v757 = vor.u32 %v754, %v755
      %v758 = vsel %vm674, %v750, %v757
      %v759 = vrot.slane %v754, 4
      %v761 = vshrl.u32 %v659, 16
      %v763 = vrot.slane %v761, 7
      %v764 = vshll.u32 %v659, 16
      %v766 = vor.u32 %v763, %v764
      %v767 = vrot.slane %v763, 4
      %v769 = vshrl.u32 %v660, 16
      %v771 = vrot.slane %v769, 7
      %v772 = vshll.u32 %v660, 16
      %v774 = vor.u32 %v771, %v772
      %v775 = vsel %vm674, %v767, %v774
      %v776 = vrot.slane %v771, 4
      %v778 = vshrl.u32 %v661, 16
      %v780 = vrot.slane %v778, 7
      %v781 = vshll.u32 %v661, 16
      %v783 = vor.u32 %v780, %v781
      %v784 = vrot.slane %v780, 4
      %v786 = vshrl.u32 %v662, 16
      %v788 = vrot.slane %v786, 7
      %v789 = vshll.u32 %v662, 16
      %v791 = vor.u32 %v788, %v789
      %v792 = vsel %vm674, %v784, %v791
      %v793 = vrot.slane %v788, 4
      %v795 = vshrl.u32 %v663, 16
      %v797 = vrot.slane %v795, 7
      %v798 = vshll.u32 %v663, 16
      %v800 = vor.u32 %v797, %v798
      %v801 = vrot.slane %v797, 4
      %v803 = vshrl.u32 %v664, 16
      %v805 = vrot.slane %v803, 7
      %v806 = vshll.u32 %v664, 16
      %v808 = vor.u32 %v805, %v806
      %v809 = vsel %vm674, %v801, %v808
      %v810 = vrot.slane %v805, 4
      %v812 = vshrl.u32 %v665, 16
      %v814 = vrot.slane %v812, 7
      %v815 = vshll.u32 %v665, 16
      %v817 = vor.u32 %v814, %v815
      %v818 = vrot.slane %v814, 4
      %v820 = vshrl.u32 %v666, 16
      %v822 = vrot.slane %v820, 7
      %v823 = vshll.u32 %v666, 16
      %v825 = vor.u32 %v822, %v823
      %v826 = vsel %vm674, %v818, %v825
      %v827 = vrot.slane %v822, 4
      %v829 = vshrl.u32 %v667, 16
      %v831 = vrot.slane %v829, 7
      %v832 = vshll.u32 %v667, 16
      %v834 = vor.u32 %v831, %v832
      %v835 = vrot.slane %v831, 4
      %v837 = vshrl.u32 %v668, 16
      %v839 = vrot.slane %v837, 7
      %v840 = vshll.u32 %v668, 16
      %v842 = vor.u32 %v839, %v840
      %v843 = vsel %vm674, %v835, %v842
      %v844 = vrot.slane %v839, 4
      %v846 = vshrl.u32 %v669, 16
      %v848 = vrot.slane %v846, 7
      %v849 = vshll.u32 %v669, 16
      %v851 = vor.u32 %v848, %v849
      %v852 = vrot.slane %v848, 4
      %v854 = vshrl.u32 %v670, 16
      %v856 = vrot.slane %v854, 7
      %v857 = vshll.u32 %v670, 16
      %v859 = vor.u32 %v856, %v857
      %v860 = vsel %vm674, %v852, %v859
      %v861 = vrot.slane %v856, 4
      %v863 = vshrl.u32 %v671, 16
      %v865 = vrot.slane %v863, 7
      %v866 = vshll.u32 %v671, 16
      %v868 = vor.u32 %v865, %v866
      %v869 = vrot.slane %v865, 4
      %v871 = vshrl.u32 %v672, 16
      %v873 = vrot.slane %v871, 7
      %v874 = vshll.u32 %v672, 16
      %v876 = vor.u32 %v873, %v874
      %v877 = vsel %vm674, %v869, %v876
      %v878 = vrot.slane %v873, 4
      %vm915 = vcmask 1043456
      %vm916 = vmand %vm915, %vm575
      %v917 = vld [vmem:[#allocation2] sm:$0xf]
      %v918 = vsel %vm916, %v681, %v917
      %919 = vst [vmem:[#allocation2] sm:$0xf] %v918
      %920 = vst [vmem:[#allocation2 + $0x4] sm:$0xf] %v690
      %v921 = vld [vmem:[#allocation2 + $0x8] sm:$0x1]
      %v922 = vsel %vm538, %v691, %v921
      %923 = vst [vmem:[#allocation2 + $0x8] sm:$0x1] %v922
      %v924 = vld [vmem:[#allocation2 + $0xc] sm:$0xf]
      %v925 = vsel %vm916, %v698, %v924
      %926 = vst [vmem:[#allocation2 + $0xc] sm:$0xf] %v925
      %927 = vst [vmem:[#allocation2 + $0x10] sm:$0xf] %v707
      %v928 = vld [vmem:[#allocation2 + $0x14] sm:$0x1]
      %v929 = vsel %vm538, %v708, %v928
      %930 = vst [vmem:[#allocation2 + $0x14] sm:$0x1] %v929
      %v931 = vld [vmem:[#allocation2 + $0x18] sm:$0xf]
      %v932 = vsel %vm916, %v715, %v931
      %933 = vst [vmem:[#allocation2 + $0x18] sm:$0xf] %v932
      %934 = vst [vmem:[#allocation2 + $0x1c] sm:$0xf] %v724
      %v935 = vld [vmem:[#allocation2 + $0x20] sm:$0x1]
      %v936 = vsel %vm538, %v725, %v935
      %937 = vst [vmem:[#allocation2 + $0x20] sm:$0x1] %v936
      %v938 = vld [vmem:[#allocation2 + $0x24] sm:$0xf]
      %v939 = vsel %vm916, %v732, %v938
      %940 = vst [vmem:[#allocation2 + $0x24] sm:$0xf] %v939
      %941 = vst [vmem:[#allocation2 + $0x28] sm:$0xf] %v741
      %v942 = vld [vmem:[#allocation2 + $0x2c] sm:$0x1]
      %v943 = vsel %vm538, %v742, %v942
      %944 = vst [vmem:[#allocation2 + $0x2c] sm:$0x1] %v943
      %v945 = vld [vmem:[#allocation2 + $0x30] sm:$0xf]
      %v946 = vsel %vm916, %v749, %v945
      %947 = vst [vmem:[#allocation2 + $0x30] sm:$0xf] %v946
      %948 = vst [vmem:[#allocation2 + $0x34] sm:$0xf] %v758
      %v949 = vld [vmem:[#allocation2 + $0x38] sm:$0x1]
      %v950 = vsel %vm538, %v759, %v949
      %951 = vst [vmem:[#allocation2 + $0x38] sm:$0x1] %v950
      %v952 = vld [vmem:[#allocation2 + $0x3c] sm:$0xf]
      %v953 = vsel %vm916, %v766, %v952
      %954 = vst [vmem:[#allocation2 + $0x3c] sm:$0xf] %v953
      %955 = vst [vmem:[#allocation2 + $0x40] sm:$0xf] %v775
      %v956 = vld [vmem:[#allocation2 + $0x44] sm:$0x1]
      %v957 = vsel %vm538, %v776, %v956
      %958 = vst [vmem:[#allocation2 + $0x44] sm:$0x1] %v957
      %v959 = vld [vmem:[#allocation2 + $0x48] sm:$0xf]
      %v960 = vsel %vm916, %v783, %v959
      %961 = vst [vmem:[#allocation2 + $0x48] sm:$0xf] %v960
      %962 = vst [vmem:[#allocation2 + $0x4c] sm:$0xf] %v792
      %v963 = vld [vmem:[#allocation2 + $0x50] sm:$0x1]
      %v964 = vsel %vm538, %v793, %v963
      %965 = vst [vmem:[#allocation2 + $0x50] sm:$0x1] %v964
      %v966 = vld [vmem:[#allocation2 + $0x54] sm:$0xf]
      %v967 = vsel %vm916, %v800, %v966
      %968 = vst [vmem:[#allocation2 + $0x54] sm:$0xf] %v967
      %969 = vst [vmem:[#allocation2 + $0x58] sm:$0xf] %v809
      %v970 = vld [vmem:[#allocation2 + $0x5c] sm:$0x1]
      %v971 = vsel %vm538, %v810, %v970
      %972 = vst [vmem:[#allocation2 + $0x5c] sm:$0x1] %v971
      %v973 = vld [vmem:[#allocation2 + $0x60] sm:$0xf]
      %v974 = vsel %vm916, %v817, %v973
      %975 = vst [vmem:[#allocation2 + $0x60] sm:$0xf] %v974
      %976 = vst [vmem:[#allocation2 + $0x64] sm:$0xf] %v826
      %v977 = vld [vmem:[#allocation2 + $0x68] sm:$0x1]
      %v978 = vsel %vm538, %v827, %v977
      %979 = vst [vmem:[#allocation2 + $0x68] sm:$0x1] %v978
      %v980 = vld [vmem:[#allocation2 + $0x6c] sm:$0xf]
      %v981 = vsel %vm916, %v834, %v980
      %982 = vst [vmem:[#allocation2 + $0x6c] sm:$0xf] %v981
      %983 = vst [vmem:[#allocation2 + $0x70] sm:$0xf] %v843
      %v984 = vld [vmem:[#allocation2 + $0x74] sm:$0x1]
      %v985 = vsel %vm538, %v844, %v984
      %986 = vst [vmem:[#allocation2 + $0x74] sm:$0x1] %v985
      %v987 = vld [vmem:[#allocation2 + $0x78] sm:$0xf]
      %v988 = vsel %vm916, %v851, %v987
      %989 = vst [vmem:[#allocation2 + $0x78] sm:$0xf] %v988
      %990 = vst [vmem:[#allocation2 + $0x7c] sm:$0xf] %v860
      %v991 = vld [vmem:[#allocation2 + $0x80] sm:$0x1]
      %v992 = vsel %vm538, %v861, %v991
      %993 = vst [vmem:[#allocation2 + $0x80] sm:$0x1] %v992
      %v994 = vld [vmem:[#allocation2 + $0x84] sm:$0xf]
      %v995 = vsel %vm916, %v868, %v994
      %996 = vst [vmem:[#allocation2 + $0x84] sm:$0xf] %v995
      %997 = vst [vmem:[#allocation2 + $0x88] sm:$0xf] %v877
      %v998 = vld [vmem:[#allocation2 + $0x8c] sm:$0x1]
      %v999 = vsel %vm538, %v878, %v998
      %1000 = vst [vmem:[#allocation2 + $0x8c] sm:$0x1] %v999
      %v1001 = vld [vmem:[#allocation2] sm:$0xf]
      %v1002 = vld [vmem:[#allocation2 + $0x4] sm:$0xf]
      %v1003 = vld [vmem:[#allocation2 + $0xc] sm:$0xf]
      %v1004 = vld [vmem:[#allocation2 + $0x10] sm:$0xf]
      %v1005 = vld [vmem:[#allocation2 + $0x18] sm:$0xf]
      %v1006 = vld [vmem:[#allocation2 + $0x1c] sm:$0xf]
      %v1007 = vld [vmem:[#allocation2 + $0x24] sm:$0xf]
      %v1008 = vld [vmem:[#allocation2 + $0x28] sm:$0xf]
      %v1009 = vld [vmem:[#allocation2 + $0x30] sm:$0xf]
      %v1010 = vld [vmem:[#allocation2 + $0x34] sm:$0xf]
      %v1011 = vld [vmem:[#allocation2 + $0x3c] sm:$0xf]
      %v1012 = vld [vmem:[#allocation2 + $0x40] sm:$0xf]
      %v1013 = vld [vmem:[#allocation2 + $0x48] sm:$0xf]
      %v1014 = vld [vmem:[#allocation2 + $0x4c] sm:$0xf]
      %v1015 = vld [vmem:[#allocation2 + $0x54] sm:$0xf]
      %v1016 = vld [vmem:[#allocation2 + $0x58] sm:$0xf]
      %v1017 = vld [vmem:[#allocation2 + $0x60] sm:$0xf]
      %v1018 = vld [vmem:[#allocation2 + $0x64] sm:$0xf]
      %v1019 = vld [vmem:[#allocation2 + $0x6c] sm:$0xf]
      %v1020 = vld [vmem:[#allocation2 + $0x70] sm:$0xf]
      %v1041 = vunpack.c.l.b16 %v1001
      %v1042 = vunpack.c.l.b16 %v1002
      %v1043 = vunpack.c.l.b16 %v1003
      %v1044 = vunpack.c.l.b16 %v1004
      %v1045 = vunpack.c.l.b16 %v1005
      %v1046 = vunpack.c.l.b16 %v1006
      %v1047 = vunpack.c.l.b16 %v1007
      %v1048 = vunpack.c.l.b16 %v1008
      %v1049 = vunpack.c.l.b16 %v1009
      %v1050 = vunpack.c.l.b16 %v1010
      %v1051 = vunpack.c.l.b16 %v1011
      %v1052 = vunpack.c.l.b16 %v1012
      %v1053 = vunpack.c.l.b16 %v1013
      %v1054 = vunpack.c.l.b16 %v1014
      %v1055 = vunpack.c.l.b16 %v1015
      %v1056 = vunpack.c.l.b16 %v1016
      %v1057 = vunpack.c.l.b16 %v1017
      %v1058 = vunpack.c.l.b16 %v1018
      %v1059 = vunpack.c.l.b16 %v1019
      %v1060 = vunpack.c.l.b16 %v1020
      %v1061 = vpack.c.b16 %v1042, %v1041
      %v1062 = vpack.c.b16 %v1044, %v1043
      %v1063 = vpack.c.b16 %v1046, %v1045
      %v1064 = vpack.c.b16 %v1048, %v1047
      %v1065 = vpack.c.b16 %v1050, %v1049
      %v1066 = vpack.c.b16 %v1052, %v1051
      %v1067 = vpack.c.b16 %v1054, %v1053
      %v1068 = vpack.c.b16 %v1056, %v1055
      %v1069 = vpack.c.b16 %v1058, %v1057
      %v1070 = vpack.c.b16 %v1060, %v1059
      %1081 = vst [vmem:[#allocation4] sm:$0xff] %v1061
      %1082 = vst [vmem:[#allocation4 + $0x48] sm:$0xff] %v1062
      %1083 = vst [vmem:[#allocation4 + $0x90] sm:$0xff] %v1063
      %1084 = vst [vmem:[#allocation4 + $0xd8] sm:$0xff] %v1064
      %1085 = vst [vmem:[#allocation4 + $0x120] sm:$0xff] %v1065
      %1086 = vst [vmem:[#allocation4 + $0x168] sm:$0xff] %v1066
      %1087 = vst [vmem:[#allocation4 + $0x1b0] sm:$0xff] %v1067
      %1088 = vst [vmem:[#allocation4 + $0x1f8] sm:$0xff] %v1068
      %1089 = vst [vmem:[#allocation4 + $0x240] sm:$0xff] %v1069
      %1090 = vst [vmem:[#allocation4 + $0x288] sm:$0xff] %v1070
      %v1091 = vld [vmem:[#allocation2] sm:$0xf]
      %v1092 = vld [vmem:[#allocation2 + $0x4] sm:$0xf]
      %v1093 = vld [vmem:[#allocation2 + $0x8] sm:$0x1]
      %v1094 = vld [vmem:[#allocation2 + $0xc] sm:$0xf]
      %v1095 = vld [vmem:[#allocation2 + $0x10] sm:$0xf]
      %v1096 = vld [vmem:[#allocation2 + $0x14] sm:$0x1]
      %v1097 = vld [vmem:[#allocation2 + $0x18] sm:$0xf]
      %v1098 = vld [vmem:[#allocation2 + $0x1c] sm:$0xf]
      %v1099 = vld [vmem:[#allocation2 + $0x20] sm:$0x1]
      %v1100 = vld [vmem:[#allocation2 + $0x24] sm:$0xf]
      %v1101 = vld [vmem:[#allocation2 + $0x28] sm:$0xf]
      %v1102 = vld [vmem:[#allocation2 + $0x2c] sm:$0x1]
      %v1103 = vld [vmem:[#allocation2 + $0x30] sm:$0xf]
      %v1104 = vld [vmem:[#allocation2 + $0x34] sm:$0xf]
      %v1105 = vld [vmem:[#allocation2 + $0x38] sm:$0x1]
      %v1106 = vld [vmem:[#allocation2 + $0x3c] sm:$0xf]
      %v1107 = vld [vmem:[#allocation2 + $0x40] sm:$0xf]
      %v1108 = vld [vmem:[#allocation2 + $0x44] sm:$0x1]
      %v1109 = vld [vmem:[#allocation2 + $0x48] sm:$0xf]
      %v1110 = vld [vmem:[#allocation2 + $0x4c] sm:$0xf]
      %v1111 = vld [vmem:[#allocation2 + $0x50] sm:$0x1]
      %v1112 = vld [vmem:[#allocation2 + $0x54] sm:$0xf]
      %v1113 = vld [vmem:[#allocation2 + $0x58] sm:$0xf]
      %v1114 = vld [vmem:[#allocation2 + $0x5c] sm:$0x1]
      %v1115 = vld [vmem:[#allocation2 + $0x60] sm:$0xf]
      %v1116 = vld [vmem:[#allocation2 + $0x64] sm:$0xf]
      %v1117 = vld [vmem:[#allocation2 + $0x68] sm:$0x1]
      %v1118 = vld [vmem:[#allocation2 + $0x6c] sm:$0xf]
      %v1119 = vld [vmem:[#allocation2 + $0x70] sm:$0xf]
      %v1120 = vld [vmem:[#allocation2 + $0x74] sm:$0x1]
      %v1151 = vunpack.c.l.b16 %v1091
      %v1152 = vunpack.c.l.b16 %v1092
      %v1153 = vunpack.c.l.b16 %v1093
      %v1154 = vunpack.c.l.b16 %v1094
      %v1155 = vunpack.c.l.b16 %v1095
      %v1156 = vunpack.c.l.b16 %v1096
      %v1157 = vunpack.c.l.b16 %v1097
      %v1158 = vunpack.c.l.b16 %v1098
      %v1159 = vunpack.c.l.b16 %v1099
      %v1160 = vunpack.c.l.b16 %v1100
      %v1161 = vunpack.c.l.b16 %v1101
      %v1162 = vunpack.c.l.b16 %v1102
      %v1163 = vunpack.c.l.b16 %v1103
      %v1164 = vunpack.c.l.b16 %v1104
      %v1165 = vunpack.c.l.b16 %v1105
      %v1166 = vunpack.c.l.b16 %v1106
      %v1167 = vunpack.c.l.b16 %v1107
      %v1168 = vunpack.c.l.b16 %v1108
      %v1169 = vunpack.c.l.b16 %v1109
      %v1170 = vunpack.c.l.b16 %v1110
      %v1171 = vunpack.c.l.b16 %v1111
      %v1172 = vunpack.c.l.b16 %v1112
      %v1173 = vunpack.c.l.b16 %v1113
      %v1174 = vunpack.c.l.b16 %v1114
      %v1175 = vunpack.c.l.b16 %v1115
      %v1176 = vunpack.c.l.b16 %v1116
      %v1177 = vunpack.c.l.b16 %v1117
      %v1178 = vunpack.c.l.b16 %v1118
      %v1179 = vunpack.c.l.b16 %v1119
      %v1180 = vunpack.c.l.b16 %v1120
      %v1181 = vpack.c.b16 %v1152, %v1151
      %v1182 = vpack.c.b16 %v1153, %v1153
      %v1183 = vpack.c.b16 %v1155, %v1154
      %v1184 = vpack.c.b16 %v1156, %v1156
      %v1185 = vpack.c.b16 %v1158, %v1157
      %v1186 = vpack.c.b16 %v1159, %v1159
      %v1187 = vpack.c.b16 %v1161, %v1160
      %v1188 = vpack.c.b16 %v1162, %v1162
      %v1189 = vpack.c.b16 %v1164, %v1163
      %v1190 = vpack.c.b16 %v1165, %v1165
      %v1191 = vpack.c.b16 %v1167, %v1166
      %v1192 = vpack.c.b16 %v1168, %v1168
      %v1193 = vpack.c.b16 %v1170, %v1169
      %v1194 = vpack.c.b16 %v1171, %v1171
      %v1195 = vpack.c.b16 %v1173, %v1172
      %v1196 = vpack.c.b16 %v1174, %v1174
      %v1197 = vpack.c.b16 %v1176, %v1175
      %v1198 = vpack.c.b16 %v1177, %v1177
      %v1199 = vpack.c.b16 %v1179, %v1178
      %v1200 = vpack.c.b16 %v1180, %v1180
      %vm1201 = vsmask.f32 7424
      %v1203 = vshrl.u32 %v1181, 16
      %v1205 = vshll.u32 %v1181, 16
      %v1207 = vrot.slane %v1205, 1
      %v1208 = vor.u32 %v1203, %v1207
      %v1210 = vshll.u32 %v1182, 16
      %v1212 = vrot.slane %v1210, 1
      %v1213 = vsel %vm1201, %v1208, %v1212
      %v1215 = vshrl.u32 %v1183, 16
      %v1217 = vshll.u32 %v1183, 16
      %v1219 = vrot.slane %v1217, 1
      %v1220 = vor.u32 %v1215, %v1219
      %v1222 = vshll.u32 %v1184, 16
      %v1224 = vrot.slane %v1222, 1
      %v1225 = vsel %vm1201, %v1220, %v1224
      %v1227 = vshrl.u32 %v1185, 16
      %v1229 = vshll.u32 %v1185, 16
      %v1231 = vrot.slane %v1229, 1
      %v1232 = vor.u32 %v1227, %v1231
      %v1234 = vshll.u32 %v1186, 16
      %v1236 = vrot.slane %v1234, 1
      %v1237 = vsel %vm1201, %v1232, %v1236
      %v1239 = vshrl.u32 %v1187, 16
      %v1241 = vshll.u32 %v1187, 16
      %v1243 = vrot.slane %v1241, 1
      %v1244 = vor.u32 %v1239, %v1243
      %v1246 = vshll.u32 %v1188, 16
      %v1248 = vrot.slane %v1246, 1
      %v1249 = vsel %vm1201, %v1244, %v1248
      %v1251 = vshrl.u32 %v1189, 16
      %v1253 = vshll.u32 %v1189, 16
      %v1255 = vrot.slane %v1253, 1
      %v1256 = vor.u32 %v1251, %v1255
      %v1258 = vshll.u32 %v1190, 16
      %v1260 = vrot.slane %v1258, 1
      %v1261 = vsel %vm1201, %v1256, %v1260
      %v1263 = vshrl.u32 %v1191, 16
      %v1265 = vshll.u32 %v1191, 16
      %v1267 = vrot.slane %v1265, 1
      %v1268 = vor.u32 %v1263, %v1267
      %v1270 = vshll.u32 %v1192, 16
      %v1272 = vrot.slane %v1270, 1
      %v1273 = vsel %vm1201, %v1268, %v1272
      %v1275 = vshrl.u32 %v1193, 16
      %v1277 = vshll.u32 %v1193, 16
      %v1279 = vrot.slane %v1277, 1
      %v1280 = vor.u32 %v1275, %v1279
      %v1282 = vshll.u32 %v1194, 16
      %v1284 = vrot.slane %v1282, 1
      %v1285 = vsel %vm1201, %v1280, %v1284
      %v1287 = vshrl.u32 %v1195, 16
      %v1289 = vshll.u32 %v1195, 16
      %v1291 = vrot.slane %v1289, 1
      %v1292 = vor.u32 %v1287, %v1291
      %v1294 = vshll.u32 %v1196, 16
      %v1296 = vrot.slane %v1294, 1
      %v1297 = vsel %vm1201, %v1292, %v1296
      %v1299 = vshrl.u32 %v1197, 16
      %v1301 = vshll.u32 %v1197, 16
      %v1303 = vrot.slane %v1301, 1
      %v1304 = vor.u32 %v1299, %v1303
      %v1306 = vshll.u32 %v1198, 16
      %v1308 = vrot.slane %v1306, 1
      %v1309 = vsel %vm1201, %v1304, %v1308
      %v1311 = vshrl.u32 %v1199, 16
      %v1313 = vshll.u32 %v1199, 16
      %v1315 = vrot.slane %v1313, 1
      %v1316 = vor.u32 %v1311, %v1315
      %v1318 = vshll.u32 %v1200, 16
      %v1320 = vrot.slane %v1318, 1
      %v1321 = vsel %vm1201, %v1316, %v1320
      %1332 = vst [vmem:[#allocation4 + $0x8] sm:$0xff] %v1213
      %1333 = vst [vmem:[#allocation4 + $0x50] sm:$0xff] %v1225
      %1334 = vst [vmem:[#allocation4 + $0x98] sm:$0xff] %v1237
      %1335 = vst [vmem:[#allocation4 + $0xe0] sm:$0xff] %v1249
      %1336 = vst [vmem:[#allocation4 + $0x128] sm:$0xff] %v1261
      %1337 = vst [vmem:[#allocation4 + $0x170] sm:$0xff] %v1273
      %1338 = vst [vmem:[#allocation4 + $0x1b8] sm:$0xff] %v1285
      %1339 = vst [vmem:[#allocation4 + $0x200] sm:$0xff] %v1297
      %1340 = vst [vmem:[#allocation4 + $0x248] sm:$0xff] %v1309
      %1341 = vst [vmem:[#allocation4 + $0x290] sm:$0xff] %v1321
      %v1342 = vld [vmem:[#allocation2] sm:$0xe]
      %v1343 = vld [vmem:[#allocation2 + $0x4] sm:$0xf]
      %v1344 = vld [vmem:[#allocation2 + $0x8] sm:$0x1]
      %v1345 = vld [vmem:[#allocation2 + $0xc] sm:$0xe]
      %v1346 = vld [vmem:[#allocation2 + $0x10] sm:$0xf]
      %v1347 = vld [vmem:[#allocation2 + $0x14] sm:$0x1]
      %v1348 = vld [vmem:[#allocation2 + $0x18] sm:$0xe]
      %v1349 = vld [vmem:[#allocation2 + $0x1c] sm:$0xf]
      %v1350 = vld [vmem:[#allocation2 + $0x20] sm:$0x1]
      %v1351 = vld [vmem:[#allocation2 + $0x24] sm:$0xe]
      %v1352 = vld [vmem:[#allocation2 + $0x28] sm:$0xf]
      %v1353 = vld [vmem:[#allocation2 + $0x2c] sm:$0x1]
      %v1354 = vld [vmem:[#allocation2 + $0x30] sm:$0xe]
      %v1355 = vld [vmem:[#allocation2 + $0x34] sm:$0xf]
      %v1356 = vld [vmem:[#allocation2 + $0x38] sm:$0x1]
      %v1357 = vld [vmem:[#allocation2 + $0x3c] sm:$0xe]
      %v1358 = vld [vmem:[#allocation2 + $0x40] sm:$0xf]
      %v1359 = vld [vmem:[#allocation2 + $0x44] sm:$0x1]
      %v1360 = vld [vmem:[#allocation2 + $0x48] sm:$0xe]
      %v1361 = vld [vmem:[#allocation2 + $0x4c] sm:$0xf]
      %v1362 = vld [vmem:[#allocation2 + $0x50] sm:$0x1]
      %v1363 = vld [vmem:[#allocation2 + $0x54] sm:$0xe]
      %v1364 = vld [vmem:[#allocation2 + $0x58] sm:$0xf]
      %v1365 = vld [vmem:[#allocation2 + $0x5c] sm:$0x1]
      %v1366 = vld [vmem:[#allocation2 + $0x60] sm:$0xe]
      %v1367 = vld [vmem:[#allocation2 + $0x64] sm:$0xf]
      %v1368 = vld [vmem:[#allocation2 + $0x68] sm:$0x1]
      %v1369 = vld [vmem:[#allocation2 + $0x6c] sm:$0xe]
      %v1370 = vld [vmem:[#allocation2 + $0x70] sm:$0xf]
      %v1371 = vld [vmem:[#allocation2 + $0x74] sm:$0x1]
      %v1402 = vunpack.c.l.b16 %v1342
      %v1403 = vunpack.c.l.b16 %v1343
      %v1404 = vunpack.c.l.b16 %v1344
      %v1405 = vunpack.c.l.b16 %v1345
      %v1406 = vunpack.c.l.b16 %v1346
      %v1407 = vunpack.c.l.b16 %v1347
      %v1408 = vunpack.c.l.b16 %v1348
      %v1409 = vunpack.c.l.b16 %v1349
      %v1410 = vunpack.c.l.b16 %v1350
      %v1411 = vunpack.c.l.b16 %v1351
      %v1412 = vunpack.c.l.b16 %v1352
      %v1413 = vunpack.c.l.b16 %v1353
      %v1414 = vunpack.c.l.b16 %v1354
      %v1415 = vunpack.c.l.b16 %v1355
      %v1416 = vunpack.c.l.b16 %v1356
      %v1417 = vunpack.c.l.b16 %v1357
      %v1418 = vunpack.c.l.b16 %v1358
      %v1419 = vunpack.c.l.b16 %v1359
      %v1420 = vunpack.c.l.b16 %v1360
      %v1421 = vunpack.c.l.b16 %v1361
      %v1422 = vunpack.c.l.b16 %v1362
      %v1423 = vunpack.c.l.b16 %v1363
      %v1424 = vunpack.c.l.b16 %v1364
      %v1425 = vunpack.c.l.b16 %v1365
      %v1426 = vunpack.c.l.b16 %v1366
      %v1427 = vunpack.c.l.b16 %v1367
      %v1428 = vunpack.c.l.b16 %v1368
      %v1429 = vunpack.c.l.b16 %v1369
      %v1430 = vunpack.c.l.b16 %v1370
      %v1431 = vunpack.c.l.b16 %v1371
      %v1432 = vpack.c.b16 %v1403, %v1402
      %v1433 = vpack.c.b16 %v1404, %v1404
      %v1434 = vpack.c.b16 %v1406, %v1405
      %v1435 = vpack.c.b16 %v1407, %v1407
      %v1436 = vpack.c.b16 %v1409, %v1408
      %v1437 = vpack.c.b16 %v1410, %v1410
      %v1438 = vpack.c.b16 %v1412, %v1411
      %v1439 = vpack.c.b16 %v1413, %v1413
      %v1440 = vpack.c.b16 %v1415, %v1414
      %v1441 = vpack.c.b16 %v1416, %v1416
      %v1442 = vpack.c.b16 %v1418, %v1417
      %v1443 = vpack.c.b16 %v1419, %v1419
      %v1444 = vpack.c.b16 %v1421, %v1420
      %v1445 = vpack.c.b16 %v1422, %v1422
      %v1446 = vpack.c.b16 %v1424, %v1423
      %v1447 = vpack.c.b16 %v1425, %v1425
      %v1448 = vpack.c.b16 %v1427, %v1426
      %v1449 = vpack.c.b16 %v1428, %v1428
      %v1450 = vpack.c.b16 %v1430, %v1429
      %v1451 = vpack.c.b16 %v1431, %v1431
      %vm1452 = vcmask 1046528
      %v1453 = vrot.slane %v1432, 1
      %v1454 = vrot.slane %v1433, 1
      %v1455 = vsel %vm1452, %v1453, %v1454
      %v1456 = vrot.slane %v1434, 1
      %v1457 = vrot.slane %v1435, 1
      %v1458 = vsel %vm1452, %v1456, %v1457
      %v1459 = vrot.slane %v1436, 1
      %v1460 = vrot.slane %v1437, 1
      %v1461 = vsel %vm1452, %v1459, %v1460
      %v1462 = vrot.slane %v1438, 1
      %v1463 = vrot.slane %v1439, 1
      %v1464 = vsel %vm1452, %v1462, %v1463
      %v1465 = vrot.slane %v1440, 1
      %v1466 = vrot.slane %v1441, 1
      %v1467 = vsel %vm1452, %v1465, %v1466
      %v1468 = vrot.slane %v1442, 1
      %v1469 = vrot.slane %v1443, 1
      %v1470 = vsel %vm1452, %v1468, %v1469
      %v1471 = vrot.slane %v1444, 1
      %v1472 = vrot.slane %v1445, 1
      %v1473 = vsel %vm1452, %v1471, %v1472
      %v1474 = vrot.slane %v1446, 1
      %v1475 = vrot.slane %v1447, 1
      %v1476 = vsel %vm1452, %v1474, %v1475
      %v1477 = vrot.slane %v1448, 1
      %v1478 = vrot.slane %v1449, 1
      %v1479 = vsel %vm1452, %v1477, %v1478
      %v1480 = vrot.slane %v1450, 1
      %v1481 = vrot.slane %v1451, 1
      %v1482 = vsel %vm1452, %v1480, %v1481
      %1493 = vst [vmem:[#allocation4 + $0x10] sm:$0xff] %v1455
      %1494 = vst [vmem:[#allocation4 + $0x58] sm:$0xff] %v1458
      %1495 = vst [vmem:[#allocation4 + $0xa0] sm:$0xff] %v1461
      %1496 = vst [vmem:[#allocation4 + $0xe8] sm:$0xff] %v1464
      %1497 = vst [vmem:[#allocation4 + $0x130] sm:$0xff] %v1467
      %1498 = vst [vmem:[#allocation4 + $0x178] sm:$0xff] %v1470
      %1499 = vst [vmem:[#allocation4 + $0x1c0] sm:$0xff] %v1473
      %1500 = vst [vmem:[#allocation4 + $0x208] sm:$0xff] %v1476
      %1501 = vst [vmem:[#allocation4 + $0x250] sm:$0xff] %v1479
      %1502 = vst [vmem:[#allocation4 + $0x298] sm:$0xff] %v1482
      %s1503 = scalar_lea.vmem [#allocation2], 12
      %v1504 = vld [vmem:[%s1503] sm:$0xf]
      %v1505 = vld [vmem:[%s1503 + $0x4] sm:$0xf]
      %v1506 = vld [vmem:[%s1503 + $0xc] sm:$0xf]
      %v1507 = vld [vmem:[%s1503 + $0x10] sm:$0xf]
      %v1508 = vld [vmem:[%s1503 + $0x18] sm:$0xf]
      %v1509 = vld [vmem:[%s1503 + $0x1c] sm:$0xf]
      %v1510 = vld [vmem:[%s1503 + $0x24] sm:$0xf]
      %v1511 = vld [vmem:[%s1503 + $0x28] sm:$0xf]
      %v1512 = vld [vmem:[%s1503 + $0x30] sm:$0xf]
      %v1513 = vld [vmem:[%s1503 + $0x34] sm:$0xf]
      %v1514 = vld [vmem:[%s1503 + $0x3c] sm:$0xf]
      %v1515 = vld [vmem:[%s1503 + $0x40] sm:$0xf]
      %v1516 = vld [vmem:[%s1503 + $0x48] sm:$0xf]
      %v1517 = vld [vmem:[%s1503 + $0x4c] sm:$0xf]
      %v1518 = vld [vmem:[%s1503 + $0x54] sm:$0xf]
      %v1519 = vld [vmem:[%s1503 + $0x58] sm:$0xf]
      %v1520 = vld [vmem:[%s1503 + $0x60] sm:$0xf]
      %v1521 = vld [vmem:[%s1503 + $0x64] sm:$0xf]
      %v1522 = vld [vmem:[%s1503 + $0x6c] sm:$0xf]
      %v1523 = vld [vmem:[%s1503 + $0x70] sm:$0xf]
      %v1544 = vunpack.c.l.b16 %v1504
      %v1545 = vunpack.c.l.b16 %v1505
      %v1546 = vunpack.c.l.b16 %v1506
      %v1547 = vunpack.c.l.b16 %v1507
      %v1548 = vunpack.c.l.b16 %v1508
      %v1549 = vunpack.c.l.b16 %v1509
      %v1550 = vunpack.c.l.b16 %v1510
      %v1551 = vunpack.c.l.b16 %v1511
      %v1552 = vunpack.c.l.b16 %v1512
      %v1553 = vunpack.c.l.b16 %v1513
      %v1554 = vunpack.c.l.b16 %v1514
      %v1555 = vunpack.c.l.b16 %v1515
      %v1556 = vunpack.c.l.b16 %v1516
      %v1557 = vunpack.c.l.b16 %v1517
      %v1558 = vunpack.c.l.b16 %v1518
      %v1559 = vunpack.c.l.b16 %v1519
      %v1560 = vunpack.c.l.b16 %v1520
      %v1561 = vunpack.c.l.b16 %v1521
      %v1562 = vunpack.c.l.b16 %v1522
      %v1563 = vunpack.c.l.b16 %v1523
      %v1564 = vpack.c.b16 %v1545, %v1544
      %v1565 = vpack.c.b16 %v1547, %v1546
      %v1566 = vpack.c.b16 %v1549, %v1548
      %v1567 = vpack.c.b16 %v1551, %v1550
      %v1568 = vpack.c.b16 %v1553, %v1552
      %v1569 = vpack.c.b16 %v1555, %v1554
      %v1570 = vpack.c.b16 %v1557, %v1556
      %v1571 = vpack.c.b16 %v1559, %v1558
      %v1572 = vpack.c.b16 %v1561, %v1560
      %v1573 = vpack.c.b16 %v1563, %v1562
      %1584 = vst [vmem:[#allocation4 + $0x18] sm:$0xff] %v1564
      %1585 = vst [vmem:[#allocation4 + $0x60] sm:$0xff] %v1565
      %1586 = vst [vmem:[#allocation4 + $0xa8] sm:$0xff] %v1566
      %1587 = vst [vmem:[#allocation4 + $0xf0] sm:$0xff] %v1567
      %1588 = vst [vmem:[#allocation4 + $0x138] sm:$0xff] %v1568
      %1589 = vst [vmem:[#allocation4 + $0x180] sm:$0xff] %v1569
      %1590 = vst [vmem:[#allocation4 + $0x1c8] sm:$0xff] %v1570
      %1591 = vst [vmem:[#allocation4 + $0x210] sm:$0xff] %v1571
      %1592 = vst [vmem:[#allocation4 + $0x258] sm:$0xff] %v1572
      %1593 = vst [vmem:[#allocation4 + $0x2a0] sm:$0xff] %v1573
      %v1594 = vld [vmem:[%s1503] sm:$0xf]
      %v1595 = vld [vmem:[%s1503 + $0x4] sm:$0xf]
      %v1596 = vld [vmem:[%s1503 + $0x8] sm:$0x1]
      %v1597 = vld [vmem:[%s1503 + $0xc] sm:$0xf]
      %v1598 = vld [vmem:[%s1503 + $0x10] sm:$0xf]
      %v1599 = vld [vmem:[%s1503 + $0x14] sm:$0x1]
      %v1600 = vld [vmem:[%s1503 + $0x18] sm:$0xf]
      %v1601 = vld [vmem:[%s1503 + $0x1c] sm:$0xf]
      %v1602 = vld [vmem:[%s1503 + $0x20] sm:$0x1]
      %v1603 = vld [vmem:[%s1503 + $0x24] sm:$0xf]
      %v1604 = vld [vmem:[%s1503 + $0x28] sm:$0xf]
      %v1605 = vld [vmem:[%s1503 + $0x2c] sm:$0x1]
      %v1606 = vld [vmem:[%s1503 + $0x30] sm:$0xf]
      %v1607 = vld [vmem:[%s1503 + $0x34] sm:$0xf]
      %v1608 = vld [vmem:[%s1503 + $0x38] sm:$0x1]
      %v1609 = vld [vmem:[%s1503 + $0x3c] sm:$0xf]
      %v1610 = vld [vmem:[%s1503 + $0x40] sm:$0xf]
      %v1611 = vld [vmem:[%s1503 + $0x44] sm:$0x1]
      %v1612 = vld [vmem:[%s1503 + $0x48] sm:$0xf]
      %v1613 = vld [vmem:[%s1503 + $0x4c] sm:$0xf]
      %v1614 = vld [vmem:[%s1503 + $0x50] sm:$0x1]
      %v1615 = vld [vmem:[%s1503 + $0x54] sm:$0xf]
      %v1616 = vld [vmem:[%s1503 + $0x58] sm:$0xf]
      %v1617 = vld [vmem:[%s1503 + $0x5c] sm:$0x1]
      %v1618 = vld [vmem:[%s1503 + $0x60] sm:$0xf]
      %v1619 = vld [vmem:[%s1503 + $0x64] sm:$0xf]
      %v1620 = vld [vmem:[%s1503 + $0x68] sm:$0x1]
      %v1621 = vld [vmem:[%s1503 + $0x6c] sm:$0xf]
      %v1622 = vld [vmem:[%s1503 + $0x70] sm:$0xf]
      %v1623 = vld [vmem:[%s1503 + $0x74] sm:$0x1]
      %v1654 = vunpack.c.l.b16 %v1594
      %v1655 = vunpack.c.l.b16 %v1595
      %v1656 = vunpack.c.l.b16 %v1596
      %v1657 = vunpack.c.l.b16 %v1597
      %v1658 = vunpack.c.l.b16 %v1598
      %v1659 = vunpack.c.l.b16 %v1599
      %v1660 = vunpack.c.l.b16 %v1600
      %v1661 = vunpack.c.l.b16 %v1601
      %v1662 = vunpack.c.l.b16 %v1602
      %v1663 = vunpack.c.l.b16 %v1603
      %v1664 = vunpack.c.l.b16 %v1604
      %v1665 = vunpack.c.l.b16 %v1605
      %v1666 = vunpack.c.l.b16 %v1606
      %v1667 = vunpack.c.l.b16 %v1607
      %v1668 = vunpack.c.l.b16 %v1608
      %v1669 = vunpack.c.l.b16 %v1609
      %v1670 = vunpack.c.l.b16 %v1610
      %v1671 = vunpack.c.l.b16 %v1611
      %v1672 = vunpack.c.l.b16 %v1612
      %v1673 = vunpack.c.l.b16 %v1613
      %v1674 = vunpack.c.l.b16 %v1614
      %v1675 = vunpack.c.l.b16 %v1615
      %v1676 = vunpack.c.l.b16 %v1616
      %v1677 = vunpack.c.l.b16 %v1617
      %v1678 = vunpack.c.l.b16 %v1618
      %v1679 = vunpack.c.l.b16 %v1619
      %v1680 = vunpack.c.l.b16 %v1620
      %v1681 = vunpack.c.l.b16 %v1621
      %v1682 = vunpack.c.l.b16 %v1622
      %v1683 = vunpack.c.l.b16 %v1623
      %v1684 = vpack.c.b16 %v1655, %v1654
      %v1685 = vpack.c.b16 %v1656, %v1656
      %v1686 = vpack.c.b16 %v1658, %v1657
      %v1687 = vpack.c.b16 %v1659, %v1659
      %v1688 = vpack.c.b16 %v1661, %v1660
      %v1689 = vpack.c.b16 %v1662, %v1662
      %v1690 = vpack.c.b16 %v1664, %v1663
      %v1691 = vpack.c.b16 %v1665, %v1665
      %v1692 = vpack.c.b16 %v1667, %v1666
      %v1693 = vpack.c.b16 %v1668, %v1668
      %v1694 = vpack.c.b16 %v1670, %v1669
      %v1695 = vpack.c.b16 %v1671, %v1671
      %v1696 = vpack.c.b16 %v1673, %v1672
      %v1697 = vpack.c.b16 %v1674, %v1674
      %v1698 = vpack.c.b16 %v1676, %v1675
      %v1699 = vpack.c.b16 %v1677, %v1677
      %v1700 = vpack.c.b16 %v1679, %v1678
      %v1701 = vpack.c.b16 %v1680, %v1680
      %v1702 = vpack.c.b16 %v1682, %v1681
      %v1703 = vpack.c.b16 %v1683, %v1683
      %v1705 = vshrl.u32 %v1684, 16
      %v1707 = vshll.u32 %v1684, 16
      %v1709 = vrot.slane %v1707, 1
      %v1710 = vor.u32 %v1705, %v1709
      %v1712 = vshll.u32 %v1685, 16
      %v1714 = vrot.slane %v1712, 1
      %v1715 = vsel %vm1201, %v1710, %v1714
      %v1717 = vshrl.u32 %v1686, 16
      %v1719 = vshll.u32 %v1686, 16
      %v1721 = vrot.slane %v1719, 1
      %v1722 = vor.u32 %v1717, %v1721
      %v1724 = vshll.u32 %v1687, 16
      %v1726 = vrot.slane %v1724, 1
      %v1727 = vsel %vm1201, %v1722, %v1726
      %v1729 = vshrl.u32 %v1688, 16
      %v1731 = vshll.u32 %v1688, 16
      %v1733 = vrot.slane %v1731, 1
      %v1734 = vor.u32 %v1729, %v1733
      %v1736 = vshll.u32 %v1689, 16
      %v1738 = vrot.slane %v1736, 1
      %v1739 = vsel %vm1201, %v1734, %v1738
      %v1741 = vshrl.u32 %v1690, 16
      %v1743 = vshll.u32 %v1690, 16
      %v1745 = vrot.slane %v1743, 1
      %v1746 = vor.u32 %v1741, %v1745
      %v1748 = vshll.u32 %v1691, 16
      %v1750 = vrot.slane %v1748, 1
      %v1751 = vsel %vm1201, %v1746, %v1750
      %v1753 = vshrl.u32 %v1692, 16
      %v1755 = vshll.u32 %v1692, 16
      %v1757 = vrot.slane %v1755, 1
      %v1758 = vor.u32 %v1753, %v1757
      %v1760 = vshll.u32 %v1693, 16
      %v1762 = vrot.slane %v1760, 1
      %v1763 = vsel %vm1201, %v1758, %v1762
      %v1765 = vshrl.u32 %v1694, 16
      %v1767 = vshll.u32 %v1694, 16
      %v1769 = vrot.slane %v1767, 1
      %v1770 = vor.u32 %v1765, %v1769
      %v1772 = vshll.u32 %v1695, 16
      %v1774 = vrot.slane %v1772, 1
      %v1775 = vsel %vm1201, %v1770, %v1774
      %v1777 = vshrl.u32 %v1696, 16
      %v1779 = vshll.u32 %v1696, 16
      %v1781 = vrot.slane %v1779, 1
      %v1782 = vor.u32 %v1777, %v1781
      %v1784 = vshll.u32 %v1697, 16
      %v1786 = vrot.slane %v1784, 1
      %v1787 = vsel %vm1201, %v1782, %v1786
      %v1789 = vshrl.u32 %v1698, 16
      %v1791 = vshll.u32 %v1698, 16
      %v1793 = vrot.slane %v1791, 1
      %v1794 = vor.u32 %v1789, %v1793
      %v1796 = vshll.u32 %v1699, 16
      %v1798 = vrot.slane %v1796, 1
      %v1799 = vsel %vm1201, %v1794, %v1798
      %v1801 = vshrl.u32 %v1700, 16
      %v1803 = vshll.u32 %v1700, 16
      %v1805 = vrot.slane %v1803, 1
      %v1806 = vor.u32 %v1801, %v1805
      %v1808 = vshll.u32 %v1701, 16
      %v1810 = vrot.slane %v1808, 1
      %v1811 = vsel %vm1201, %v1806, %v1810
      %v1813 = vshrl.u32 %v1702, 16
      %v1815 = vshll.u32 %v1702, 16
      %v1817 = vrot.slane %v1815, 1
      %v1818 = vor.u32 %v1813, %v1817
      %v1820 = vshll.u32 %v1703, 16
      %v1822 = vrot.slane %v1820, 1
      %v1823 = vsel %vm1201, %v1818, %v1822
      %1834 = vst [vmem:[#allocation4 + $0x20] sm:$0xff] %v1715
      %1835 = vst [vmem:[#allocation4 + $0x68] sm:$0xff] %v1727
      %1836 = vst [vmem:[#allocation4 + $0xb0] sm:$0xff] %v1739
      %1837 = vst [vmem:[#allocation4 + $0xf8] sm:$0xff] %v1751
      %1838 = vst [vmem:[#allocation4 + $0x140] sm:$0xff] %v1763
      %1839 = vst [vmem:[#allocation4 + $0x188] sm:$0xff] %v1775
      %1840 = vst [vmem:[#allocation4 + $0x1d0] sm:$0xff] %v1787
      %1841 = vst [vmem:[#allocation4 + $0x218] sm:$0xff] %v1799
      %1842 = vst [vmem:[#allocation4 + $0x260] sm:$0xff] %v1811
      %1843 = vst [vmem:[#allocation4 + $0x2a8] sm:$0xff] %v1823
      %v1844 = vld [vmem:[%s1503] sm:$0xe]
      %v1845 = vld [vmem:[%s1503 + $0x4] sm:$0xf]
      %v1846 = vld [vmem:[%s1503 + $0x8] sm:$0x1]
      %v1847 = vld [vmem:[%s1503 + $0xc] sm:$0xe]
      %v1848 = vld [vmem:[%s1503 + $0x10] sm:$0xf]
      %v1849 = vld [vmem:[%s1503 + $0x14] sm:$0x1]
      %v1850 = vld [vmem:[%s1503 + $0x18] sm:$0xe]
      %v1851 = vld [vmem:[%s1503 + $0x1c] sm:$0xf]
      %v1852 = vld [vmem:[%s1503 + $0x20] sm:$0x1]
      %v1853 = vld [vmem:[%s1503 + $0x24] sm:$0xe]
      %v1854 = vld [vmem:[%s1503 + $0x28] sm:$0xf]
      %v1855 = vld [vmem:[%s1503 + $0x2c] sm:$0x1]
      %v1856 = vld [vmem:[%s1503 + $0x30] sm:$0xe]
      %v1857 = vld [vmem:[%s1503 + $0x34] sm:$0xf]
      %v1858 = vld [vmem:[%s1503 + $0x38] sm:$0x1]
      %v1859 = vld [vmem:[%s1503 + $0x3c] sm:$0xe]
      %v1860 = vld [vmem:[%s1503 + $0x40] sm:$0xf]
      %v1861 = vld [vmem:[%s1503 + $0x44] sm:$0x1]
      %v1862 = vld [vmem:[%s1503 + $0x48] sm:$0xe]
      %v1863 = vld [vmem:[%s1503 + $0x4c] sm:$0xf]
      %v1864 = vld [vmem:[%s1503 + $0x50] sm:$0x1]
      %v1865 = vld [vmem:[%s1503 + $0x54] sm:$0xe]
      %v1866 = vld [vmem:[%s1503 + $0x58] sm:$0xf]
      %v1867 = vld [vmem:[%s1503 + $0x5c] sm:$0x1]
      %v1868 = vld [vmem:[%s1503 + $0x60] sm:$0xe]
      %v1869 = vld [vmem:[%s1503 + $0x64] sm:$0xf]
      %v1870 = vld [vmem:[%s1503 + $0x68] sm:$0x1]
      %v1871 = vld [vmem:[%s1503 + $0x6c] sm:$0xe]
      %v1872 = vld [vmem:[%s1503 + $0x70] sm:$0xf]
      %v1873 = vld [vmem:[%s1503 + $0x74] sm:$0x1]
      %v1904 = vunpack.c.l.b16 %v1844
      %v1905 = vunpack.c.l.b16 %v1845
      %v1906 = vunpack.c.l.b16 %v1846
      %v1907 = vunpack.c.l.b16 %v1847
      %v1908 = vunpack.c.l.b16 %v1848
      %v1909 = vunpack.c.l.b16 %v1849
      %v1910 = vunpack.c.l.b16 %v1850
      %v1911 = vunpack.c.l.b16 %v1851
      %v1912 = vunpack.c.l.b16 %v1852
      %v1913 = vunpack.c.l.b16 %v1853
      %v1914 = vunpack.c.l.b16 %v1854
      %v1915 = vunpack.c.l.b16 %v1855
      %v1916 = vunpack.c.l.b16 %v1856
      %v1917 = vunpack.c.l.b16 %v1857
      %v1918 = vunpack.c.l.b16 %v1858
      %v1919 = vunpack.c.l.b16 %v1859
      %v1920 = vunpack.c.l.b16 %v1860
      %v1921 = vunpack.c.l.b16 %v1861
      %v1922 = vunpack.c.l.b16 %v1862
      %v1923 = vunpack.c.l.b16 %v1863
      %v1924 = vunpack.c.l.b16 %v1864
      %v1925 = vunpack.c.l.b16 %v1865
      %v1926 = vunpack.c.l.b16 %v1866
      %v1927 = vunpack.c.l.b16 %v1867
      %v1928 = vunpack.c.l.b16 %v1868
      %v1929 = vunpack.c.l.b16 %v1869
      %v1930 = vunpack.c.l.b16 %v1870
      %v1931 = vunpack.c.l.b16 %v1871
      %v1932 = vunpack.c.l.b16 %v1872
      %v1933 = vunpack.c.l.b16 %v1873
      %v1934 = vpack.c.b16 %v1905, %v1904
      %v1935 = vpack.c.b16 %v1906, %v1906
      %v1936 = vpack.c.b16 %v1908, %v1907
      %v1937 = vpack.c.b16 %v1909, %v1909
      %v1938 = vpack.c.b16 %v1911, %v1910
      %v1939 = vpack.c.b16 %v1912, %v1912
      %v1940 = vpack.c.b16 %v1914, %v1913
      %v1941 = vpack.c.b16 %v1915, %v1915
      %v1942 = vpack.c.b16 %v1917, %v1916
      %v1943 = vpack.c.b16 %v1918, %v1918
      %v1944 = vpack.c.b16 %v1920, %v1919
      %v1945 = vpack.c.b16 %v1921, %v1921
      %v1946 = vpack.c.b16 %v1923, %v1922
      %v1947 = vpack.c.b16 %v1924, %v1924
      %v1948 = vpack.c.b16 %v1926, %v1925
      %v1949 = vpack.c.b16 %v1927, %v1927
      %v1950 = vpack.c.b16 %v1929, %v1928
      %v1951 = vpack.c.b16 %v1930, %v1930
      %v1952 = vpack.c.b16 %v1932, %v1931
      %v1953 = vpack.c.b16 %v1933, %v1933
      %v1954 = vrot.slane %v1934, 1
      %v1955 = vrot.slane %v1935, 1
      %v1956 = vsel %vm1452, %v1954, %v1955
      %v1957 = vrot.slane %v1936, 1
      %v1958 = vrot.slane %v1937, 1
      %v1959 = vsel %vm1452, %v1957, %v1958
      %v1960 = vrot.slane %v1938, 1
      %v1961 = vrot.slane %v1939, 1
      %v1962 = vsel %vm1452, %v1960, %v1961
      %v1963 = vrot.slane %v1940, 1
      %v1964 = vrot.slane %v1941, 1
      %v1965 = vsel %vm1452, %v1963, %v1964
      %v1966 = vrot.slane %v1942, 1
      %v1967 = vrot.slane %v1943, 1
      %v1968 = vsel %vm1452, %v1966, %v1967
      %v1969 = vrot.slane %v1944, 1
      %v1970 = vrot.slane %v1945, 1
      %v1971 = vsel %vm1452, %v1969, %v1970
      %v1972 = vrot.slane %v1946, 1
      %v1973 = vrot.slane %v1947, 1
      %v1974 = vsel %vm1452, %v1972, %v1973
      %v1975 = vrot.slane %v1948, 1
      %v1976 = vrot.slane %v1949, 1
      %v1977 = vsel %vm1452, %v1975, %v1976
      %v1978 = vrot.slane %v1950, 1
      %v1979 = vrot.slane %v1951, 1
      %v1980 = vsel %vm1452, %v1978, %v1979
      %v1981 = vrot.slane %v1952, 1
      %v1982 = vrot.slane %v1953, 1
      %v1983 = vsel %vm1452, %v1981, %v1982
      %1994 = vst [vmem:[#allocation4 + $0x28] sm:$0xff] %v1956
      %1995 = vst [vmem:[#allocation4 + $0x70] sm:$0xff] %v1959
      %1996 = vst [vmem:[#allocation4 + $0xb8] sm:$0xff] %v1962
      %1997 = vst [vmem:[#allocation4 + $0x100] sm:$0xff] %v1965
      %1998 = vst [vmem:[#allocation4 + $0x148] sm:$0xff] %v1968
      %1999 = vst [vmem:[#allocation4 + $0x190] sm:$0xff] %v1971
      %2000 = vst [vmem:[#allocation4 + $0x1d8] sm:$0xff] %v1974
      %2001 = vst [vmem:[#allocation4 + $0x220] sm:$0xff] %v1977
      %2002 = vst [vmem:[#allocation4 + $0x268] sm:$0xff] %v1980
      %2003 = vst [vmem:[#allocation4 + $0x2b0] sm:$0xff] %v1983
      %s2004 = scalar_lea.vmem [#allocation2], 24
      %v2005 = vld [vmem:[%s2004] sm:$0xf]
      %v2006 = vld [vmem:[%s2004 + $0x4] sm:$0xf]
      %v2007 = vld [vmem:[%s2004 + $0xc] sm:$0xf]
      %v2008 = vld [vmem:[%s2004 + $0x10] sm:$0xf]
      %v2009 = vld [vmem:[%s2004 + $0x18] sm:$0xf]
      %v2010 = vld [vmem:[%s2004 + $0x1c] sm:$0xf]
      %v2011 = vld [vmem:[%s2004 + $0x24] sm:$0xf]
      %v2012 = vld [vmem:[%s2004 + $0x28] sm:$0xf]
      %v2013 = vld [vmem:[%s2004 + $0x30] sm:$0xf]
      %v2014 = vld [vmem:[%s2004 + $0x34] sm:$0xf]
      %v2015 = vld [vmem:[%s2004 + $0x3c] sm:$0xf]
      %v2016 = vld [vmem:[%s2004 + $0x40] sm:$0xf]
      %v2017 = vld [vmem:[%s2004 + $0x48] sm:$0xf]
      %v2018 = vld [vmem:[%s2004 + $0x4c] sm:$0xf]
      %v2019 = vld [vmem:[%s2004 + $0x54] sm:$0xf]
      %v2020 = vld [vmem:[%s2004 + $0x58] sm:$0xf]
      %v2021 = vld [vmem:[%s2004 + $0x60] sm:$0xf]
      %v2022 = vld [vmem:[%s2004 + $0x64] sm:$0xf]
      %v2023 = vld [vmem:[%s2004 + $0x6c] sm:$0xf]
      %v2024 = vld [vmem:[%s2004 + $0x70] sm:$0xf]
      %v2045 = vunpack.c.l.b16 %v2005
      %v2046 = vunpack.c.l.b16 %v2006
      %v2047 = vunpack.c.l.b16 %v2007
      %v2048 = vunpack.c.l.b16 %v2008
      %v2049 = vunpack.c.l.b16 %v2009
      %v2050 = vunpack.c.l.b16 %v2010
      %v2051 = vunpack.c.l.b16 %v2011
      %v2052 = vunpack.c.l.b16 %v2012
      %v2053 = vunpack.c.l.b16 %v2013
      %v2054 = vunpack.c.l.b16 %v2014
      %v2055 = vunpack.c.l.b16 %v2015
      %v2056 = vunpack.c.l.b16 %v2016
      %v2057 = vunpack.c.l.b16 %v2017
      %v2058 = vunpack.c.l.b16 %v2018
      %v2059 = vunpack.c.l.b16 %v2019
      %v2060 = vunpack.c.l.b16 %v2020
      %v2061 = vunpack.c.l.b16 %v2021
      %v2062 = vunpack.c.l.b16 %v2022
      %v2063 = vunpack.c.l.b16 %v2023
      %v2064 = vunpack.c.l.b16 %v2024
      %v2065 = vpack.c.b16 %v2046, %v2045
      %v2066 = vpack.c.b16 %v2048, %v2047
      %v2067 = vpack.c.b16 %v2050, %v2049
      %v2068 = vpack.c.b16 %v2052, %v2051
      %v2069 = vpack.c.b16 %v2054, %v2053
      %v2070 = vpack.c.b16 %v2056, %v2055
      %v2071 = vpack.c.b16 %v2058, %v2057
      %v2072 = vpack.c.b16 %v2060, %v2059
      %v2073 = vpack.c.b16 %v2062, %v2061
      %v2074 = vpack.c.b16 %v2064, %v2063
      %2085 = vst [vmem:[#allocation4 + $0x30] sm:$0xff] %v2065
      %2086 = vst [vmem:[#allocation4 + $0x78] sm:$0xff] %v2066
      %2087 = vst [vmem:[#allocation4 + $0xc0] sm:$0xff] %v2067
      %2088 = vst [vmem:[#allocation4 + $0x108] sm:$0xff] %v2068
      %2089 = vst [vmem:[#allocation4 + $0x150] sm:$0xff] %v2069
      %2090 = vst [vmem:[#allocation4 + $0x198] sm:$0xff] %v2070
      %2091 = vst [vmem:[#allocation4 + $0x1e0] sm:$0xff] %v2071
      %2092 = vst [vmem:[#allocation4 + $0x228] sm:$0xff] %v2072
      %2093 = vst [vmem:[#allocation4 + $0x270] sm:$0xff] %v2073
      %2094 = vst [vmem:[#allocation4 + $0x2b8] sm:$0xff] %v2074
      %v2095 = vld [vmem:[%s2004] sm:$0xf]
      %v2096 = vld [vmem:[%s2004 + $0x4] sm:$0xf]
      %v2097 = vld [vmem:[%s2004 + $0x8] sm:$0x1]
      %v2098 = vld [vmem:[%s2004 + $0xc] sm:$0xf]
      %v2099 = vld [vmem:[%s2004 + $0x10] sm:$0xf]
      %v2100 = vld [vmem:[%s2004 + $0x14] sm:$0x1]
      %v2101 = vld [vmem:[%s2004 + $0x18] sm:$0xf]
      %v2102 = vld [vmem:[%s2004 + $0x1c] sm:$0xf]
      %v2103 = vld [vmem:[%s2004 + $0x20] sm:$0x1]
      %v2104 = vld [vmem:[%s2004 + $0x24] sm:$0xf]
      %v2105 = vld [vmem:[%s2004 + $0x28] sm:$0xf]
      %v2106 = vld [vmem:[%s2004 + $0x2c] sm:$0x1]
      %v2107 = vld [vmem:[%s2004 + $0x30] sm:$0xf]
      %v2108 = vld [vmem:[%s2004 + $0x34] sm:$0xf]
      %v2109 = vld [vmem:[%s2004 + $0x38] sm:$0x1]
      %v2110 = vld [vmem:[%s2004 + $0x3c] sm:$0xf]
      %v2111 = vld [vmem:[%s2004 + $0x40] sm:$0xf]
      %v2112 = vld [vmem:[%s2004 + $0x44] sm:$0x1]
      %v2113 = vld [vmem:[%s2004 + $0x48] sm:$0xf]
      %v2114 = vld [vmem:[%s2004 + $0x4c] sm:$0xf]
      %v2115 = vld [vmem:[%s2004 + $0x50] sm:$0x1]
      %v2116 = vld [vmem:[%s2004 + $0x54] sm:$0xf]
      %v2117 = vld [vmem:[%s2004 + $0x58] sm:$0xf]
      %v2118 = vld [vmem:[%s2004 + $0x5c] sm:$0x1]
      %v2119 = vld [vmem:[%s2004 + $0x60] sm:$0xf]
      %v2120 = vld [vmem:[%s2004 + $0x64] sm:$0xf]
      %v2121 = vld [vmem:[%s2004 + $0x68] sm:$0x1]
      %v2122 = vld [vmem:[%s2004 + $0x6c] sm:$0xf]
      %v2123 = vld [vmem:[%s2004 + $0x70] sm:$0xf]
      %v2124 = vld [vmem:[%s2004 + $0x74] sm:$0x1]
      %v2155 = vunpack.c.l.b16 %v2095
      %v2156 = vunpack.c.l.b16 %v2096
      %v2157 = vunpack.c.l.b16 %v2097
      %v2158 = vunpack.c.l.b16 %v2098
      %v2159 = vunpack.c.l.b16 %v2099
      %v2160 = vunpack.c.l.b16 %v2100
      %v2161 = vunpack.c.l.b16 %v2101
      %v2162 = vunpack.c.l.b16 %v2102
      %v2163 = vunpack.c.l.b16 %v2103
      %v2164 = vunpack.c.l.b16 %v2104
      %v2165 = vunpack.c.l.b16 %v2105
      %v2166 = vunpack.c.l.b16 %v2106
      %v2167 = vunpack.c.l.b16 %v2107
      %v2168 = vunpack.c.l.b16 %v2108
      %v2169 = vunpack.c.l.b16 %v2109
      %v2170 = vunpack.c.l.b16 %v2110
      %v2171 = vunpack.c.l.b16 %v2111
      %v2172 = vunpack.c.l.b16 %v2112
      %v2173 = vunpack.c.l.b16 %v2113
      %v2174 = vunpack.c.l.b16 %v2114
      %v2175 = vunpack.c.l.b16 %v2115
      %v2176 = vunpack.c.l.b16 %v2116
      %v2177 = vunpack.c.l.b16 %v2117
      %v2178 = vunpack.c.l.b16 %v2118
      %v2179 = vunpack.c.l.b16 %v2119
      %v2180 = vunpack.c.l.b16 %v2120
      %v2181 = vunpack.c.l.b16 %v2121
      %v2182 = vunpack.c.l.b16 %v2122
      %v2183 = vunpack.c.l.b16 %v2123
      %v2184 = vunpack.c.l.b16 %v2124
      %v2185 = vpack.c.b16 %v2156, %v2155
      %v2186 = vpack.c.b16 %v2157, %v2157
      %v2187 = vpack.c.b16 %v2159, %v2158
      %v2188 = vpack.c.b16 %v2160, %v2160
      %v2189 = vpack.c.b16 %v2162, %v2161
      %v2190 = vpack.c.b16 %v2163, %v2163
      %v2191 = vpack.c.b16 %v2165, %v2164
      %v2192 = vpack.c.b16 %v2166, %v2166
      %v2193 = vpack.c.b16 %v2168, %v2167
      %v2194 = vpack.c.b16 %v2169, %v2169
      %v2195 = vpack.c.b16 %v2171, %v2170
      %v2196 = vpack.c.b16 %v2172, %v2172
      %v2197 = vpack.c.b16 %v2174, %v2173
      %v2198 = vpack.c.b16 %v2175, %v2175
      %v2199 = vpack.c.b16 %v2177, %v2176
      %v2200 = vpack.c.b16 %v2178, %v2178
      %v2201 = vpack.c.b16 %v2180, %v2179
      %v2202 = vpack.c.b16 %v2181, %v2181
      %v2203 = vpack.c.b16 %v2183, %v2182
      %v2204 = vpack.c.b16 %v2184, %v2184
      %v2206 = vshrl.u32 %v2185, 16
      %v2208 = vshll.u32 %v2185, 16
      %v2210 = vrot.slane %v2208, 1
      %v2211 = vor.u32 %v2206, %v2210
      %v2213 = vshll.u32 %v2186, 16
      %v2215 = vrot.slane %v2213, 1
      %v2216 = vsel %vm1201, %v2211, %v2215
      %v2218 = vshrl.u32 %v2187, 16
      %v2220 = vshll.u32 %v2187, 16
      %v2222 = vrot.slane %v2220, 1
      %v2223 = vor.u32 %v2218, %v2222
      %v2225 = vshll.u32 %v2188, 16
      %v2227 = vrot.slane %v2225, 1
      %v2228 = vsel %vm1201, %v2223, %v2227
      %v2230 = vshrl.u32 %v2189, 16
      %v2232 = vshll.u32 %v2189, 16
      %v2234 = vrot.slane %v2232, 1
      %v2235 = vor.u32 %v2230, %v2234
      %v2237 = vshll.u32 %v2190, 16
      %v2239 = vrot.slane %v2237, 1
      %v2240 = vsel %vm1201, %v2235, %v2239
      %v2242 = vshrl.u32 %v2191, 16
      %v2244 = vshll.u32 %v2191, 16
      %v2246 = vrot.slane %v2244, 1
      %v2247 = vor.u32 %v2242, %v2246
      %v2249 = vshll.u32 %v2192, 16
      %v2251 = vrot.slane %v2249, 1
      %v2252 = vsel %vm1201, %v2247, %v2251
      %v2254 = vshrl.u32 %v2193, 16
      %v2256 = vshll.u32 %v2193, 16
      %v2258 = vrot.slane %v2256, 1
      %v2259 = vor.u32 %v2254, %v2258
      %v2261 = vshll.u32 %v2194, 16
      %v2263 = vrot.slane %v2261, 1
      %v2264 = vsel %vm1201, %v2259, %v2263
      %v2266 = vshrl.u32 %v2195, 16
      %v2268 = vshll.u32 %v2195, 16
      %v2270 = vrot.slane %v2268, 1
      %v2271 = vor.u32 %v2266, %v2270
      %v2273 = vshll.u32 %v2196, 16
      %v2275 = vrot.slane %v2273, 1
      %v2276 = vsel %vm1201, %v2271, %v2275
      %v2278 = vshrl.u32 %v2197, 16
      %v2280 = vshll.u32 %v2197, 16
      %v2282 = vrot.slane %v2280, 1
      %v2283 = vor.u32 %v2278, %v2282
      %v2285 = vshll.u32 %v2198, 16
      %v2287 = vrot.slane %v2285, 1
      %v2288 = vsel %vm1201, %v2283, %v2287
      %v2290 = vshrl.u32 %v2199, 16
      %v2292 = vshll.u32 %v2199, 16
      %v2294 = vrot.slane %v2292, 1
      %v2295 = vor.u32 %v2290, %v2294
      %v2297 = vshll.u32 %v2200, 16
      %v2299 = vrot.slane %v2297, 1
      %v2300 = vsel %vm1201, %v2295, %v2299
      %v2302 = vshrl.u32 %v2201, 16
      %v2304 = vshll.u32 %v2201, 16
      %v2306 = vrot.slane %v2304, 1
      %v2307 = vor.u32 %v2302, %v2306
      %v2309 = vshll.u32 %v2202, 16
      %v2311 = vrot.slane %v2309, 1
      %v2312 = vsel %vm1201, %v2307, %v2311
      %v2314 = vshrl.u32 %v2203, 16
      %v2316 = vshll.u32 %v2203, 16
      %v2318 = vrot.slane %v2316, 1
      %v2319 = vor.u32 %v2314, %v2318
      %v2321 = vshll.u32 %v2204, 16
      %v2323 = vrot.slane %v2321, 1
      %v2324 = vsel %vm1201, %v2319, %v2323
      %2335 = vst [vmem:[#allocation4 + $0x38] sm:$0xff] %v2216
      %2336 = vst [vmem:[#allocation4 + $0x80] sm:$0xff] %v2228
      %2337 = vst [vmem:[#allocation4 + $0xc8] sm:$0xff] %v2240
      %2338 = vst [vmem:[#allocation4 + $0x110] sm:$0xff] %v2252
      %2339 = vst [vmem:[#allocation4 + $0x158] sm:$0xff] %v2264
      %2340 = vst [vmem:[#allocation4 + $0x1a0] sm:$0xff] %v2276
      %2341 = vst [vmem:[#allocation4 + $0x1e8] sm:$0xff] %v2288
      %2342 = vst [vmem:[#allocation4 + $0x230] sm:$0xff] %v2300
      %2343 = vst [vmem:[#allocation4 + $0x278] sm:$0xff] %v2312
      %2344 = vst [vmem:[#allocation4 + $0x2c0] sm:$0xff] %v2324
      %v2345 = vld [vmem:[%s2004] sm:$0xe]
      %v2346 = vld [vmem:[%s2004 + $0x4] sm:$0xf]
      %v2347 = vld [vmem:[%s2004 + $0x8] sm:$0x1]
      %v2348 = vld [vmem:[%s2004 + $0xc] sm:$0xe]
      %v2349 = vld [vmem:[%s2004 + $0x10] sm:$0xf]
      %v2350 = vld [vmem:[%s2004 + $0x14] sm:$0x1]
      %v2351 = vld [vmem:[%s2004 + $0x18] sm:$0xe]
      %v2352 = vld [vmem:[%s2004 + $0x1c] sm:$0xf]
      %v2353 = vld [vmem:[%s2004 + $0x20] sm:$0x1]
      %v2354 = vld [vmem:[%s2004 + $0x24] sm:$0xe]
      %v2355 = vld [vmem:[%s2004 + $0x28] sm:$0xf]
      %v2356 = vld [vmem:[%s2004 + $0x2c] sm:$0x1]
      %v2357 = vld [vmem:[%s2004 + $0x30] sm:$0xe]
      %v2358 = vld [vmem:[%s2004 + $0x34] sm:$0xf]
      %v2359 = vld [vmem:[%s2004 + $0x38] sm:$0x1]
      %v2360 = vld [vmem:[%s2004 + $0x3c] sm:$0xe]
      %v2361 = vld [vmem:[%s2004 + $0x40] sm:$0xf]
      %v2362 = vld [vmem:[%s2004 + $0x44] sm:$0x1]
      %v2363 = vld [vmem:[%s2004 + $0x48] sm:$0xe]
      %v2364 = vld [vmem:[%s2004 + $0x4c] sm:$0xf]
      %v2365 = vld [vmem:[%s2004 + $0x50] sm:$0x1]
      %v2366 = vld [vmem:[%s2004 + $0x54] sm:$0xe]
      %v2367 = vld [vmem:[%s2004 + $0x58] sm:$0xf]
      %v2368 = vld [vmem:[%s2004 + $0x5c] sm:$0x1]
      %v2369 = vld [vmem:[%s2004 + $0x60] sm:$0xe]
      %v2370 = vld [vmem:[%s2004 + $0x64] sm:$0xf]
      %v2371 = vld [vmem:[%s2004 + $0x68] sm:$0x1]
      %v2372 = vld [vmem:[%s2004 + $0x6c] sm:$0xe]
      %v2373 = vld [vmem:[%s2004 + $0x70] sm:$0xf]
      %v2374 = vld [vmem:[%s2004 + $0x74] sm:$0x1]
      %v2405 = vunpack.c.l.b16 %v2345
      %v2406 = vunpack.c.l.b16 %v2346
      %v2407 = vunpack.c.l.b16 %v2347
      %v2408 = vunpack.c.l.b16 %v2348
      %v2409 = vunpack.c.l.b16 %v2349
      %v2410 = vunpack.c.l.b16 %v2350
      %v2411 = vunpack.c.l.b16 %v2351
      %v2412 = vunpack.c.l.b16 %v2352
      %v2413 = vunpack.c.l.b16 %v2353
      %v2414 = vunpack.c.l.b16 %v2354
      %v2415 = vunpack.c.l.b16 %v2355
      %v2416 = vunpack.c.l.b16 %v2356
      %v2417 = vunpack.c.l.b16 %v2357
      %v2418 = vunpack.c.l.b16 %v2358
      %v2419 = vunpack.c.l.b16 %v2359
      %v2420 = vunpack.c.l.b16 %v2360
      %v2421 = vunpack.c.l.b16 %v2361
      %v2422 = vunpack.c.l.b16 %v2362
      %v2423 = vunpack.c.l.b16 %v2363
      %v2424 = vunpack.c.l.b16 %v2364
      %v2425 = vunpack.c.l.b16 %v2365
      %v2426 = vunpack.c.l.b16 %v2366
      %v2427 = vunpack.c.l.b16 %v2367
      %v2428 = vunpack.c.l.b16 %v2368
      %v2429 = vunpack.c.l.b16 %v2369
      %v2430 = vunpack.c.l.b16 %v2370
      %v2431 = vunpack.c.l.b16 %v2371
      %v2432 = vunpack.c.l.b16 %v2372
      %v2433 = vunpack.c.l.b16 %v2373
      %v2434 = vunpack.c.l.b16 %v2374
      %v2435 = vpack.c.b16 %v2406, %v2405
      %v2436 = vpack.c.b16 %v2407, %v2407
      %v2437 = vpack.c.b16 %v2409, %v2408
      %v2438 = vpack.c.b16 %v2410, %v2410
      %v2439 = vpack.c.b16 %v2412, %v2411
      %v2440 = vpack.c.b16 %v2413, %v2413
      %v2441 = vpack.c.b16 %v2415, %v2414
      %v2442 = vpack.c.b16 %v2416, %v2416
      %v2443 = vpack.c.b16 %v2418, %v2417
      %v2444 = vpack.c.b16 %v2419, %v2419
      %v2445 = vpack.c.b16 %v2421, %v2420
      %v2446 = vpack.c.b16 %v2422, %v2422
      %v2447 = vpack.c.b16 %v2424, %v2423
      %v2448 = vpack.c.b16 %v2425, %v2425
      %v2449 = vpack.c.b16 %v2427, %v2426
      %v2450 = vpack.c.b16 %v2428, %v2428
      %v2451 = vpack.c.b16 %v2430, %v2429
      %v2452 = vpack.c.b16 %v2431, %v2431
      %v2453 = vpack.c.b16 %v2433, %v2432
      %v2454 = vpack.c.b16 %v2434, %v2434
      %v2455 = vrot.slane %v2435, 1
      %v2456 = vrot.slane %v2436, 1
      %v2457 = vsel %vm1452, %v2455, %v2456
      %v2458 = vrot.slane %v2437, 1
      %v2459 = vrot.slane %v2438, 1
      %v2460 = vsel %vm1452, %v2458, %v2459
      %v2461 = vrot.slane %v2439, 1
      %v2462 = vrot.slane %v2440, 1
      %v2463 = vsel %vm1452, %v2461, %v2462
      %v2464 = vrot.slane %v2441, 1
      %v2465 = vrot.slane %v2442, 1
      %v2466 = vsel %vm1452, %v2464, %v2465
      %v2467 = vrot.slane %v2443, 1
      %v2468 = vrot.slane %v2444, 1
      %v2469 = vsel %vm1452, %v2467, %v2468
      %v2470 = vrot.slane %v2445, 1
      %v2471 = vrot.slane %v2446, 1
      %v2472 = vsel %vm1452, %v2470, %v2471
      %v2473 = vrot.slane %v2447, 1
      %v2474 = vrot.slane %v2448, 1
      %v2475 = vsel %vm1452, %v2473, %v2474
      %v2476 = vrot.slane %v2449, 1
      %v2477 = vrot.slane %v2450, 1
      %v2478 = vsel %vm1452, %v2476, %v2477
      %v2479 = vrot.slane %v2451, 1
      %v2480 = vrot.slane %v2452, 1
      %v2481 = vsel %vm1452, %v2479, %v2480
      %v2482 = vrot.slane %v2453, 1
      %v2483 = vrot.slane %v2454, 1
      %v2484 = vsel %vm1452, %v2482, %v2483
      %2495 = vst [vmem:[#allocation4 + $0x40] sm:$0xff] %v2457
      %2496 = vst [vmem:[#allocation4 + $0x88] sm:$0xff] %v2460
      %2497 = vst [vmem:[#allocation4 + $0xd0] sm:$0xff] %v2463
      %2498 = vst [vmem:[#allocation4 + $0x118] sm:$0xff] %v2466
      %2499 = vst [vmem:[#allocation4 + $0x160] sm:$0xff] %v2469
      %2500 = vst [vmem:[#allocation4 + $0x1a8] sm:$0xff] %v2472
      %2501 = vst [vmem:[#allocation4 + $0x1f0] sm:$0xff] %v2475
      %2502 = vst [vmem:[#allocation4 + $0x238] sm:$0xff] %v2478
      %2503 = vst [vmem:[#allocation4 + $0x280] sm:$0xff] %v2481
      %2504 = vst [vmem:[#allocation4 + $0x2c8] sm:$0xff] %v2484
      %v2505 = vld [vmem:[#allocation4] sm:$0xff]
      %v2506 = vld [vmem:[#allocation4 + $0x8] sm:$0xff]
      %v2507 = vld [vmem:[#allocation4 + $0x10] sm:$0xff]
      %v2508 = vld [vmem:[#allocation4 + $0x18] sm:$0xff]
      %v2509 = vld [vmem:[#allocation4 + $0x20] sm:$0xff]
      %v2510 = vld [vmem:[#allocation4 + $0x28] sm:$0xff]
      %v2511 = vld [vmem:[#allocation4 + $0x30] sm:$0xff]
      %v2512 = vld [vmem:[#allocation4 + $0x38] sm:$0xff]
      %v2513 = vld [vmem:[#allocation4 + $0x40] sm:$0xff]
      %v2514 = vld [vmem:[#allocation4 + $0x48] sm:$0xff]
      %v2515 = vld [vmem:[#allocation4 + $0x50] sm:$0xff]
      %v2516 = vld [vmem:[#allocation4 + $0x58] sm:$0xff]
      %v2517 = vld [vmem:[#allocation4 + $0x60] sm:$0xff]
      %v2518 = vld [vmem:[#allocation4 + $0x68] sm:$0xff]
      %v2519 = vld [vmem:[#allocation4 + $0x70] sm:$0xff]
      %v2520 = vld [vmem:[#allocation4 + $0x78] sm:$0xff]
      %v2521 = vld [vmem:[#allocation4 + $0x80] sm:$0xff]
      %v2522 = vld [vmem:[#allocation4 + $0x88] sm:$0xff]
      %v2523 = vld [vmem:[#allocation4 + $0x90] sm:$0xff]
      %v2524 = vld [vmem:[#allocation4 + $0x98] sm:$0xff]
      %v2525 = vld [vmem:[#allocation4 + $0xa0] sm:$0xff]
      %v2526 = vld [vmem:[#allocation4 + $0xa8] sm:$0xff]
      %v2527 = vld [vmem:[#allocation4 + $0xb0] sm:$0xff]
      %v2528 = vld [vmem:[#allocation4 + $0xb8] sm:$0xff]
      %v2529 = vld [vmem:[#allocation4 + $0xc0] sm:$0xff]
      %v2530 = vld [vmem:[#allocation4 + $0xc8] sm:$0xff]
      %v2531 = vld [vmem:[#allocation4 + $0xd0] sm:$0xff]
      %v2532 = vld [vmem:[#allocation4 + $0xd8] sm:$0xff]
      %v2533 = vld [vmem:[#allocation4 + $0xe0] sm:$0xff]
      %v2534 = vld [vmem:[#allocation4 + $0xe8] sm:$0xff]
      %v2535 = vld [vmem:[#allocation4 + $0xf0] sm:$0xff]
      %v2536 = vld [vmem:[#allocation4 + $0xf8] sm:$0xff]
      %v2537 = vld [vmem:[#allocation4 + $0x100] sm:$0xff]
      %v2538 = vld [vmem:[#allocation4 + $0x108] sm:$0xff]
      %v2539 = vld [vmem:[#allocation4 + $0x110] sm:$0xff]
      %v2540 = vld [vmem:[#allocation4 + $0x118] sm:$0xff]
      %v2541 = vld [vmem:[#allocation4 + $0x120] sm:$0xff]
      %v2542 = vld [vmem:[#allocation4 + $0x128] sm:$0xff]
      %v2543 = vld [vmem:[#allocation4 + $0x130] sm:$0xff]
      %v2544 = vld [vmem:[#allocation4 + $0x138] sm:$0xff]
      %v2545 = vld [vmem:[#allocation4 + $0x140] sm:$0xff]
      %v2546 = vld [vmem:[#allocation4 + $0x148] sm:$0xff]
      %v2547 = vld [vmem:[#allocation4 + $0x150] sm:$0xff]
      %v2548 = vld [vmem:[#allocation4 + $0x158] sm:$0xff]
      %v2549 = vld [vmem:[#allocation4 + $0x160] sm:$0xff]
      %v2550 = vld [vmem:[#allocation4 + $0x168] sm:$0xff]
      %v2551 = vld [vmem:[#allocation4 + $0x170] sm:$0xff]
      %v2552 = vld [vmem:[#allocation4 + $0x178] sm:$0xff]
      %v2553 = vld [vmem:[#allocation4 + $0x180] sm:$0xff]
      %v2554 = vld [vmem:[#allocation4 + $0x188] sm:$0xff]
      %v2555 = vld [vmem:[#allocation4 + $0x190] sm:$0xff]
      %v2556 = vld [vmem:[#allocation4 + $0x198] sm:$0xff]
      %v2557 = vld [vmem:[#allocation4 + $0x1a0] sm:$0xff]
      %v2558 = vld [vmem:[#allocation4 + $0x1a8] sm:$0xff]
      %v2559 = vld [vmem:[#allocation4 + $0x1b0] sm:$0xff]
      %v2560 = vld [vmem:[#allocation4 + $0x1b8] sm:$0xff]
      %v2561 = vld [vmem:[#allocation4 + $0x1c0] sm:$0xff]
      %v2562 = vld [vmem:[#allocation4 + $0x1c8] sm:$0xff]
      %v2563 = vld [vmem:[#allocation4 + $0x1d0] sm:$0xff]
      %v2564 = vld [vmem:[#allocation4 + $0x1d8] sm:$0xff]
      %v2565 = vld [vmem:[#allocation4 + $0x1e0] sm:$0xff]
      %v2566 = vld [vmem:[#allocation4 + $0x1e8] sm:$0xff]
      %v2567 = vld [vmem:[#allocation4 + $0x1f0] sm:$0xff]
      %v2568 = vld [vmem:[#allocation4 + $0x1f8] sm:$0xff]
      %v2569 = vld [vmem:[#allocation4 + $0x200] sm:$0xff]
      %v2570 = vld [vmem:[#allocation4 + $0x208] sm:$0xff]
      %v2571 = vld [vmem:[#allocation4 + $0x210] sm:$0xff]
      %v2572 = vld [vmem:[#allocation4 + $0x218] sm:$0xff]
      %v2573 = vld [vmem:[#allocation4 + $0x220] sm:$0xff]
      %v2574 = vld [vmem:[#allocation4 + $0x228] sm:$0xff]
      %v2575 = vld [vmem:[#allocation4 + $0x230] sm:$0xff]
      %v2576 = vld [vmem:[#allocation4 + $0x238] sm:$0xff]
      %v2577 = vld [vmem:[#allocation4 + $0x240] sm:$0xff]
      %v2578 = vld [vmem:[#allocation4 + $0x248] sm:$0xff]
      %v2579 = vld [vmem:[#allocation4 + $0x250] sm:$0xff]
      %v2580 = vld [vmem:[#allocation4 + $0x258] sm:$0xff]
      %v2581 = vld [vmem:[#allocation4 + $0x260] sm:$0xff]
      %v2582 = vld [vmem:[#allocation4 + $0x268] sm:$0xff]
      %v2583 = vld [vmem:[#allocation4 + $0x270] sm:$0xff]
      %v2584 = vld [vmem:[#allocation4 + $0x278] sm:$0xff]
      %v2585 = vld [vmem:[#allocation4 + $0x280] sm:$0xff]
      %v2586 = vld [vmem:[#allocation4 + $0x288] sm:$0xff]
      %v2587 = vld [vmem:[#allocation4 + $0x290] sm:$0xff]
      %v2588 = vld [vmem:[#allocation4 + $0x298] sm:$0xff]
      %v2589 = vld [vmem:[#allocation4 + $0x2a0] sm:$0xff]
      %v2590 = vld [vmem:[#allocation4 + $0x2a8] sm:$0xff]
      %v2591 = vld [vmem:[#allocation4 + $0x2b0] sm:$0xff]
      %v2592 = vld [vmem:[#allocation4 + $0x2b8] sm:$0xff]
      %v2593 = vld [vmem:[#allocation4 + $0x2c0] sm:$0xff]
      %v2594 = vld [vmem:[#allocation4 + $0x2c8] sm:$0xff]
      %v2595 = vld [vmem:[%s3] sm:$0xf]
      %v2596 = vld [vmem:[%s3 + $0x4] sm:$0xf]
      %v2597 = vld [vmem:[%s3 + $0x8] sm:$0xf]
      %v2598 = vld [vmem:[%s3 + $0xc] sm:$0xf]
      %v2599 = vld [vmem:[%s3 + $0x10] sm:$0xf]
      %v2600 = vld [vmem:[%s3 + $0x14] sm:$0xf]
      %v2601 = vld [vmem:[%s3 + $0x18] sm:$0xf]
      %v2602 = vld [vmem:[%s3 + $0x1c] sm:$0xf]
      %v2603 = vld [vmem:[%s3 + $0x20] sm:$0xf]
      %v2604 = vld [vmem:[%s3 + $0x24] sm:$0xf]
      %v2605 = vld [vmem:[%s3 + $0x28] sm:$0xf]
      %v2606 = vld [vmem:[%s3 + $0x2c] sm:$0xf]
      %v2607 = vld [vmem:[%s3 + $0x30] sm:$0xf]
      %v2608 = vld [vmem:[%s3 + $0x34] sm:$0xf]
      %v2609 = vld [vmem:[%s3 + $0x38] sm:$0xf]
      %v2610 = vld [vmem:[%s3 + $0x3c] sm:$0xf]
      %v2611 = vld [vmem:[%s3 + $0x40] sm:$0xf]
      %v2612 = vld [vmem:[%s3 + $0x44] sm:$0xf]
      %v2613 = vld [vmem:[%s3 + $0x48] sm:$0xf]
      %v2614 = vld [vmem:[%s3 + $0x4c] sm:$0xf]
      %v2615 = vld [vmem:[%s3 + $0x50] sm:$0xf]
      %v2616 = vld [vmem:[%s3 + $0x54] sm:$0xf]
      %v2617 = vld [vmem:[%s3 + $0x58] sm:$0xf]
      %v2618 = vld [vmem:[%s3 + $0x5c] sm:$0xf]
      %v2619 = vld [vmem:[%s3 + $0x60] sm:$0xf]
      %v2620 = vld [vmem:[%s3 + $0x64] sm:$0xf]
      %v2621 = vld [vmem:[%s3 + $0x68] sm:$0xf]
      %v2622 = vld [vmem:[%s3 + $0x6c] sm:$0xf]
      %v2623 = vld [vmem:[%s3 + $0x70] sm:$0xf]
      %v2624 = vld [vmem:[%s3 + $0x74] sm:$0xf]
      %v2625 = vld [vmem:[%s3 + $0x78] sm:$0xf]
      %v2626 = vld [vmem:[%s3 + $0x7c] sm:$0xf]
      %v2627 = vld [vmem:[%s3 + $0x80] sm:$0xf]
      %v2628 = vld [vmem:[%s3 + $0x84] sm:$0xf]
      %v2629 = vld [vmem:[%s3 + $0x88] sm:$0xf]
      %v2630 = vld [vmem:[%s3 + $0x8c] sm:$0xf]
      %v2631 = vld [vmem:[%s3 + $0x90] sm:$0xf]
      %v2632 = vld [vmem:[%s3 + $0x94] sm:$0xf]
      %v2633 = vld [vmem:[%s3 + $0x98] sm:$0xf]
      %v2634 = vld [vmem:[%s3 + $0x9c] sm:$0xf]
      %v2635 = vld [vmem:[%s3 + $0xa0] sm:$0xf]
      %v2636 = vld [vmem:[%s3 + $0xa4] sm:$0xf]
      %v2637 = vld [vmem:[%s3 + $0xa8] sm:$0xf]
      %v2638 = vld [vmem:[%s3 + $0xac] sm:$0xf]
      %v2639 = vld [vmem:[%s3 + $0xb0] sm:$0xf]
      %v2640 = vld [vmem:[%s3 + $0xb4] sm:$0xf]
      %v2641 = vld [vmem:[%s3 + $0xb8] sm:$0xf]
      %v2642 = vld [vmem:[%s3 + $0xbc] sm:$0xf]
      %v2643 = vld [vmem:[%s3 + $0xc0] sm:$0xf]
      %v2644 = vld [vmem:[%s3 + $0xc4] sm:$0xf]
      %v2645 = vld [vmem:[%s3 + $0xc8] sm:$0xf]
      %v2646 = vld [vmem:[%s3 + $0xcc] sm:$0xf]
      %v2647 = vld [vmem:[%s3 + $0xd0] sm:$0xf]
      %v2648 = vld [vmem:[%s3 + $0xd4] sm:$0xf]
      %v2649 = vld [vmem:[%s3 + $0xd8] sm:$0xf]
      %v2650 = vld [vmem:[%s3 + $0xdc] sm:$0xf]
      %v2651 = vld [vmem:[%s3 + $0xe0] sm:$0xf]
      %v2652 = vld [vmem:[%s3 + $0xe4] sm:$0xf]
      %v2653 = vld [vmem:[%s3 + $0xe8] sm:$0xf]
      %v2654 = vld [vmem:[%s3 + $0xec] sm:$0xf]
      %v2655 = vld [vmem:[%s3 + $0xf0] sm:$0xf]
      %v2656 = vld [vmem:[%s3 + $0xf4] sm:$0xf]
      %v2657 = vld [vmem:[%s3 + $0xf8] sm:$0xf]
      %v2658 = vld [vmem:[%s3 + $0xfc] sm:$0xf]
      %v2659 = vld [vmem:[%s3 + $0x100] sm:$0xf]
      %v2660 = vld [vmem:[%s3 + $0x104] sm:$0xf]
      %v2661 = vld [vmem:[%s3 + $0x108] sm:$0xf]
      %v2662 = vld [vmem:[%s3 + $0x10c] sm:$0xf]
      %v2663 = vld [vmem:[%s3 + $0x110] sm:$0xf]
      %v2664 = vld [vmem:[%s3 + $0x114] sm:$0xf]
      %v2665 = vld [vmem:[%s3 + $0x118] sm:$0xf]
      %v2666 = vld [vmem:[%s3 + $0x11c] sm:$0xf]
      %v2667 = vld [vmem:[%s3 + $0x120] sm:$0xf]
      %v2668 = vld [vmem:[%s3 + $0x124] sm:$0xf]
      %v2669 = vld [vmem:[%s3 + $0x128] sm:$0xf]
      %v2670 = vld [vmem:[%s3 + $0x12c] sm:$0xf]
      %v2671 = vld [vmem:[%s3 + $0x130] sm:$0xf]
      %v2672 = vld [vmem:[%s3 + $0x134] sm:$0xf]
      %v2673 = vld [vmem:[%s3 + $0x138] sm:$0xf]
      %v2674 = vld [vmem:[%s3 + $0x13c] sm:$0xf]
      %v2675 = vld [vmem:[%s3 + $0x140] sm:$0xf]
      %v2676 = vld [vmem:[%s3 + $0x144] sm:$0xf]
      %v2677 = vld [vmem:[%s3 + $0x148] sm:$0xf]
      %v2678 = vld [vmem:[%s3 + $0x14c] sm:$0xf]
      %v2679 = vld [vmem:[%s3 + $0x150] sm:$0xf]
      %v2680 = vld [vmem:[%s3 + $0x154] sm:$0xf]
      %v2681 = vld [vmem:[%s3 + $0x158] sm:$0xf]
      %v2682 = vld [vmem:[%s3 + $0x15c] sm:$0xf]
      %v2683 = vld [vmem:[%s3 + $0x160] sm:$0xf]
      %v2684 = vld [vmem:[%s3 + $0x164] sm:$0xf]
      %v2685 = vld [vmem:[%s3 + $0x168] sm:$0xf]
      %v2686 = vld [vmem:[%s3 + $0x16c] sm:$0xf]
      %v2687 = vld [vmem:[%s3 + $0x170] sm:$0xf]
      %v2688 = vld [vmem:[%s3 + $0x174] sm:$0xf]
      %v2689 = vld [vmem:[%s3 + $0x178] sm:$0xf]
      %v2690 = vld [vmem:[%s3 + $0x17c] sm:$0xf]
      %v2691 = vld [vmem:[%s3 + $0x180] sm:$0xf]
      %v2692 = vld [vmem:[%s3 + $0x184] sm:$0xf]
      %v2693 = vld [vmem:[%s3 + $0x188] sm:$0xf]
      %v2694 = vld [vmem:[%s3 + $0x18c] sm:$0xf]
      %v2695 = vld [vmem:[%s3 + $0x190] sm:$0xf]
      %v2696 = vld [vmem:[%s3 + $0x194] sm:$0xf]
      %v2697 = vld [vmem:[%s3 + $0x198] sm:$0xf]
      %v2698 = vld [vmem:[%s3 + $0x19c] sm:$0xf]
      %v2699 = vld [vmem:[%s3 + $0x1a0] sm:$0xf]
      %v2700 = vld [vmem:[%s3 + $0x1a4] sm:$0xf]
      %v2701 = vld [vmem:[%s3 + $0x1a8] sm:$0xf]
      %v2702 = vld [vmem:[%s3 + $0x1ac] sm:$0xf]
      %v2703 = vld [vmem:[%s3 + $0x1b0] sm:$0xf]
      %v2704 = vld [vmem:[%s3 + $0x1b4] sm:$0xf]
      %v2705 = vld [vmem:[%s3 + $0x1b8] sm:$0xf]
      %v2706 = vld [vmem:[%s3 + $0x1bc] sm:$0xf]
      %v2707 = vld [vmem:[%s3 + $0x1c0] sm:$0xf]
      %v2708 = vld [vmem:[%s3 + $0x1c4] sm:$0xf]
      %v2709 = vld [vmem:[%s3 + $0x1c8] sm:$0xf]
      %v2710 = vld [vmem:[%s3 + $0x1cc] sm:$0xf]
      %v2711 = vld [vmem:[%s3 + $0x1d0] sm:$0xf]
      %v2712 = vld [vmem:[%s3 + $0x1d4] sm:$0xf]
      %v2713 = vld [vmem:[%s3 + $0x1d8] sm:$0xf]
      %v2714 = vld [vmem:[%s3 + $0x1dc] sm:$0xf]
      %v2715 = vld [vmem:[%s3 + $0x1e0] sm:$0xf]
      %v2716 = vld [vmem:[%s3 + $0x1e4] sm:$0xf]
      %v2717 = vld [vmem:[%s3 + $0x1e8] sm:$0xf]
      %v2718 = vld [vmem:[%s3 + $0x1ec] sm:$0xf]
      %v2719 = vld [vmem:[%s3 + $0x1f0] sm:$0xf]
      %v2720 = vld [vmem:[%s3 + $0x1f4] sm:$0xf]
      %v2721 = vld [vmem:[%s3 + $0x1f8] sm:$0xf]
      %v2722 = vld [vmem:[%s3 + $0x1fc] sm:$0xf]
      %v2723 = vld [vmem:[%s3 + $0x200] sm:$0xf]
      %v2724 = vld [vmem:[%s3 + $0x204] sm:$0xf]
      %v2725 = vld [vmem:[%s3 + $0x208] sm:$0xf]
      %v2726 = vld [vmem:[%s3 + $0x20c] sm:$0xf]
      %v2727 = vld [vmem:[%s3 + $0x210] sm:$0xf]
      %v2728 = vld [vmem:[%s3 + $0x214] sm:$0xf]
      %v2729 = vld [vmem:[%s3 + $0x218] sm:$0xf]
      %v2730 = vld [vmem:[%s3 + $0x21c] sm:$0xf]
      %v2731 = vld [vmem:[%s3 + $0x220] sm:$0xf]
      %v2732 = vld [vmem:[%s3 + $0x224] sm:$0xf]
      %v2733 = vld [vmem:[%s3 + $0x228] sm:$0xf]
      %v2734 = vld [vmem:[%s3 + $0x22c] sm:$0xf]
      %v2735 = vld [vmem:[%s3 + $0x230] sm:$0xf]
      %v2736 = vld [vmem:[%s3 + $0x234] sm:$0xf]
      %v2737 = vld [vmem:[%s3 + $0x238] sm:$0xf]
      %v2738 = vld [vmem:[%s3 + $0x23c] sm:$0xf]
      %v2739 = vld [vmem:[%s4] sm:$0x1]
      %v2741 = vlaneseq
      %v2742 = vshrl.u32 %v2741, 7
      %v2743 = vsub.s32 0, %v2742
      %v2744 = vrot.slane %v2739, %v2743
      %v2890 = vunpack.c.l.b16 %v2595
      %v2891 = vunpack.c.l.b16 %v2596
      %v2892 = vunpack.c.l.b16 %v2597
      %v2893 = vunpack.c.l.b16 %v2598
      %v2894 = vunpack.c.l.b16 %v2599
      %v2895 = vunpack.c.l.b16 %v2600
      %v2896 = vunpack.c.l.b16 %v2601
      %v2897 = vunpack.c.l.b16 %v2602
      %v2898 = vunpack.c.l.b16 %v2603
      %v2899 = vunpack.c.l.b16 %v2604
      %v2900 = vunpack.c.l.b16 %v2605
      %v2901 = vunpack.c.l.b16 %v2606
      %v2902 = vunpack.c.l.b16 %v2607
      %v2903 = vunpack.c.l.b16 %v2608
      %v2904 = vunpack.c.l.b16 %v2609
      %v2905 = vunpack.c.l.b16 %v2610
      %v2906 = vunpack.c.l.b16 %v2611
      %v2907 = vunpack.c.l.b16 %v2612
      %v2908 = vunpack.c.l.b16 %v2613
      %v2909 = vunpack.c.l.b16 %v2614
      %v2910 = vunpack.c.l.b16 %v2615
      %v2911 = vunpack.c.l.b16 %v2616
      %v2912 = vunpack.c.l.b16 %v2617
      %v2913 = vunpack.c.l.b16 %v2618
      %v2914 = vunpack.c.l.b16 %v2619
      %v2915 = vunpack.c.l.b16 %v2620
      %v2916 = vunpack.c.l.b16 %v2621
      %v2917 = vunpack.c.l.b16 %v2622
      %v2918 = vunpack.c.l.b16 %v2623
      %v2919 = vunpack.c.l.b16 %v2624
      %v2920 = vunpack.c.l.b16 %v2625
      %v2921 = vunpack.c.l.b16 %v2626
      %v2922 = vunpack.c.l.b16 %v2627
      %v2923 = vunpack.c.l.b16 %v2628
      %v2924 = vunpack.c.l.b16 %v2629
      %v2925 = vunpack.c.l.b16 %v2630
      %v2926 = vunpack.c.l.b16 %v2631
      %v2927 = vunpack.c.l.b16 %v2632
      %v2928 = vunpack.c.l.b16 %v2633
      %v2929 = vunpack.c.l.b16 %v2634
      %v2930 = vunpack.c.l.b16 %v2635
      %v2931 = vunpack.c.l.b16 %v2636
      %v2932 = vunpack.c.l.b16 %v2637
      %v2933 = vunpack.c.l.b16 %v2638
      %v2934 = vunpack.c.l.b16 %v2639
      %v2935 = vunpack.c.l.b16 %v2640
      %v2936 = vunpack.c.l.b16 %v2641
      %v2937 = vunpack.c.l.b16 %v2642
      %v2938 = vunpack.c.l.b16 %v2643
      %v2939 = vunpack.c.l.b16 %v2644
      %v2940 = vunpack.c.l.b16 %v2645
      %v2941 = vunpack.c.l.b16 %v2646
      %v2942 = vunpack.c.l.b16 %v2647
      %v2943 = vunpack.c.l.b16 %v2648
      %v2944 = vunpack.c.l.b16 %v2649
      %v2945 = vunpack.c.l.b16 %v2650
      %v2946 = vunpack.c.l.b16 %v2651
      %v2947 = vunpack.c.l.b16 %v2652
      %v2948 = vunpack.c.l.b16 %v2653
      %v2949 = vunpack.c.l.b16 %v2654
      %v2950 = vunpack.c.l.b16 %v2655
      %v2951 = vunpack.c.l.b16 %v2656
      %v2952 = vunpack.c.l.b16 %v2657
      %v2953 = vunpack.c.l.b16 %v2658
      %v2954 = vunpack.c.l.b16 %v2659
      %v2955 = vunpack.c.l.b16 %v2660
      %v2956 = vunpack.c.l.b16 %v2661
      %v2957 = vunpack.c.l.b16 %v2662
      %v2958 = vunpack.c.l.b16 %v2663
      %v2959 = vunpack.c.l.b16 %v2664
      %v2960 = vunpack.c.l.b16 %v2665
      %v2961 = vunpack.c.l.b16 %v2666
      %v2962 = vunpack.c.l.b16 %v2667
      %v2963 = vunpack.c.l.b16 %v2668
      %v2964 = vunpack.c.l.b16 %v2669
      %v2965 = vunpack.c.l.b16 %v2670
      %v2966 = vunpack.c.l.b16 %v2671
      %v2967 = vunpack.c.l.b16 %v2672
      %v2968 = vunpack.c.l.b16 %v2673
      %v2969 = vunpack.c.l.b16 %v2674
      %v2970 = vunpack.c.l.b16 %v2675
      %v2971 = vunpack.c.l.b16 %v2676
      %v2972 = vunpack.c.l.b16 %v2677
      %v2973 = vunpack.c.l.b16 %v2678
      %v2974 = vunpack.c.l.b16 %v2679
      %v2975 = vunpack.c.l.b16 %v2680
      %v2976 = vunpack.c.l.b16 %v2681
      %v2977 = vunpack.c.l.b16 %v2682
      %v2978 = vunpack.c.l.b16 %v2683
      %v2979 = vunpack.c.l.b16 %v2684
      %v2980 = vunpack.c.l.b16 %v2685
      %v2981 = vunpack.c.l.b16 %v2686
      %v2982 = vunpack.c.l.b16 %v2687
      %v2983 = vunpack.c.l.b16 %v2688
      %v2984 = vunpack.c.l.b16 %v2689
      %v2985 = vunpack.c.l.b16 %v2690
      %v2986 = vunpack.c.l.b16 %v2691
      %v2987 = vunpack.c.l.b16 %v2692
      %v2988 = vunpack.c.l.b16 %v2693
      %v2989 = vunpack.c.l.b16 %v2694
      %v2990 = vunpack.c.l.b16 %v2695
      %v2991 = vunpack.c.l.b16 %v2696
      %v2992 = vunpack.c.l.b16 %v2697
      %v2993 = vunpack.c.l.b16 %v2698
      %v2994 = vunpack.c.l.b16 %v2699
      %v2995 = vunpack.c.l.b16 %v2700
      %v2996 = vunpack.c.l.b16 %v2701
      %v2997 = vunpack.c.l.b16 %v2702
      %v2998 = vunpack.c.l.b16 %v2703
      %v2999 = vunpack.c.l.b16 %v2704
      %v3000 = vunpack.c.l.b16 %v2705
      %v3001 = vunpack.c.l.b16 %v2706
      %v3002 = vunpack.c.l.b16 %v2707
      %v3003 = vunpack.c.l.b16 %v2708
      %v3004 = vunpack.c.l.b16 %v2709
      %v3005 = vunpack.c.l.b16 %v2710
      %v3006 = vunpack.c.l.b16 %v2711
      %v3007 = vunpack.c.l.b16 %v2712
      %v3008 = vunpack.c.l.b16 %v2713
      %v3009 = vunpack.c.l.b16 %v2714
      %v3010 = vunpack.c.l.b16 %v2715
      %v3011 = vunpack.c.l.b16 %v2716
      %v3012 = vunpack.c.l.b16 %v2717
      %v3013 = vunpack.c.l.b16 %v2718
      %v3014 = vunpack.c.l.b16 %v2719
      %v3015 = vunpack.c.l.b16 %v2720
      %v3016 = vunpack.c.l.b16 %v2721
      %v3017 = vunpack.c.l.b16 %v2722
      %v3018 = vunpack.c.l.b16 %v2723
      %v3019 = vunpack.c.l.b16 %v2724
      %v3020 = vunpack.c.l.b16 %v2725
      %v3021 = vunpack.c.l.b16 %v2726
      %v3022 = vunpack.c.l.b16 %v2727
      %v3023 = vunpack.c.l.b16 %v2728
      %v3024 = vunpack.c.l.b16 %v2729
      %v3025 = vunpack.c.l.b16 %v2730
      %v3026 = vunpack.c.l.b16 %v2731
      %v3027 = vunpack.c.l.b16 %v2732
      %v3028 = vunpack.c.l.b16 %v2733
      %v3029 = vunpack.c.l.b16 %v2734
      %v3030 = vunpack.c.l.b16 %v2735
      %v3031 = vunpack.c.l.b16 %v2736
      %v3032 = vunpack.c.l.b16 %v2737
      %v3033 = vunpack.c.l.b16 %v2738
      %v3034 = vpack.c.b16 %v2891, %v2890
      %v3035 = vpack.c.b16 %v2893, %v2892
      %v3036 = vpack.c.b16 %v2895, %v2894
      %v3037 = vpack.c.b16 %v2897, %v2896
      %v3038 = vpack.c.b16 %v2899, %v2898
      %v3039 = vpack.c.b16 %v2901, %v2900
      %v3040 = vpack.c.b16 %v2903, %v2902
      %v3041 = vpack.c.b16 %v2905, %v2904
      %v3042 = vpack.c.b16 %v2907, %v2906
      %v3043 = vpack.c.b16 %v2909, %v2908
      %v3044 = vpack.c.b16 %v2911, %v2910
      %v3045 = vpack.c.b16 %v2913, %v2912
      %v3046 = vpack.c.b16 %v2915, %v2914
      %v3047 = vpack.c.b16 %v2917, %v2916
      %v3048 = vpack.c.b16 %v2919, %v2918
      %v3049 = vpack.c.b16 %v2921, %v2920
      %v3050 = vpack.c.b16 %v2923, %v2922
      %v3051 = vpack.c.b16 %v2925, %v2924
      %v3052 = vpack.c.b16 %v2927, %v2926
      %v3053 = vpack.c.b16 %v2929, %v2928
      %v3054 = vpack.c.b16 %v2931, %v2930
      %v3055 = vpack.c.b16 %v2933, %v2932
      %v3056 = vpack.c.b16 %v2935, %v2934
      %v3057 = vpack.c.b16 %v2937, %v2936
      %v3058 = vpack.c.b16 %v2939, %v2938
      %v3059 = vpack.c.b16 %v2941, %v2940
      %v3060 = vpack.c.b16 %v2943, %v2942
      %v3061 = vpack.c.b16 %v2945, %v2944
      %v3062 = vpack.c.b16 %v2947, %v2946
      %v3063 = vpack.c.b16 %v2949, %v2948
      %v3064 = vpack.c.b16 %v2951, %v2950
      %v3065 = vpack.c.b16 %v2953, %v2952
      %v3066 = vpack.c.b16 %v2955, %v2954
      %v3067 = vpack.c.b16 %v2957, %v2956
      %v3068 = vpack.c.b16 %v2959, %v2958
      %v3069 = vpack.c.b16 %v2961, %v2960
      %v3070 = vpack.c.b16 %v2963, %v2962
      %v3071 = vpack.c.b16 %v2965, %v2964
      %v3072 = vpack.c.b16 %v2967, %v2966
      %v3073 = vpack.c.b16 %v2969, %v2968
      %v3074 = vpack.c.b16 %v2971, %v2970
      %v3075 = vpack.c.b16 %v2973, %v2972
      %v3076 = vpack.c.b16 %v2975, %v2974
      %v3077 = vpack.c.b16 %v2977, %v2976
      %v3078 = vpack.c.b16 %v2979, %v2978
      %v3079 = vpack.c.b16 %v2981, %v2980
      %v3080 = vpack.c.b16 %v2983, %v2982
      %v3081 = vpack.c.b16 %v2985, %v2984
      %v3082 = vpack.c.b16 %v2987, %v2986
      %v3083 = vpack.c.b16 %v2989, %v2988
      %v3084 = vpack.c.b16 %v2991, %v2990
      %v3085 = vpack.c.b16 %v2993, %v2992
      %v3086 = vpack.c.b16 %v2995, %v2994
      %v3087 = vpack.c.b16 %v2997, %v2996
      %v3088 = vpack.c.b16 %v2999, %v2998
      %v3089 = vpack.c.b16 %v3001, %v3000
      %v3090 = vpack.c.b16 %v3003, %v3002
      %v3091 = vpack.c.b16 %v3005, %v3004
      %v3092 = vpack.c.b16 %v3007, %v3006
      %v3093 = vpack.c.b16 %v3009, %v3008
      %v3094 = vpack.c.b16 %v3011, %v3010
      %v3095 = vpack.c.b16 %v3013, %v3012
      %v3096 = vpack.c.b16 %v3015, %v3014
      %v3097 = vpack.c.b16 %v3017, %v3016
      %v3098 = vpack.c.b16 %v3019, %v3018
      %v3099 = vpack.c.b16 %v3021, %v3020
      %v3100 = vpack.c.b16 %v3023, %v3022
      %v3101 = vpack.c.b16 %v3025, %v3024
      %v3102 = vpack.c.b16 %v3027, %v3026
      %v3103 = vpack.c.b16 %v3029, %v3028
      %v3104 = vpack.c.b16 %v3031, %v3030
      %v3105 = vpack.c.b16 %v3033, %v3032
      %3178 = vmatprep.subr.bf16.mxu0 0
      %3179 = vmatpush1.bf16.msra.mxu0 %v3034
      %3180 = vmatprep.subr.bf16.mxu0 0
      %3181 = vmatpush1.bf16.msra.mxu0 %v3035
      %3182 = vmatprep.subr.bf16.mxu0 0
      %3183 = vmatpush1.bf16.msra.mxu0 %v3036
      %3184 = vmatprep.subr.bf16.mxu0 0
      %3185 = vmatpush1.bf16.msra.mxu0 %v3037
      %3186 = vmatprep.subr.bf16.mxu0 0
      %3187 = vmatpush1.bf16.msra.mxu0 %v3038
      %3188 = vmatprep.subr.bf16.mxu0 0
      %3189 = vmatpush1.bf16.msra.mxu0 %v3039
      %3190 = vmatprep.subr.bf16.mxu0 0
      %3191 = vmatpush1.bf16.msra.mxu0 %v3040
      %3192 = vmatprep.subr.bf16.mxu0 0
      %3193 = vmatpush1.bf16.msra.mxu0 %v3041
      %3194 = vmatprep.subr.bf16.mxu0 0
      %3195 = vmatpush1.bf16.msra.mxu0 %v3042
      %3196 = vmatprep.subr.bf16.mxu0 0
      %3197 = vmatpush1.bf16.msra.mxu0 %v3043
      %3198 = vmatprep.subr.bf16.mxu0 0
      %3199 = vmatpush1.bf16.msra.mxu0 %v3044
      %3200 = vmatprep.subr.bf16.mxu0 0
      %3201 = vmatpush1.bf16.msra.mxu0 %v3045
      %3202 = vmatprep.subr.bf16.mxu0 0
      %3203 = vmatpush1.bf16.msra.mxu0 %v3046
      %3204 = vmatprep.subr.bf16.mxu0 0
      %3205 = vmatpush1.bf16.msra.mxu0 %v3047
      %3206 = vmatprep.subr.bf16.mxu0 0
      %3207 = vmatpush1.bf16.msra.mxu0 %v3048
      %3208 = vmatprep.subr.bf16.mxu0 0
      %3209 = vmatpush1.bf16.msra.mxu0 %v3049
      %3210 = vmatprep.mubr.bf16.mxu0 %v2506
      %3211 = vmatmul.mubr.bf16.gmra.mrb[0].mxu0 %v2505
      %v3212 = vpop.f32.mrb[0].mxu0
      %v3213 = vadd.f32 %v2744, %v3212
      %v3214 = vpop.f32.mrb[0].mxu0
      %v3215 = vpop.f32.mrb[0].mxu0
      %v3216 = vadd.f32 %v2744, %v3215
      %v3217 = vpop.f32.mrb[0].mxu0
      %3218 = vmatprep.mubr.bf16.mxu0 %v2515
      %3219 = vmatmul.mubr.bf16.gmra.mrb[0].mxu0 %v2514
      %v3220 = vpop.f32.mrb[0].mxu0
      %v3221 = vadd.f32 %v2744, %v3220
      %v3222 = vpop.f32.mrb[0].mxu0
      %v3223 = vpop.f32.mrb[0].mxu0
      %v3224 = vadd.f32 %v2744, %v3223
      %v3225 = vpop.f32.mrb[0].mxu0
      %3226 = vmatprep.mubr.bf16.mxu0 %v2524
      %3227 = vmatmul.mubr.bf16.gmra.mrb[0].mxu0 %v2523
      %v3228 = vpop.f32.mrb[0].mxu0
      %v3229 = vadd.f32 %v2744, %v3228
      %v3230 = vpop.f32.mrb[0].mxu0
      %v3231 = vpop.f32.mrb[0].mxu0
      %v3232 = vadd.f32 %v2744, %v3231
      %v3233 = vpop.f32.mrb[0].mxu0
      %3234 = vmatprep.mubr.bf16.mxu0 %v2533
      %3235 = vmatmul.mubr.bf16.gmra.mrb[0].mxu0 %v2532
      %v3236 = vpop.f32.mrb[0].mxu0
      %v3237 = vadd.f32 %v2744, %v3236
      %v3238 = vpop.f32.mrb[0].mxu0
      %v3239 = vpop.f32.mrb[0].mxu0
      %v3240 = vadd.f32 %v2744, %v3239
      %v3241 = vpop.f32.mrb[0].mxu0
      %3242 = vmatprep.mubr.bf16.mxu0 %v2542
      %3243 = vmatmul.mubr.bf16.gmra.mrb[0].mxu0 %v2541
      %v3244 = vpop.f32.mrb[0].mxu0
      %v3245 = vadd.f32 %v2744, %v3244
      %v3246 = vpop.f32.mrb[0].mxu0
      %v3247 = vpop.f32.mrb[0].mxu0
      %v3248 = vadd.f32 %v2744, %v3247
      %v3249 = vpop.f32.mrb[0].mxu0
      %3250 = vmatprep.mubr.bf16.mxu0 %v2551
      %3251 = vmatmul.mubr.bf16.gmra.mrb[0].mxu0 %v2550
      %v3252 = vpop.f32.mrb[0].mxu0
      %v3253 = vadd.f32 %v2744, %v3252
      %v3254 = vpop.f32.mrb[0].mxu0
      %v3255 = vpop.f32.mrb[0].mxu0
      %v3256 = vadd.f32 %v2744, %v3255
      %v3257 = vpop.f32.mrb[0].mxu0
      %3258 = vmatprep.mubr.bf16.mxu0 %v2560
      %3259 = vmatmul.mubr.bf16.gmra.mrb[0].mxu0 %v2559
      %v3260 = vpop.f32.mrb[0].mxu0
      %v3261 = vadd.f32 %v2744, %v3260
      %v3262 = vpop.f32.mrb[0].mxu0
      %v3263 = vpop.f32.mrb[0].mxu0
      %v3264 = vadd.f32 %v2744, %v3263
      %v3265 = vpop.f32.mrb[0].mxu0
      %3266 = vmatprep.mubr.bf16.mxu0 %v2569
      %3267 = vmatmul.mubr.bf16.gmra.mrb[0].mxu0 %v2568
      %v3268 = vpop.f32.mrb[0].mxu0
      %v3269 = vadd.f32 %v2744, %v3268
      %v3270 = vpop.f32.mrb[0].mxu0
      %v3271 = vpop.f32.mrb[0].mxu0
      %v3272 = vadd.f32 %v2744, %v3271
      %v3273 = vpop.f32.mrb[0].mxu0
      %3274 = vmatprep.mubr.bf16.mxu0 %v2578
      %3275 = vmatmul.mubr.bf16.gmra.mrb[0].mxu0 %v2577
      %v3276 = vpop.f32.mrb[0].mxu0
      %v3277 = vadd.f32 %v2744, %v3276
      %v3278 = vpop.f32.mrb[0].mxu0
      %v3279 = vpop.f32.mrb[0].mxu0
      %v3280 = vadd.f32 %v2744, %v3279
      %v3281 = vpop.f32.mrb[0].mxu0
      %3282 = vmatprep.mubr.bf16.mxu0 %v2587
      %3283 = vmatmul.mubr.bf16.gmra.mrb[0].mxu0 %v2586
      %v3284 = vpop.f32.mrb[0].mxu0
      %v3285 = vadd.f32 %v2744, %v3284
      %v3286 = vpop.f32.mrb[0].mxu0
      %v3287 = vpop.f32.mrb[0].mxu0
      %v3288 = vadd.f32 %v2744, %v3287
      %v3289 = vpop.f32.mrb[0].mxu0
      %3290 = vdwg.mxu0
      %3291 = vmatprep.subr.bf16.mxu0 0
      %3292 = vmatpush1.bf16.msra.mxu0 %v3050
      %3293 = vmatprep.subr.bf16.mxu0 0
      %3294 = vmatpush1.bf16.msra.mxu0 %v3051
      %3295 = vmatprep.subr.bf16.mxu0 0
      %3296 = vmatpush1.bf16.msra.mxu0 %v3052
      %3297 = vmatprep.subr.bf16.mxu0 0
      %3298 = vmatpush1.bf16.msra.mxu0 %v3053
      %3299 = vmatprep.subr.bf16.mxu0 0
      %3300 = vmatpush1.bf16.msra.mxu0 %v3054
      %3301 = vmatprep.subr.bf16.mxu0 0
      %3302 = vmatpush1.bf16.msra.mxu0 %v3055
      %3303 = vmatprep.subr.bf16.mxu0 0
      %3304 = vmatpush1.bf16.msra.mxu0 %v3056
      %3305 = vmatprep.subr.bf16.mxu0 0
      %3306 = vmatpush1.bf16.msra.mxu0 %v3057
      %3307 = vmatprep.subr.bf16.mxu0 0
      %3308 = vmatpush1.bf16.msra.mxu0 %v3058
      %3309 = vmatprep.subr.bf16.mxu0 0
      %3310 = vmatpush1.bf16.msra.mxu0 %v3059
      %3311 = vmatprep.subr.bf16.mxu0 0
      %3312 = vmatpush1.bf16.msra.mxu0 %v3060
      %3313 = vmatprep.subr.bf16.mxu0 0
      %3314 = vmatpush1.bf16.msra.mxu0 %v3061
      %3315 = vmatprep.subr.bf16.mxu0 0
      %3316 = vmatpush1.bf16.msra.mxu0 %v3062
      %3317 = vmatprep.subr.bf16.mxu0 0
      %3318 = vmatpush1.bf16.msra.mxu0 %v3063
      %3319 = vmatprep.subr.bf16.mxu0 0
      %3320 = vmatpush1.bf16.msra.mxu0 %v3064
      %3321 = vmatprep.subr.bf16.mxu0 0
      %3322 = vmatpush1.bf16.msra.mxu0 %v3065
      %3323 = vmatprep.mubr.bf16.mxu0 %v2508
      %3324 = vmatmul.mubr.bf16.gmra.mrb[0].mxu0 %v2507
      %v3325 = vpop.f32.mrb[0].mxu0
      %v3326 = vadd.f32 %v3213, %v3325
      %v3327 = vpop.f32.mrb[0].mxu0
      %v3328 = vpop.f32.mrb[0].mxu0
      %v3329 = vadd.f32 %v3216, %v3328
      %v3330 = vpop.f32.mrb[0].mxu0
      %3331 = vmatprep.mubr.bf16.mxu0 %v2517
      %3332 = vmatmul.mubr.bf16.gmra.mrb[0].mxu0 %v2516
      %v3333 = vpop.f32.mrb[0].mxu0
      %v3334 = vadd.f32 %v3221, %v3333
      %v3335 = vpop.f32.mrb[0].mxu0
      %v3336 = vpop.f32.mrb[0].mxu0
      %v3337 = vadd.f32 %v3224, %v3336
      %v3338 = vpop.f32.mrb[0].mxu0
      %3339 = vmatprep.mubr.bf16.mxu0 %v2526
      %3340 = vmatmul.mubr.bf16.gmra.mrb[0].mxu0 %v2525
      %v3341 = vpop.f32.mrb[0].mxu0
      %v3342 = vadd.f32 %v3229, %v3341
      %v3343 = vpop.f32.mrb[0].mxu0
      %v3344 = vpop.f32.mrb[0].mxu0
      %v3345 = vadd.f32 %v3232, %v3344
      %v3346 = vpop.f32.mrb[0].mxu0
      %3347 = vmatprep.mubr.bf16.mxu0 %v2535
      %3348 = vmatmul.mubr.bf16.gmra.mrb[0].mxu0 %v2534
      %v3349 = vpop.f32.mrb[0].mxu0
      %v3350 = vadd.f32 %v3237, %v3349
      %v3351 = vpop.f32.mrb[0].mxu0
      %v3352 = vpop.f32.mrb[0].mxu0
      %v3353 = vadd.f32 %v3240, %v3352
      %v3354 = vpop.f32.mrb[0].mxu0
      %3355 = vmatprep.mubr.bf16.mxu0 %v2544
      %3356 = vmatmul.mubr.bf16.gmra.mrb[0].mxu0 %v2543
      %v3357 = vpop.f32.mrb[0].mxu0
      %v3358 = vadd.f32 %v3245, %v3357
      %v3359 = vpop.f32.mrb[0].mxu0
      %v3360 = vpop.f32.mrb[0].mxu0
      %v3361 = vadd.f32 %v3248, %v3360
      %v3362 = vpop.f32.mrb[0].mxu0
      %3363 = vmatprep.mubr.bf16.mxu0 %v2553
      %3364 = vmatmul.mubr.bf16.gmra.mrb[0].mxu0 %v2552
      %v3365 = vpop.f32.mrb[0].mxu0
      %v3366 = vadd.f32 %v3253, %v3365
      %v3367 = vpop.f32.mrb[0].mxu0
      %v3368 = vpop.f32.mrb[0].mxu0
      %v3369 = vadd.f32 %v3256, %v3368
      %v3370 = vpop.f32.mrb[0].mxu0
      %3371 = vmatprep.mubr.bf16.mxu0 %v2562
      %3372 = vmatmul.mubr.bf16.gmra.mrb[0].mxu0 %v2561
      %v3373 = vpop.f32.mrb[0].mxu0
      %v3374 = vadd.f32 %v3261, %v3373
      %v3375 = vpop.f32.mrb[0].mxu0
      %v3376 = vpop.f32.mrb[0].mxu0
      %v3377 = vadd.f32 %v3264, %v3376
      %v3378 = vpop.f32.mrb[0].mxu0
      %3379 = vmatprep.mubr.bf16.mxu0 %v2571
      %3380 = vmatmul.mubr.bf16.gmra.mrb[0].mxu0 %v2570
      %v3381 = vpop.f32.mrb[0].mxu0
      %v3382 = vadd.f32 %v3269, %v3381
      %v3383 = vpop.f32.mrb[0].mxu0
      %v3384 = vpop.f32.mrb[0].mxu0
      %v3385 = vadd.f32 %v3272, %v3384
      %v3386 = vpop.f32.mrb[0].mxu0
      %3387 = vmatprep.mubr.bf16.mxu0 %v2580
      %3388 = vmatmul.mubr.bf16.gmra.mrb[0].mxu0 %v2579
      %v3389 = vpop.f32.mrb[0].mxu0
      %v3390 = vadd.f32 %v3277, %v3389
      %v3391 = vpop.f32.mrb[0].mxu0
      %v3392 = vpop.f32.mrb[0].mxu0
      %v3393 = vadd.f32 %v3280, %v3392
      %v3394 = vpop.f32.mrb[0].mxu0
      %3395 = vmatprep.mubr.bf16.mxu0 %v2589
      %3396 = vmatmul.mubr.bf16.gmra.mrb[0].mxu0 %v2588
      %v3397 = vpop.f32.mrb[0].mxu0
      %v3398 = vadd.f32 %v3285, %v3397
      %v3399 = vpop.f32.mrb[0].mxu0
      %v3400 = vpop.f32.mrb[0].mxu0
      %v3401 = vadd.f32 %v3288, %v3400
      %v3402 = vpop.f32.mrb[0].mxu0
      %3403 = vdwg.mxu0
      %3404 = vmatprep.subr.bf16.mxu0 0
      %3405 = vmatpush1.bf16.msra.mxu0 %v3066
      %3406 = vmatprep.subr.bf16.mxu0 0
      %3407 = vmatpush1.bf16.msra.mxu0 %v3067
      %3408 = vmatprep.subr.bf16.mxu0 0
      %3409 = vmatpush1.bf16.msra.mxu0 %v3068
      %3410 = vmatprep.subr.bf16.mxu0 0
      %3411 = vmatpush1.bf16.msra.mxu0 %v3069
      %3412 = vmatprep.subr.bf16.mxu0 0
      %3413 = vmatpush1.bf16.msra.mxu0 %v3070
      %3414 = vmatprep.subr.bf16.mxu0 0
      %3415 = vmatpush1.bf16.msra.mxu0 %v3071
      %3416 = vmatprep.subr.bf16.mxu0 0
      %3417 = vmatpush1.bf16.msra.mxu0 %v3072
      %3418 = vmatprep.subr.bf16.mxu0 0
      %3419 = vmatpush1.bf16.msra.mxu0 %v3073
      %3420 = vmatprep.subr.bf16.mxu0 0
      %3421 = vmatpush1.bf16.msra.mxu0 %v3074
      %3422 = vmatprep.subr.bf16.mxu0 0
      %3423 = vmatpush1.bf16.msra.mxu0 %v3075
      %3424 = vmatprep.subr.bf16.mxu0 0
      %3425 = vmatpush1.bf16.msra.mxu0 %v3076
      %3426 = vmatprep.subr.bf16.mxu0 0
      %3427 = vmatpush1.bf16.msra.mxu0 %v3077
      %3428 = vmatprep.subr.bf16.mxu0 0
      %3429 = vmatpush1.bf16.msra.mxu0 %v3078
      %3430 = vmatprep.subr.bf16.mxu0 0
      %3431 = vmatpush1.bf16.msra.mxu0 %v3079
      %3432 = vmatprep.subr.bf16.mxu0 0
      %3433 = vmatpush1.bf16.msra.mxu0 %v3080
      %3434 = vmatprep.subr.bf16.mxu0 0
      %3435 = vmatpush1.bf16.msra.mxu0 %v3081
      %3436 = vmatprep.mubr.bf16.mxu0 %v2510
      %3437 = vmatmul.mubr.bf16.gmra.mrb[0].mxu0 %v2509
      %v3438 = vpop.f32.mrb[0].mxu0
      %v3439 = vadd.f32 %v3326, %v3438
      %v3440 = vpop.f32.mrb[0].mxu0
      %v3441 = vpop.f32.mrb[0].mxu0
      %v3442 = vadd.f32 %v3329, %v3441
      %v3443 = vpop.f32.mrb[0].mxu0
      %3444 = vmatprep.mubr.bf16.mxu0 %v2519
      %3445 = vmatmul.mubr.bf16.gmra.mrb[0].mxu0 %v2518
      %v3446 = vpop.f32.mrb[0].mxu0
      %v3447 = vadd.f32 %v3334, %v3446
      %v3448 = vpop.f32.mrb[0].mxu0
      %v3449 = vpop.f32.mrb[0].mxu0
      %v3450 = vadd.f32 %v3337, %v3449
      %v3451 = vpop.f32.mrb[0].mxu0
      %3452 = vmatprep.mubr.bf16.mxu0 %v2528
      %3453 = vmatmul.mubr.bf16.gmra.mrb[0].mxu0 %v2527
      %v3454 = vpop.f32.mrb[0].mxu0
      %v3455 = vadd.f32 %v3342, %v3454
      %v3456 = vpop.f32.mrb[0].mxu0
      %v3457 = vpop.f32.mrb[0].mxu0
      %v3458 = vadd.f32 %v3345, %v3457
      %v3459 = vpop.f32.mrb[0].mxu0
      %3460 = vmatprep.mubr.bf16.mxu0 %v2537
      %3461 = vmatmul.mubr.bf16.gmra.mrb[0].mxu0 %v2536
      %v3462 = vpop.f32.mrb[0].mxu0
      %v3463 = vadd.f32 %v3350, %v3462
      %v3464 = vpop.f32.mrb[0].mxu0
      %v3465 = vpop.f32.mrb[0].mxu0
      %v3466 = vadd.f32 %v3353, %v3465
      %v3467 = vpop.f32.mrb[0].mxu0
      %3468 = vmatprep.mubr.bf16.mxu0 %v2546
      %3469 = vmatmul.mubr.bf16.gmra.mrb[0].mxu0 %v2545
      %v3470 = vpop.f32.mrb[0].mxu0
      %v3471 = vadd.f32 %v3358, %v3470
      %v3472 = vpop.f32.mrb[0].mxu0
      %v3473 = vpop.f32.mrb[0].mxu0
      %v3474 = vadd.f32 %v3361, %v3473
      %v3475 = vpop.f32.mrb[0].mxu0
      %3476 = vmatprep.mubr.bf16.mxu0 %v2555
      %3477 = vmatmul.mubr.bf16.gmra.mrb[0].mxu0 %v2554
      %v3478 = vpop.f32.mrb[0].mxu0
      %v3479 = vadd.f32 %v3366, %v3478
      %v3480 = vpop.f32.mrb[0].mxu0
      %v3481 = vpop.f32.mrb[0].mxu0
      %v3482 = vadd.f32 %v3369, %v3481
      %v3483 = vpop.f32.mrb[0].mxu0
      %3484 = vmatprep.mubr.bf16.mxu0 %v2564
      %3485 = vmatmul.mubr.bf16.gmra.mrb[0].mxu0 %v2563
      %v3486 = vpop.f32.mrb[0].mxu0
      %v3487 = vadd.f32 %v3374, %v3486
      %v3488 = vpop.f32.mrb[0].mxu0
      %v3489 = vpop.f32.mrb[0].mxu0
      %v3490 = vadd.f32 %v3377, %v3489
      %v3491 = vpop.f32.mrb[0].mxu0
      %3492 = vmatprep.mubr.bf16.mxu0 %v2573
      %3493 = vmatmul.mubr.bf16.gmra.mrb[0].mxu0 %v2572
      %v3494 = vpop.f32.mrb[0].mxu0
      %v3495 = vadd.f32 %v3382, %v3494
      %v3496 = vpop.f32.mrb[0].mxu0
      %v3497 = vpop.f32.mrb[0].mxu0
      %v3498 = vadd.f32 %v3385, %v3497
      %v3499 = vpop.f32.mrb[0].mxu0
      %3500 = vmatprep.mubr.bf16.mxu0 %v2582
      %3501 = vmatmul.mubr.bf16.gmra.mrb[0].mxu0 %v2581
      %v3502 = vpop.f32.mrb[0].mxu0
      %v3503 = vadd.f32 %v3390, %v3502
      %v3504 = vpop.f32.mrb[0].mxu0
      %v3505 = vpop.f32.mrb[0].mxu0
      %v3506 = vadd.f32 %v3393, %v3505
      %v3507 = vpop.f32.mrb[0].mxu0
      %3508 = vmatprep.mubr.bf16.mxu0 %v2591
      %3509 = vmatmul.mubr.bf16.gmra.mrb[0].mxu0 %v2590
      %v3510 = vpop.f32.mrb[0].mxu0
      %v3511 = vadd.f32 %v3398, %v3510
      %v3512 = vpop.f32.mrb[0].mxu0
      %v3513 = vpop.f32.mrb[0].mxu0
      %v3514 = vadd.f32 %v3401, %v3513
      %v3515 = vpop.f32.mrb[0].mxu0
      %3516 = vdwg.mxu0
      %3517 = vmatprep.subr.bf16.mxu0 0
      %3518 = vmatpush1.bf16.msra.mxu0 %v3082
      %3519 = vmatprep.subr.bf16.mxu0 0
      %3520 = vmatpush1.bf16.msra.mxu0 %v3083
      %3521 = vmatprep.subr.bf16.mxu0 0
      %3522 = vmatpush1.bf16.msra.mxu0 %v3084
      %3523 = vmatprep.subr.bf16.mxu0 0
      %3524 = vmatpush1.bf16.msra.mxu0 %v3085
      %3525 = vmatprep.subr.bf16.mxu0 0
      %3526 = vmatpush1.bf16.msra.mxu0 %v3086
      %3527 = vmatprep.subr.bf16.mxu0 0
      %3528 = vmatpush1.bf16.msra.mxu0 %v3087
      %3529 = vmatprep.subr.bf16.mxu0 0
      %3530 = vmatpush1.bf16.msra.mxu0 %v3088
      %3531 = vmatprep.subr.bf16.mxu0 0
      %3532 = vmatpush1.bf16.msra.mxu0 %v3089
      %3533 = vmatprep.subr.bf16.mxu0 0
      %3534 = vmatpush1.bf16.msra.mxu0 %v3090
      %3535 = vmatprep.subr.bf16.mxu0 0
      %3536 = vmatpush1.bf16.msra.mxu0 %v3091
      %3537 = vmatprep.subr.bf16.mxu0 0
      %3538 = vmatpush1.bf16.msra.mxu0 %v3092
      %3539 = vmatprep.subr.bf16.mxu0 0
      %3540 = vmatpush1.bf16.msra.mxu0 %v3093
      %3541 = vmatprep.subr.bf16.mxu0 0
      %3542 = vmatpush1.bf16.msra.mxu0 %v3094
      %3543 = vmatprep.subr.bf16.mxu0 0
      %3544 = vmatpush1.bf16.msra.mxu0 %v3095
      %3545 = vmatprep.subr.bf16.mxu0 0
      %3546 = vmatpush1.bf16.msra.mxu0 %v3096
      %3547 = vmatprep.subr.bf16.mxu0 0
      %3548 = vmatpush1.bf16.msra.mxu0 %v3097
      %3549 = vmatprep.mubr.bf16.mxu0 %v2512
      %3550 = vmatmul.mubr.bf16.gmra.mrb[0].mxu0 %v2511
      %v3551 = vpop.f32.mrb[0].mxu0
      %v3552 = vadd.f32 %v3439, %v3551
      %v3553 = vpop.f32.mrb[0].mxu0
      %v3554 = vpop.f32.mrb[0].mxu0
      %v3555 = vadd.f32 %v3442, %v3554
      %v3556 = vpop.f32.mrb[0].mxu0
      %3557 = vmatprep.mubr.bf16.mxu0 %v2521
      %3558 = vmatmul.mubr.bf16.gmra.mrb[0].mxu0 %v2520
      %v3559 = vpop.f32.mrb[0].mxu0
      %v3560 = vadd.f32 %v3447, %v3559
      %v3561 = vpop.f32.mrb[0].mxu0
      %v3562 = vpop.f32.mrb[0].mxu0
      %v3563 = vadd.f32 %v3450, %v3562
      %v3564 = vpop.f32.mrb[0].mxu0
      %3565 = vmatprep.mubr.bf16.mxu0 %v2530
      %3566 = vmatmul.mubr.bf16.gmra.mrb[0].mxu0 %v2529
      %v3567 = vpop.f32.mrb[0].mxu0
      %v3568 = vadd.f32 %v3455, %v3567
      %v3569 = vpop.f32.mrb[0].mxu0
      %v3570 = vpop.f32.mrb[0].mxu0
      %v3571 = vadd.f32 %v3458, %v3570
      %v3572 = vpop.f32.mrb[0].mxu0
      %3573 = vmatprep.mubr.bf16.mxu0 %v2539
      %3574 = vmatmul.mubr.bf16.gmra.mrb[0].mxu0 %v2538
      %v3575 = vpop.f32.mrb[0].mxu0
      %v3576 = vadd.f32 %v3463, %v3575
      %v3577 = vpop.f32.mrb[0].mxu0
      %v3578 = vpop.f32.mrb[0].mxu0
      %v3579 = vadd.f32 %v3466, %v3578
      %v3580 = vpop.f32.mrb[0].mxu0
      %3581 = vmatprep.mubr.bf16.mxu0 %v2548
      %3582 = vmatmul.mubr.bf16.gmra.mrb[0].mxu0 %v2547
      %v3583 = vpop.f32.mrb[0].mxu0
      %v3584 = vadd.f32 %v3471, %v3583
      %v3585 = vpop.f32.mrb[0].mxu0
      %v3586 = vpop.f32.mrb[0].mxu0
      %v3587 = vadd.f32 %v3474, %v3586
      %v3588 = vpop.f32.mrb[0].mxu0
      %3589 = vmatprep.mubr.bf16.mxu0 %v2557
      %3590 = vmatmul.mubr.bf16.gmra.mrb[0].mxu0 %v2556
      %v3591 = vpop.f32.mrb[0].mxu0
      %v3592 = vadd.f32 %v3479, %v3591
      %v3593 = vpop.f32.mrb[0].mxu0
      %v3594 = vpop.f32.mrb[0].mxu0
      %v3595 = vadd.f32 %v3482, %v3594
      %v3596 = vpop.f32.mrb[0].mxu0
      %3597 = vmatprep.mubr.bf16.mxu0 %v2566
      %3598 = vmatmul.mubr.bf16.gmra.mrb[0].mxu0 %v2565
      %v3599 = vpop.f32.mrb[0].mxu0
      %v3600 = vadd.f32 %v3487, %v3599
      %v3601 = vpop.f32.mrb[0].mxu0
      %v3602 = vpop.f32.mrb[0].mxu0
      %v3603 = vadd.f32 %v3490, %v3602
      %v3604 = vpop.f32.mrb[0].mxu0
      %3605 = vmatprep.mubr.bf16.mxu0 %v2575
      %3606 = vmatmul.mubr.bf16.gmra.mrb[0].mxu0 %v2574
      %v3607 = vpop.f32.mrb[0].mxu0
      %v3608 = vadd.f32 %v3495, %v3607
      %v3609 = vpop.f32.mrb[0].mxu0
      %v3610 = vpop.f32.mrb[0].mxu0
      %v3611 = vadd.f32 %v3498, %v3610
      %v3612 = vpop.f32.mrb[0].mxu0
      %3613 = vmatprep.mubr.bf16.mxu0 %v2584
      %3614 = vmatmul.mubr.bf16.gmra.mrb[0].mxu0 %v2583
      %v3615 = vpop.f32.mrb[0].mxu0
      %v3616 = vadd.f32 %v3503, %v3615
      %v3617 = vpop.f32.mrb[0].mxu0
      %v3618 = vpop.f32.mrb[0].mxu0
      %v3619 = vadd.f32 %v3506, %v3618
      %v3620 = vpop.f32.mrb[0].mxu0
      %3621 = vmatprep.mubr.bf16.mxu0 %v2593
      %3622 = vmatmul.mubr.bf16.gmra.mrb[0].mxu0 %v2592
      %v3623 = vpop.f32.mrb[0].mxu0
      %v3624 = vadd.f32 %v3511, %v3623
      %v3625 = vpop.f32.mrb[0].mxu0
      %v3626 = vpop.f32.mrb[0].mxu0
      %v3627 = vadd.f32 %v3514, %v3626
      %v3628 = vpop.f32.mrb[0].mxu0
      %3629 = vdwg.mxu0
      %3630 = vmatprep.subr.bf16.mxu0 0
      %3631 = vmatpush1.bf16.msra.mxu0 %v3098
      %3632 = vmatprep.subr.bf16.mxu0 0
      %3633 = vmatpush1.bf16.msra.mxu0 %v3099
      %3634 = vmatprep.subr.bf16.mxu0 0
      %3635 = vmatpush1.bf16.msra.mxu0 %v3100
      %3636 = vmatprep.subr.bf16.mxu0 0
      %3637 = vmatpush1.bf16.msra.mxu0 %v3101
      %3638 = vmatprep.subr.bf16.mxu0 0
      %3639 = vmatpush1.bf16.msra.mxu0 %v3102
      %3640 = vmatprep.subr.bf16.mxu0 0
      %3641 = vmatpush1.bf16.msra.mxu0 %v3103
      %3642 = vmatprep.subr.bf16.mxu0 0
      %3643 = vmatpush1.bf16.msra.mxu0 %v3104
      %3644 = vmatprep.subr.bf16.mxu0 0
      %3645 = vmatpush1.bf16.msra.mxu0 %v3105
      %3646 = vmatprep.subr.bf16.mxu0 0
      %3647 = vmatpush1.bf16.msra.mxu0 0
      %3648 = vmatprep.subr.bf16.mxu0 0
      %3649 = vmatpush1.bf16.msra.mxu0 0
      %3650 = vmatprep.subr.bf16.mxu0 0
      %3651 = vmatpush1.bf16.msra.mxu0 0
      %3652 = vmatprep.subr.bf16.mxu0 0
      %3653 = vmatpush1.bf16.msra.mxu0 0
      %3654 = vmatprep.subr.bf16.mxu0 0
      %3655 = vmatpush1.bf16.msra.mxu0 0
      %3656 = vmatprep.subr.bf16.mxu0 0
      %3657 = vmatpush1.bf16.msra.mxu0 0
      %3658 = vmatprep.subr.bf16.mxu0 0
      %3659 = vmatpush1.bf16.msra.mxu0 0
      %3660 = vmatprep.subr.bf16.mxu0 0
      %3661 = vmatpush1.bf16.msra.mxu0 0
      %3662 = vmatprep.mubr.bf16.mxu0 0
      %3663 = vmatmul.mubr.bf16.gmra.mrb[0].mxu0 %v2513
      %v3664 = vpop.f32.mrb[0].mxu0
      %v3665 = vadd.f32 %v3552, %v3664
      %v3666 = vpop.f32.mrb[0].mxu0
      %v3667 = vpop.f32.mrb[0].mxu0
      %v3668 = vadd.f32 %v3555, %v3667
      %v3669 = vpop.f32.mrb[0].mxu0
      %3670 = vmatprep.mubr.bf16.mxu0 0
      %3671 = vmatmul.mubr.bf16.gmra.mrb[0].mxu0 %v2522
      %v3672 = vpop.f32.mrb[0].mxu0
      %v3673 = vadd.f32 %v3560, %v3672
      %v3674 = vpop.f32.mrb[0].mxu0
      %v3675 = vpop.f32.mrb[0].mxu0
      %v3676 = vadd.f32 %v3563, %v3675
      %v3677 = vpop.f32.mrb[0].mxu0
      %3678 = vmatprep.mubr.bf16.mxu0 0
      %3679 = vmatmul.mubr.bf16.gmra.mrb[0].mxu0 %v2531
      %v3680 = vpop.f32.mrb[0].mxu0
      %v3681 = vadd.f32 %v3568, %v3680
      %v3682 = vpop.f32.mrb[0].mxu0
      %v3683 = vpop.f32.mrb[0].mxu0
      %v3684 = vadd.f32 %v3571, %v3683
      %v3685 = vpop.f32.mrb[0].mxu0
      %3686 = vmatprep.mubr.bf16.mxu0 0
      %3687 = vmatmul.mubr.bf16.gmra.mrb[0].mxu0 %v2540
      %v3688 = vpop.f32.mrb[0].mxu0
      %v3689 = vadd.f32 %v3576, %v3688
      %v3690 = vpop.f32.mrb[0].mxu0
      %v3691 = vpop.f32.mrb[0].mxu0
      %v3692 = vadd.f32 %v3579, %v3691
      %v3693 = vpop.f32.mrb[0].mxu0
      %3694 = vmatprep.mubr.bf16.mxu0 0
      %3695 = vmatmul.mubr.bf16.gmra.mrb[0].mxu0 %v2549
      %v3696 = vpop.f32.mrb[0].mxu0
      %v3697 = vadd.f32 %v3584, %v3696
      %v3698 = vpop.f32.mrb[0].mxu0
      %v3699 = vpop.f32.mrb[0].mxu0
      %v3700 = vadd.f32 %v3587, %v3699
      %v3701 = vpop.f32.mrb[0].mxu0
      %3702 = vmatprep.mubr.bf16.mxu0 0
      %3703 = vmatmul.mubr.bf16.gmra.mrb[0].mxu0 %v2558
      %v3704 = vpop.f32.mrb[0].mxu0
      %v3705 = vadd.f32 %v3592, %v3704
      %v3706 = vpop.f32.mrb[0].mxu0
      %v3707 = vpop.f32.mrb[0].mxu0
      %v3708 = vadd.f32 %v3595, %v3707
      %v3709 = vpop.f32.mrb[0].mxu0
      %3710 = vmatprep.mubr.bf16.mxu0 0
      %3711 = vmatmul.mubr.bf16.gmra.mrb[0].mxu0 %v2567
      %v3712 = vpop.f32.mrb[0].mxu0
      %v3713 = vadd.f32 %v3600, %v3712
      %v3714 = vpop.f32.mrb[0].mxu0
      %v3715 = vpop.f32.mrb[0].mxu0
      %v3716 = vadd.f32 %v3603, %v3715
      %v3717 = vpop.f32.mrb[0].mxu0
      %3718 = vmatprep.mubr.bf16.mxu0 0
      %3719 = vmatmul.mubr.bf16.gmra.mrb[0].mxu0 %v2576
      %v3720 = vpop.f32.mrb[0].mxu0
      %v3721 = vadd.f32 %v3608, %v3720
      %v3722 = vpop.f32.mrb[0].mxu0
      %v3723 = vpop.f32.mrb[0].mxu0
      %v3724 = vadd.f32 %v3611, %v3723
      %v3725 = vpop.f32.mrb[0].mxu0
      %3726 = vmatprep.mubr.bf16.mxu0 0
      %3727 = vmatmul.mubr.bf16.gmra.mrb[0].mxu0 %v2585
      %v3728 = vpop.f32.mrb[0].mxu0
      %v3729 = vadd.f32 %v3616, %v3728
      %v3730 = vpop.f32.mrb[0].mxu0
      %v3731 = vpop.f32.mrb[0].mxu0
      %v3732 = vadd.f32 %v3619, %v3731
      %v3733 = vpop.f32.mrb[0].mxu0
      %3734 = vmatprep.mubr.bf16.mxu0 0
      %3735 = vmatmul.mubr.bf16.gmra.mrb[0].mxu0 %v2594
      %v3736 = vpop.f32.mrb[0].mxu0
      %v3737 = vadd.f32 %v3624, %v3736
      %v3738 = vpop.f32.mrb[0].mxu0
      %v3739 = vpop.f32.mrb[0].mxu0
      %v3740 = vadd.f32 %v3627, %v3739
      %v3741 = vpop.f32.mrb[0].mxu0
      %3742 = vdwg.mxu0
      %v3743 = vmax.f32 %v3665, 0.0
      %v3744 = vmax.f32 %v3668, 0.0
      %v3745 = vmax.f32 %v3673, 0.0
      %v3746 = vmax.f32 %v3676, 0.0
      %v3747 = vmax.f32 %v3681, 0.0
      %v3748 = vmax.f32 %v3684, 0.0
      %v3749 = vmax.f32 %v3689, 0.0
      %v3750 = vmax.f32 %v3692, 0.0
      %v3751 = vmax.f32 %v3697, 0.0
      %v3752 = vmax.f32 %v3700, 0.0
      %v3753 = vmax.f32 %v3705, 0.0
      %v3754 = vmax.f32 %v3708, 0.0
      %v3755 = vmax.f32 %v3713, 0.0
      %v3756 = vmax.f32 %v3716, 0.0
      %v3757 = vmax.f32 %v3721, 0.0
      %v3758 = vmax.f32 %v3724, 0.0
      %v3759 = vmax.f32 %v3729, 0.0
      %v3760 = vmax.f32 %v3732, 0.0
      %v3761 = vmax.f32 %v3737, 0.0
      %v3762 = vmax.f32 %v3740, 0.0
      %v3763 = vld [vmem:[#allocation3] sm:$0x1]
      %v3764 = vsel %vm538, 0, %v3763
      %3765 = vst [vmem:[#allocation3] sm:$0x1] %v3764
      %v3766 = vld [vmem:[#allocation3 + $0xc] sm:$0x1]
      %v3767 = vsel %vm538, 0, %v3766
      %3768 = vst [vmem:[#allocation3 + $0xc] sm:$0x1] %v3767
      %v3769 = vld [vmem:[#allocation3 + $0x18] sm:$0x1]
      %v3770 = vsel %vm538, 0, %v3769
      %3771 = vst [vmem:[#allocation3 + $0x18] sm:$0x1] %v3770
      %v3772 = vld [vmem:[#allocation3 + $0x24] sm:$0x1]
      %v3773 = vsel %vm538, 0, %v3772
      %3774 = vst [vmem:[#allocation3 + $0x24] sm:$0x1] %v3773
      %v3775 = vld [vmem:[#allocation3 + $0x30] sm:$0x1]
      %v3776 = vsel %vm538, 0, %v3775
      %3777 = vst [vmem:[#allocation3 + $0x30] sm:$0x1] %v3776
      %v3778 = vld [vmem:[#allocation3 + $0x3c] sm:$0x1]
      %v3779 = vsel %vm538, 0, %v3778
      %3780 = vst [vmem:[#allocation3 + $0x3c] sm:$0x1] %v3779
      %v3781 = vld [vmem:[#allocation3 + $0x48] sm:$0x1]
      %v3782 = vsel %vm538, 0, %v3781
      %3783 = vst [vmem:[#allocation3 + $0x48] sm:$0x1] %v3782
      %v3784 = vld [vmem:[#allocation3 + $0x54] sm:$0x1]
      %v3785 = vsel %vm538, 0, %v3784
      %3786 = vst [vmem:[#allocation3 + $0x54] sm:$0x1] %v3785
      %v3787 = vld [vmem:[#allocation3 + $0x60] sm:$0x1]
      %v3788 = vsel %vm538, 0, %v3787
      %3789 = vst [vmem:[#allocation3 + $0x60] sm:$0x1] %v3788
      %v3790 = vld [vmem:[#allocation3 + $0x6c] sm:$0x1]
      %v3791 = vsel %vm538, 0, %v3790
      %3792 = vst [vmem:[#allocation3 + $0x6c] sm:$0x1] %v3791
      %v3793 = vld [vmem:[#allocation3 + $0x8] sm:$0x1]
      %v3794 = vsel %vm576, 0, %v3793
      %3795 = vst [vmem:[#allocation3 + $0x8] sm:$0x1] %v3794
      %v3796 = vld [vmem:[#allocation3 + $0x14] sm:$0x1]
      %v3797 = vsel %vm576, 0, %v3796
      %3798 = vst [vmem:[#allocation3 + $0x14] sm:$0x1] %v3797
      %v3799 = vld [vmem:[#allocation3 + $0x20] sm:$0x1]
      %v3800 = vsel %vm576, 0, %v3799
      %3801 = vst [vmem:[#allocation3 + $0x20] sm:$0x1] %v3800
      %v3802 = vld [vmem:[#allocation3 + $0x2c] sm:$0x1]
      %v3803 = vsel %vm576, 0, %v3802
      %3804 = vst [vmem:[#allocation3 + $0x2c] sm:$0x1] %v3803
      %v3805 = vld [vmem:[#allocation3 + $0x38] sm:$0x1]
      %v3806 = vsel %vm576, 0, %v3805
      %3807 = vst [vmem:[#allocation3 + $0x38] sm:$0x1] %v3806
      %v3808 = vld [vmem:[#allocation3 + $0x44] sm:$0x1]
      %v3809 = vsel %vm576, 0, %v3808
      %3810 = vst [vmem:[#allocation3 + $0x44] sm:$0x1] %v3809
      %v3811 = vld [vmem:[#allocation3 + $0x50] sm:$0x1]
      %v3812 = vsel %vm576, 0, %v3811
      %3813 = vst [vmem:[#allocation3 + $0x50] sm:$0x1] %v3812
      %v3814 = vld [vmem:[#allocation3 + $0x5c] sm:$0x1]
      %v3815 = vsel %vm576, 0, %v3814
      %3816 = vst [vmem:[#allocation3 + $0x5c] sm:$0x1] %v3815
      %v3817 = vld [vmem:[#allocation3 + $0x68] sm:$0x1]
      %v3818 = vsel %vm576, 0, %v3817
      %3819 = vst [vmem:[#allocation3 + $0x68] sm:$0x1] %v3818
      %v3820 = vld [vmem:[#allocation3 + $0x74] sm:$0x1]
      %v3821 = vsel %vm576, 0, %v3820
      %3822 = vst [vmem:[#allocation3 + $0x74] sm:$0x1] %v3821
      %v3823 = vpack.c.bf16 %v3744, %v3743
      %v3824 = vpack.c.bf16 %v3746, %v3745
      %v3825 = vpack.c.bf16 %v3748, %v3747
      %v3826 = vpack.c.bf16 %v3750, %v3749
      %v3827 = vpack.c.bf16 %v3752, %v3751
      %v3828 = vpack.c.bf16 %v3754, %v3753
      %v3829 = vpack.c.bf16 %v3756, %v3755
      %v3830 = vpack.c.bf16 %v3758, %v3757
      %v3831 = vpack.c.bf16 %v3760, %v3759
      %v3832 = vpack.c.bf16 %v3762, %v3761
      %v3843 = vunpack.c.l.b16 %v3823
      %v3844 = vunpack.c.h.b16 %v3823
      %v3845 = vunpack.c.l.b16 %v3824
      %v3846 = vunpack.c.h.b16 %v3824
      %v3847 = vunpack.c.l.b16 %v3825
      %v3848 = vunpack.c.h.b16 %v3825
      %v3849 = vunpack.c.l.b16 %v3826
      %v3850 = vunpack.c.h.b16 %v3826
      %v3851 = vunpack.c.l.b16 %v3827
      %v3852 = vunpack.c.h.b16 %v3827
      %v3853 = vunpack.c.l.b16 %v3828
      %v3854 = vunpack.c.h.b16 %v3828
      %v3855 = vunpack.c.l.b16 %v3829
      %v3856 = vunpack.c.h.b16 %v3829
      %v3857 = vunpack.c.l.b16 %v3830
      %v3858 = vunpack.c.h.b16 %v3830
      %v3859 = vunpack.c.l.b16 %v3831
      %v3860 = vunpack.c.h.b16 %v3831
      %v3861 = vunpack.c.l.b16 %v3832
      %v3862 = vunpack.c.h.b16 %v3832
      %v3863 = vpack.c.b16 %v3843, %v3843
      %v3864 = vpack.c.b16 %v3844, %v3844
      %v3865 = vpack.c.b16 %v3845, %v3845
      %v3866 = vpack.c.b16 %v3846, %v3846
      %v3867 = vpack.c.b16 %v3847, %v3847
      %v3868 = vpack.c.b16 %v3848, %v3848
      %v3869 = vpack.c.b16 %v3849, %v3849
      %v3870 = vpack.c.b16 %v3850, %v3850
      %v3871 = vpack.c.b16 %v3851, %v3851
      %v3872 = vpack.c.b16 %v3852, %v3852
      %v3873 = vpack.c.b16 %v3853, %v3853
      %v3874 = vpack.c.b16 %v3854, %v3854
      %v3875 = vpack.c.b16 %v3855, %v3855
      %v3876 = vpack.c.b16 %v3856, %v3856
      %v3877 = vpack.c.b16 %v3857, %v3857
      %v3878 = vpack.c.b16 %v3858, %v3858
      %v3879 = vpack.c.b16 %v3859, %v3859
      %v3880 = vpack.c.b16 %v3860, %v3860
      %v3881 = vpack.c.b16 %v3861, %v3861
      %v3882 = vpack.c.b16 %v3862, %v3862
      %v3884 = vshrl.u32 %v3863, 16
      %v3886 = vrot.slane %v3884, 7
      %v3887 = vshll.u32 %v3863, 16
      %v3889 = vor.u32 %v3886, %v3887
      %v3890 = vrot.slane %v3886, 4
      %v3892 = vshrl.u32 %v3864, 16
      %v3894 = vrot.slane %v3892, 7
      %v3895 = vshll.u32 %v3864, 16
      %v3897 = vor.u32 %v3894, %v3895
      %v3898 = vsel %vm674, %v3890, %v3897
      %v3899 = vrot.slane %v3894, 4
      %v3901 = vshrl.u32 %v3865, 16
      %v3903 = vrot.slane %v3901, 7
      %v3904 = vshll.u32 %v3865, 16
      %v3906 = vor.u32 %v3903, %v3904
      %v3907 = vrot.slane %v3903, 4
      %v3909 = vshrl.u32 %v3866, 16
      %v3911 = vrot.slane %v3909, 7
      %v3912 = vshll.u32 %v3866, 16
      %v3914 = vor.u32 %v3911, %v3912
      %v3915 = vsel %vm674, %v3907, %v3914
      %v3916 = vrot.slane %v3911, 4
      %v3918 = vshrl.u32 %v3867, 16
      %v3920 = vrot.slane %v3918, 7
      %v3921 = vshll.u32 %v3867, 16
      %v3923 = vor.u32 %v3920, %v3921
      %v3924 = vrot.slane %v3920, 4
      %v3926 = vshrl.u32 %v3868, 16
      %v3928 = vrot.slane %v3926, 7
      %v3929 = vshll.u32 %v3868, 16
      %v3931 = vor.u32 %v3928, %v3929
      %v3932 = vsel %vm674, %v3924, %v3931
      %v3933 = vrot.slane %v3928, 4
      %v3935 = vshrl.u32 %v3869, 16
      %v3937 = vrot.slane %v3935, 7
      %v3938 = vshll.u32 %v3869, 16
      %v3940 = vor.u32 %v3937, %v3938
      %v3941 = vrot.slane %v3937, 4
      %v3943 = vshrl.u32 %v3870, 16
      %v3945 = vrot.slane %v3943, 7
      %v3946 = vshll.u32 %v3870, 16
      %v3948 = vor.u32 %v3945, %v3946
      %v3949 = vsel %vm674, %v3941, %v3948
      %v3950 = vrot.slane %v3945, 4
      %v3952 = vshrl.u32 %v3871, 16
      %v3954 = vrot.slane %v3952, 7
      %v3955 = vshll.u32 %v3871, 16
      %v3957 = vor.u32 %v3954, %v3955
      %v3958 = vrot.slane %v3954, 4
      %v3960 = vshrl.u32 %v3872, 16
      %v3962 = vrot.slane %v3960, 7
      %v3963 = vshll.u32 %v3872, 16
      %v3965 = vor.u32 %v3962, %v3963
      %v3966 = vsel %vm674, %v3958, %v3965
      %v3967 = vrot.slane %v3962, 4
      %v3969 = vshrl.u32 %v3873, 16
      %v3971 = vrot.slane %v3969, 7
      %v3972 = vshll.u32 %v3873, 16
      %v3974 = vor.u32 %v3971, %v3972
      %v3975 = vrot.slane %v3971, 4
      %v3977 = vshrl.u32 %v3874, 16
      %v3979 = vrot.slane %v3977, 7
      %v3980 = vshll.u32 %v3874, 16
      %v3982 = vor.u32 %v3979, %v3980
      %v3983 = vsel %vm674, %v3975, %v3982
      %v3984 = vrot.slane %v3979, 4
      %v3986 = vshrl.u32 %v3875, 16
      %v3988 = vrot.slane %v3986, 7
      %v3989 = vshll.u32 %v3875, 16
      %v3991 = vor.u32 %v3988, %v3989
      %v3992 = vrot.slane %v3988, 4
      %v3994 = vshrl.u32 %v3876, 16
      %v3996 = vrot.slane %v3994, 7
      %v3997 = vshll.u32 %v3876, 16
      %v3999 = vor.u32 %v3996, %v3997
      %v4000 = vsel %vm674, %v3992, %v3999
      %v4001 = vrot.slane %v3996, 4
      %v4003 = vshrl.u32 %v3877, 16
      %v4005 = vrot.slane %v4003, 7
      %v4006 = vshll.u32 %v3877, 16
      %v4008 = vor.u32 %v4005, %v4006
      %v4009 = vrot.slane %v4005, 4
      %v4011 = vshrl.u32 %v3878, 16
      %v4013 = vrot.slane %v4011, 7
      %v4014 = vshll.u32 %v3878, 16
      %v4016 = vor.u32 %v4013, %v4014
      %v4017 = vsel %vm674, %v4009, %v4016
      %v4018 = vrot.slane %v4013, 4
      %v4020 = vshrl.u32 %v3879, 16
      %v4022 = vrot.slane %v4020, 7
      %v4023 = vshll.u32 %v3879, 16
      %v4025 = vor.u32 %v4022, %v4023
      %v4026 = vrot.slane %v4022, 4
      %v4028 = vshrl.u32 %v3880, 16
      %v4030 = vrot.slane %v4028, 7
      %v4031 = vshll.u32 %v3880, 16
      %v4033 = vor.u32 %v4030, %v4031
      %v4034 = vsel %vm674, %v4026, %v4033
      %v4035 = vrot.slane %v4030, 4
      %v4037 = vshrl.u32 %v3881, 16
      %v4039 = vrot.slane %v4037, 7
      %v4040 = vshll.u32 %v3881, 16
      %v4042 = vor.u32 %v4039, %v4040
      %v4043 = vrot.slane %v4039, 4
      %v4045 = vshrl.u32 %v3882, 16
      %v4047 = vrot.slane %v4045, 7
      %v4048 = vshll.u32 %v3882, 16
      %v4050 = vor.u32 %v4047, %v4048
      %v4051 = vsel %vm674, %v4043, %v4050
      %v4052 = vrot.slane %v4047, 4
      %v4083 = vld [vmem:[#allocation3] sm:$0xf]
      %v4084 = vsel %vm916, %v3889, %v4083
      %4085 = vst [vmem:[#allocation3] sm:$0xf] %v4084
      %4086 = vst [vmem:[#allocation3 + $0x4] sm:$0xf] %v3898
      %v4087 = vld [vmem:[#allocation3 + $0x8] sm:$0x1]
      %v4088 = vsel %vm538, %v3899, %v4087
      %4089 = vst [vmem:[#allocation3 + $0x8] sm:$0x1] %v4088
      %v4090 = vld [vmem:[#allocation3 + $0xc] sm:$0xf]
      %v4091 = vsel %vm916, %v3906, %v4090
      %4092 = vst [vmem:[#allocation3 + $0xc] sm:$0xf] %v4091
      %4093 = vst [vmem:[#allocation3 + $0x10] sm:$0xf] %v3915
      %v4094 = vld [vmem:[#allocation3 + $0x14] sm:$0x1]
      %v4095 = vsel %vm538, %v3916, %v4094
      %4096 = vst [vmem:[#allocation3 + $0x14] sm:$0x1] %v4095
      %v4097 = vld [vmem:[#allocation3 + $0x18] sm:$0xf]
      %v4098 = vsel %vm916, %v3923, %v4097
      %4099 = vst [vmem:[#allocation3 + $0x18] sm:$0xf] %v4098
      %4100 = vst [vmem:[#allocation3 + $0x1c] sm:$0xf] %v3932
      %v4101 = vld [vmem:[#allocation3 + $0x20] sm:$0x1]
      %v4102 = vsel %vm538, %v3933, %v4101
      %4103 = vst [vmem:[#allocation3 + $0x20] sm:$0x1] %v4102
      %v4104 = vld [vmem:[#allocation3 + $0x24] sm:$0xf]
      %v4105 = vsel %vm916, %v3940, %v4104
      %4106 = vst [vmem:[#allocation3 + $0x24] sm:$0xf] %v4105
      %4107 = vst [vmem:[#allocation3 + $0x28] sm:$0xf] %v3949
      %v4108 = vld [vmem:[#allocation3 + $0x2c] sm:$0x1]
      %v4109 = vsel %vm538, %v3950, %v4108
      %4110 = vst [vmem:[#allocation3 + $0x2c] sm:$0x1] %v4109
      %v4111 = vld [vmem:[#allocation3 + $0x30] sm:$0xf]
      %v4112 = vsel %vm916, %v3957, %v4111
      %4113 = vst [vmem:[#allocation3 + $0x30] sm:$0xf] %v4112
      %4114 = vst [vmem:[#allocation3 + $0x34] sm:$0xf] %v3966
      %v4115 = vld [vmem:[#allocation3 + $0x38] sm:$0x1]
      %v4116 = vsel %vm538, %v3967, %v4115
      %4117 = vst [vmem:[#allocation3 + $0x38] sm:$0x1] %v4116
      %v4118 = vld [vmem:[#allocation3 + $0x3c] sm:$0xf]
      %v4119 = vsel %vm916, %v3974, %v4118
      %4120 = vst [vmem:[#allocation3 + $0x3c] sm:$0xf] %v4119
      %4121 = vst [vmem:[#allocation3 + $0x40] sm:$0xf] %v3983
      %v4122 = vld [vmem:[#allocation3 + $0x44] sm:$0x1]
      %v4123 = vsel %vm538, %v3984, %v4122
      %4124 = vst [vmem:[#allocation3 + $0x44] sm:$0x1] %v4123
      %v4125 = vld [vmem:[#allocation3 + $0x48] sm:$0xf]
      %v4126 = vsel %vm916, %v3991, %v4125
      %4127 = vst [vmem:[#allocation3 + $0x48] sm:$0xf] %v4126
      %4128 = vst [vmem:[#allocation3 + $0x4c] sm:$0xf] %v4000
      %v4129 = vld [vmem:[#allocation3 + $0x50] sm:$0x1]
      %v4130 = vsel %vm538, %v4001, %v4129
      %4131 = vst [vmem:[#allocation3 + $0x50] sm:$0x1] %v4130
      %v4132 = vld [vmem:[#allocation3 + $0x54] sm:$0xf]
      %v4133 = vsel %vm916, %v4008, %v4132
      %4134 = vst [vmem:[#allocation3 + $0x54] sm:$0xf] %v4133
      %4135 = vst [vmem:[#allocation3 + $0x58] sm:$0xf] %v4017
      %v4136 = vld [vmem:[#allocation3 + $0x5c] sm:$0x1]
      %v4137 = vsel %vm538, %v4018, %v4136
      %4138 = vst [vmem:[#allocation3 + $0x5c] sm:$0x1] %v4137
      %v4139 = vld [vmem:[#allocation3 + $0x60] sm:$0xf]
      %v4140 = vsel %vm916, %v4025, %v4139
      %4141 = vst [vmem:[#allocation3 + $0x60] sm:$0xf] %v4140
      %4142 = vst [vmem:[#allocation3 + $0x64] sm:$0xf] %v4034
      %v4143 = vld [vmem:[#allocation3 + $0x68] sm:$0x1]
      %v4144 = vsel %vm538, %v4035, %v4143
      %4145 = vst [vmem:[#allocation3 + $0x68] sm:$0x1] %v4144
      %v4146 = vld [vmem:[#allocation3 + $0x6c] sm:$0xf]
      %v4147 = vsel %vm916, %v4042, %v4146
      %4148 = vst [vmem:[#allocation3 + $0x6c] sm:$0xf] %v4147
      %4149 = vst [vmem:[#allocation3 + $0x70] sm:$0xf] %v4051
      %v4150 = vld [vmem:[#allocation3 + $0x74] sm:$0x1]
      %v4151 = vsel %vm538, %v4052, %v4150
      %4152 = vst [vmem:[#allocation3 + $0x74] sm:$0x1] %v4151
      // Predicated region
      $region49: #{tpu_custom_call.1} parent=47 // pred_check
        %p4153 = pneg %p458
      $region50: #{tpu_custom_call.1} parent=47 // pred_check_branch
        %4155 = sbr.rel (%p4153) target = $region52
      $region51: #{tpu_custom_call.1} parent=47 // pred_region
        %v4156 = vld [vmem:[#allocation3] sm:$0xf]
        %v4157 = vsel %vm916, 0, %v4156
        %4158 = vst [vmem:[#allocation3] sm:$0xf] %v4157
        %4159 = vst [vmem:[#allocation3 + $0x4] sm:$0xf] 0
        %v4160 = vld [vmem:[#allocation3 + $0x8] sm:$0x1]
        %v4161 = vsel %vm538, 0, %v4160
        %4162 = vst [vmem:[#allocation3 + $0x8] sm:$0x1] %v4161
      $region52: #{tpu_custom_call.1} parent=47 // pred_fallthru
        _
      // Predicated region
      $region53: #{tpu_custom_call.1} parent=47 // pred_check
        %p4163 = pneg %p459
      $region54: #{tpu_custom_call.1} parent=47 // pred_check_branch
        %4165 = sbr.rel (%p4163) target = $region56
      $region55: #{tpu_custom_call.1} parent=47 // pred_region
        %s4166 = scalar_lea.vmem [#allocation3], 108
        %v4167 = vld [vmem:[%s4166] sm:$0xf]
        %v4168 = vsel %vm916, 0, %v4167
        %4169 = vst [vmem:[%s4166] sm:$0xf] %v4168
        %4170 = vst [vmem:[%s4166 + $0x4] sm:$0xf] 0
        %v4171 = vld [vmem:[%s4166 + $0x8] sm:$0x1]
        %v4172 = vsel %vm538, 0, %v4171
        %4173 = vst [vmem:[%s4166 + $0x8] sm:$0x1] %v4172
      $region56: #{tpu_custom_call.1} parent=47 // pred_fallthru
        _
      %v4174 = vld [vmem:[#allocation3] sm:$0xf]
      %v4175 = vld [vmem:[#allocation3 + $0x4] sm:$0xf]
      %v4176 = vld [vmem:[#allocation3 + $0xc] sm:$0xf]
      %v4177 = vld [vmem:[#allocation3 + $0x10] sm:$0xf]
      %v4178 = vld [vmem:[#allocation3 + $0x18] sm:$0xf]
      %v4179 = vld [vmem:[#allocation3 + $0x1c] sm:$0xf]
      %v4180 = vld [vmem:[#allocation3 + $0x24] sm:$0xf]
      %v4181 = vld [vmem:[#allocation3 + $0x28] sm:$0xf]
      %v4182 = vld [vmem:[#allocation3 + $0x30] sm:$0xf]
      %v4183 = vld [vmem:[#allocation3 + $0x34] sm:$0xf]
      %v4184 = vld [vmem:[#allocation3 + $0x3c] sm:$0xf]
      %v4185 = vld [vmem:[#allocation3 + $0x40] sm:$0xf]
      %v4186 = vld [vmem:[#allocation3 + $0x48] sm:$0xf]
      %v4187 = vld [vmem:[#allocation3 + $0x4c] sm:$0xf]
      %v4188 = vld [vmem:[#allocation3 + $0x54] sm:$0xf]
      %v4189 = vld [vmem:[#allocation3 + $0x58] sm:$0xf]
      %v4206 = vunpack.c.l.b16 %v4174
      %v4207 = vunpack.c.l.b16 %v4175
      %v4208 = vunpack.c.l.b16 %v4176
      %v4209 = vunpack.c.l.b16 %v4177
      %v4210 = vunpack.c.l.b16 %v4178
      %v4211 = vunpack.c.l.b16 %v4179
      %v4212 = vunpack.c.l.b16 %v4180
      %v4213 = vunpack.c.l.b16 %v4181
      %v4214 = vunpack.c.l.b16 %v4182
      %v4215 = vunpack.c.l.b16 %v4183
      %v4216 = vunpack.c.l.b16 %v4184
      %v4217 = vunpack.c.l.b16 %v4185
      %v4218 = vunpack.c.l.b16 %v4186
      %v4219 = vunpack.c.l.b16 %v4187
      %v4220 = vunpack.c.l.b16 %v4188
      %v4221 = vunpack.c.l.b16 %v4189
      %v4222 = vpack.c.b16 %v4207, %v4206
      %v4223 = vpack.c.b16 %v4209, %v4208
      %v4224 = vpack.c.b16 %v4211, %v4210
      %v4225 = vpack.c.b16 %v4213, %v4212
      %v4226 = vpack.c.b16 %v4215, %v4214
      %v4227 = vpack.c.b16 %v4217, %v4216
      %v4228 = vpack.c.b16 %v4219, %v4218
      %v4229 = vpack.c.b16 %v4221, %v4220
      %4238 = vst [vmem:[#allocation5] sm:$0xff] %v4222
      %4239 = vst [vmem:[#allocation5 + $0x48] sm:$0xff] %v4223
      %4240 = vst [vmem:[#allocation5 + $0x90] sm:$0xff] %v4224
      %4241 = vst [vmem:[#allocation5 + $0xd8] sm:$0xff] %v4225
      %4242 = vst [vmem:[#allocation5 + $0x120] sm:$0xff] %v4226
      %4243 = vst [vmem:[#allocation5 + $0x168] sm:$0xff] %v4227
      %4244 = vst [vmem:[#allocation5 + $0x1b0] sm:$0xff] %v4228
      %4245 = vst [vmem:[#allocation5 + $0x1f8] sm:$0xff] %v4229
      %v4246 = vld [vmem:[#allocation3] sm:$0xf]
      %v4247 = vld [vmem:[#allocation3 + $0x4] sm:$0xf]
      %v4248 = vld [vmem:[#allocation3 + $0x8] sm:$0x1]
      %v4249 = vld [vmem:[#allocation3 + $0xc] sm:$0xf]
      %v4250 = vld [vmem:[#allocation3 + $0x10] sm:$0xf]
      %v4251 = vld [vmem:[#allocation3 + $0x14] sm:$0x1]
      %v4252 = vld [vmem:[#allocation3 + $0x18] sm:$0xf]
      %v4253 = vld [vmem:[#allocation3 + $0x1c] sm:$0xf]
      %v4254 = vld [vmem:[#allocation3 + $0x20] sm:$0x1]
      %v4255 = vld [vmem:[#allocation3 + $0x24] sm:$0xf]
      %v4256 = vld [vmem:[#allocation3 + $0x28] sm:$0xf]
      %v4257 = vld [vmem:[#allocation3 + $0x2c] sm:$0x1]
      %v4258 = vld [vmem:[#allocation3 + $0x30] sm:$0xf]
      %v4259 = vld [vmem:[#allocation3 + $0x34] sm:$0xf]
      %v4260 = vld [vmem:[#allocation3 + $0x38] sm:$0x1]
      %v4261 = vld [vmem:[#allocation3 + $0x3c] sm:$0xf]
      %v4262 = vld [vmem:[#allocation3 + $0x40] sm:$0xf]
      %v4263 = vld [vmem:[#allocation3 + $0x44] sm:$0x1]
      %v4264 = vld [vmem:[#allocation3 + $0x48] sm:$0xf]
      %v4265 = vld [vmem:[#allocation3 + $0x4c] sm:$0xf]
      %v4266 = vld [vmem:[#allocation3 + $0x50] sm:$0x1]
      %v4267 = vld [vmem:[#allocation3 + $0x54] sm:$0xf]
      %v4268 = vld [vmem:[#allocation3 + $0x58] sm:$0xf]
      %v4269 = vld [vmem:[#allocation3 + $0x5c] sm:$0x1]
      %v4294 = vunpack.c.l.b16 %v4246
      %v4295 = vunpack.c.l.b16 %v4247
      %v4296 = vunpack.c.l.b16 %v4248
      %v4297 = vunpack.c.l.b16 %v4249
      %v4298 = vunpack.c.l.b16 %v4250
      %v4299 = vunpack.c.l.b16 %v4251
      %v4300 = vunpack.c.l.b16 %v4252
      %v4301 = vunpack.c.l.b16 %v4253
      %v4302 = vunpack.c.l.b16 %v4254
      %v4303 = vunpack.c.l.b16 %v4255
      %v4304 = vunpack.c.l.b16 %v4256
      %v4305 = vunpack.c.l.b16 %v4257
      %v4306 = vunpack.c.l.b16 %v4258
      %v4307 = vunpack.c.l.b16 %v4259
      %v4308 = vunpack.c.l.b16 %v4260
      %v4309 = vunpack.c.l.b16 %v4261
      %v4310 = vunpack.c.l.b16 %v4262
      %v4311 = vunpack.c.l.b16 %v4263
      %v4312 = vunpack.c.l.b16 %v4264
      %v4313 = vunpack.c.l.b16 %v4265
      %v4314 = vunpack.c.l.b16 %v4266
      %v4315 = vunpack.c.l.b16 %v4267
      %v4316 = vunpack.c.l.b16 %v4268
      %v4317 = vunpack.c.l.b16 %v4269
      %v4318 = vpack.c.b16 %v4295, %v4294
      %v4319 = vpack.c.b16 %v4296, %v4296
      %v4320 = vpack.c.b16 %v4298, %v4297
      %v4321 = vpack.c.b16 %v4299, %v4299
      %v4322 = vpack.c.b16 %v4301, %v4300
      %v4323 = vpack.c.b16 %v4302, %v4302
      %v4324 = vpack.c.b16 %v4304, %v4303
      %v4325 = vpack.c.b16 %v4305, %v4305
      %v4326 = vpack.c.b16 %v4307, %v4306
      %v4327 = vpack.c.b16 %v4308, %v4308
      %v4328 = vpack.c.b16 %v4310, %v4309
      %v4329 = vpack.c.b16 %v4311, %v4311
      %v4330 = vpack.c.b16 %v4313, %v4312
      %v4331 = vpack.c.b16 %v4314, %v4314
      %v4332 = vpack.c.b16 %v4316, %v4315
      %v4333 = vpack.c.b16 %v4317, %v4317
      %v4335 = vshrl.u32 %v4318, 16
      %v4337 = vshll.u32 %v4318, 16
      %v4339 = vrot.slane %v4337, 1
      %v4340 = vor.u32 %v4335, %v4339
      %v4342 = vshll.u32 %v4319, 16
      %v4344 = vrot.slane %v4342, 1
      %v4345 = vsel %vm1201, %v4340, %v4344
      %v4347 = vshrl.u32 %v4320, 16
      %v4349 = vshll.u32 %v4320, 16
      %v4351 = vrot.slane %v4349, 1
      %v4352 = vor.u32 %v4347, %v4351
      %v4354 = vshll.u32 %v4321, 16
      %v4356 = vrot.slane %v4354, 1
      %v4357 = vsel %vm1201, %v4352, %v4356
      %v4359 = vshrl.u32 %v4322, 16
      %v4361 = vshll.u32 %v4322, 16
      %v4363 = vrot.slane %v4361, 1
      %v4364 = vor.u32 %v4359, %v4363
      %v4366 = vshll.u32 %v4323, 16
      %v4368 = vrot.slane %v4366, 1
      %v4369 = vsel %vm1201, %v4364, %v4368
      %v4371 = vshrl.u32 %v4324, 16
      %v4373 = vshll.u32 %v4324, 16
      %v4375 = vrot.slane %v4373, 1
      %v4376 = vor.u32 %v4371, %v4375
      %v4378 = vshll.u32 %v4325, 16
      %v4380 = vrot.slane %v4378, 1
      %v4381 = vsel %vm1201, %v4376, %v4380
      %v4383 = vshrl.u32 %v4326, 16
      %v4385 = vshll.u32 %v4326, 16
      %v4387 = vrot.slane %v4385, 1
      %v4388 = vor.u32 %v4383, %v4387
      %v4390 = vshll.u32 %v4327, 16
      %v4392 = vrot.slane %v4390, 1
      %v4393 = vsel %vm1201, %v4388, %v4392
      %v4395 = vshrl.u32 %v4328, 16
      %v4397 = vshll.u32 %v4328, 16
      %v4399 = vrot.slane %v4397, 1
      %v4400 = vor.u32 %v4395, %v4399
      %v4402 = vshll.u32 %v4329, 16
      %v4404 = vrot.slane %v4402, 1
      %v4405 = vsel %vm1201, %v4400, %v4404
      %v4407 = vshrl.u32 %v4330, 16
      %v4409 = vshll.u32 %v4330, 16
      %v4411 = vrot.slane %v4409, 1
      %v4412 = vor.u32 %v4407, %v4411
      %v4414 = vshll.u32 %v4331, 16
      %v4416 = vrot.slane %v4414, 1
      %v4417 = vsel %vm1201, %v4412, %v4416
      %v4419 = vshrl.u32 %v4332, 16
      %v4421 = vshll.u32 %v4332, 16
      %v4423 = vrot.slane %v4421, 1
      %v4424 = vor.u32 %v4419, %v4423
      %v4426 = vshll.u32 %v4333, 16
      %v4428 = vrot.slane %v4426, 1
      %v4429 = vsel %vm1201, %v4424, %v4428
      %4438 = vst [vmem:[#allocation5 + $0x8] sm:$0xff] %v4345
      %4439 = vst [vmem:[#allocation5 + $0x50] sm:$0xff] %v4357
      %4440 = vst [vmem:[#allocation5 + $0x98] sm:$0xff] %v4369
      %4441 = vst [vmem:[#allocation5 + $0xe0] sm:$0xff] %v4381
      %4442 = vst [vmem:[#allocation5 + $0x128] sm:$0xff] %v4393
      %4443 = vst [vmem:[#allocation5 + $0x170] sm:$0xff] %v4405
      %4444 = vst [vmem:[#allocation5 + $0x1b8] sm:$0xff] %v4417
      %4445 = vst [vmem:[#allocation5 + $0x200] sm:$0xff] %v4429
      %v4446 = vld [vmem:[#allocation3] sm:$0xe]
      %v4447 = vld [vmem:[#allocation3 + $0x4] sm:$0xf]
      %v4448 = vld [vmem:[#allocation3 + $0x8] sm:$0x1]
      %v4449 = vld [vmem:[#allocation3 + $0xc] sm:$0xe]
      %v4450 = vld [vmem:[#allocation3 + $0x10] sm:$0xf]
      %v4451 = vld [vmem:[#allocation3 + $0x14] sm:$0x1]
      %v4452 = vld [vmem:[#allocation3 + $0x18] sm:$0xe]
      %v4453 = vld [vmem:[#allocation3 + $0x1c] sm:$0xf]
      %v4454 = vld [vmem:[#allocation3 + $0x20] sm:$0x1]
      %v4455 = vld [vmem:[#allocation3 + $0x24] sm:$0xe]
      %v4456 = vld [vmem:[#allocation3 + $0x28] sm:$0xf]
      %v4457 = vld [vmem:[#allocation3 + $0x2c] sm:$0x1]
      %v4458 = vld [vmem:[#allocation3 + $0x30] sm:$0xe]
      %v4459 = vld [vmem:[#allocation3 + $0x34] sm:$0xf]
      %v4460 = vld [vmem:[#allocation3 + $0x38] sm:$0x1]
      %v4461 = vld [vmem:[#allocation3 + $0x3c] sm:$0xe]
      %v4462 = vld [vmem:[#allocation3 + $0x40] sm:$0xf]
      %v4463 = vld [vmem:[#allocation3 + $0x44] sm:$0x1]
      %v4464 = vld [vmem:[#allocation3 + $0x48] sm:$0xe]
      %v4465 = vld [vmem:[#allocation3 + $0x4c] sm:$0xf]
      %v4466 = vld [vmem:[#allocation3 + $0x50] sm:$0x1]
      %v4467 = vld [vmem:[#allocation3 + $0x54] sm:$0xe]
      %v4468 = vld [vmem:[#allocation3 + $0x58] sm:$0xf]
      %v4469 = vld [vmem:[#allocation3 + $0x5c] sm:$0x1]
      %v4494 = vunpack.c.l.b16 %v4446
      %v4495 = vunpack.c.l.b16 %v4447
      %v4496 = vunpack.c.l.b16 %v4448
      %v4497 = vunpack.c.l.b16 %v4449
      %v4498 = vunpack.c.l.b16 %v4450
      %v4499 = vunpack.c.l.b16 %v4451
      %v4500 = vunpack.c.l.b16 %v4452
      %v4501 = vunpack.c.l.b16 %v4453
      %v4502 = vunpack.c.l.b16 %v4454
      %v4503 = vunpack.c.l.b16 %v4455
      %v4504 = vunpack.c.l.b16 %v4456
      %v4505 = vunpack.c.l.b16 %v4457
      %v4506 = vunpack.c.l.b16 %v4458
      %v4507 = vunpack.c.l.b16 %v4459
      %v4508 = vunpack.c.l.b16 %v4460
      %v4509 = vunpack.c.l.b16 %v4461
      %v4510 = vunpack.c.l.b16 %v4462
      %v4511 = vunpack.c.l.b16 %v4463
      %v4512 = vunpack.c.l.b16 %v4464
      %v4513 = vunpack.c.l.b16 %v4465
      %v4514 = vunpack.c.l.b16 %v4466
      %v4515 = vunpack.c.l.b16 %v4467
      %v4516 = vunpack.c.l.b16 %v4468
      %v4517 = vunpack.c.l.b16 %v4469
      %v4518 = vpack.c.b16 %v4495, %v4494
      %v4519 = vpack.c.b16 %v4496, %v4496
      %v4520 = vpack.c.b16 %v4498, %v4497
      %v4521 = vpack.c.b16 %v4499, %v4499
      %v4522 = vpack.c.b16 %v4501, %v4500
      %v4523 = vpack.c.b16 %v4502, %v4502
      %v4524 = vpack.c.b16 %v4504, %v4503
      %v4525 = vpack.c.b16 %v4505, %v4505
      %v4526 = vpack.c.b16 %v4507, %v4506
      %v4527 = vpack.c.b16 %v4508, %v4508
      %v4528 = vpack.c.b16 %v4510, %v4509
      %v4529 = vpack.c.b16 %v4511, %v4511
      %v4530 = vpack.c.b16 %v4513, %v4512
      %v4531 = vpack.c.b16 %v4514, %v4514
      %v4532 = vpack.c.b16 %v4516, %v4515
      %v4533 = vpack.c.b16 %v4517, %v4517
      %v4534 = vrot.slane %v4518, 1
      %v4535 = vrot.slane %v4519, 1
      %v4536 = vsel %vm1452, %v4534, %v4535
      %v4537 = vrot.slane %v4520, 1
      %v4538 = vrot.slane %v4521, 1
      %v4539 = vsel %vm1452, %v4537, %v4538
      %v4540 = vrot.slane %v4522, 1
      %v4541 = vrot.slane %v4523, 1
      %v4542 = vsel %vm1452, %v4540, %v4541
      %v4543 = vrot.slane %v4524, 1
      %v4544 = vrot.slane %v4525, 1
      %v4545 = vsel %vm1452, %v4543, %v4544
      %v4546 = vrot.slane %v4526, 1
      %v4547 = vrot.slane %v4527, 1
      %v4548 = vsel %vm1452, %v4546, %v4547
      %v4549 = vrot.slane %v4528, 1
      %v4550 = vrot.slane %v4529, 1
      %v4551 = vsel %vm1452, %v4549, %v4550
      %v4552 = vrot.slane %v4530, 1
      %v4553 = vrot.slane %v4531, 1
      %v4554 = vsel %vm1452, %v4552, %v4553
      %v4555 = vrot.slane %v4532, 1
      %v4556 = vrot.slane %v4533, 1
      %v4557 = vsel %vm1452, %v4555, %v4556
      %4566 = vst [vmem:[#allocation5 + $0x10] sm:$0xff] %v4536
      %4567 = vst [vmem:[#allocation5 + $0x58] sm:$0xff] %v4539
      %4568 = vst [vmem:[#allocation5 + $0xa0] sm:$0xff] %v4542
      %4569 = vst [vmem:[#allocation5 + $0xe8] sm:$0xff] %v4545
      %4570 = vst [vmem:[#allocation5 + $0x130] sm:$0xff] %v4548
      %4571 = vst [vmem:[#allocation5 + $0x178] sm:$0xff] %v4551
      %4572 = vst [vmem:[#allocation5 + $0x1c0] sm:$0xff] %v4554
      %4573 = vst [vmem:[#allocation5 + $0x208] sm:$0xff] %v4557
      %s4574 = scalar_lea.vmem [#allocation3], 12
      %v4575 = vld [vmem:[%s4574] sm:$0xf]
      %v4576 = vld [vmem:[%s4574 + $0x4] sm:$0xf]
      %v4577 = vld [vmem:[%s4574 + $0xc] sm:$0xf]
      %v4578 = vld [vmem:[%s4574 + $0x10] sm:$0xf]
      %v4579 = vld [vmem:[%s4574 + $0x18] sm:$0xf]
      %v4580 = vld [vmem:[%s4574 + $0x1c] sm:$0xf]
      %v4581 = vld [vmem:[%s4574 + $0x24] sm:$0xf]
      %v4582 = vld [vmem:[%s4574 + $0x28] sm:$0xf]
      %v4583 = vld [vmem:[%s4574 + $0x30] sm:$0xf]
      %v4584 = vld [vmem:[%s4574 + $0x34] sm:$0xf]
      %v4585 = vld [vmem:[%s4574 + $0x3c] sm:$0xf]
      %v4586 = vld [vmem:[%s4574 + $0x40] sm:$0xf]
      %v4587 = vld [vmem:[%s4574 + $0x48] sm:$0xf]
      %v4588 = vld [vmem:[%s4574 + $0x4c] sm:$0xf]
      %v4589 = vld [vmem:[%s4574 + $0x54] sm:$0xf]
      %v4590 = vld [vmem:[%s4574 + $0x58] sm:$0xf]
      %v4607 = vunpack.c.l.b16 %v4575
      %v4608 = vunpack.c.l.b16 %v4576
      %v4609 = vunpack.c.l.b16 %v4577
      %v4610 = vunpack.c.l.b16 %v4578
      %v4611 = vunpack.c.l.b16 %v4579
      %v4612 = vunpack.c.l.b16 %v4580
      %v4613 = vunpack.c.l.b16 %v4581
      %v4614 = vunpack.c.l.b16 %v4582
      %v4615 = vunpack.c.l.b16 %v4583
      %v4616 = vunpack.c.l.b16 %v4584
      %v4617 = vunpack.c.l.b16 %v4585
      %v4618 = vunpack.c.l.b16 %v4586
      %v4619 = vunpack.c.l.b16 %v4587
      %v4620 = vunpack.c.l.b16 %v4588
      %v4621 = vunpack.c.l.b16 %v4589
      %v4622 = vunpack.c.l.b16 %v4590
      %v4623 = vpack.c.b16 %v4608, %v4607
      %v4624 = vpack.c.b16 %v4610, %v4609
      %v4625 = vpack.c.b16 %v4612, %v4611
      %v4626 = vpack.c.b16 %v4614, %v4613
      %v4627 = vpack.c.b16 %v4616, %v4615
      %v4628 = vpack.c.b16 %v4618, %v4617
      %v4629 = vpack.c.b16 %v4620, %v4619
      %v4630 = vpack.c.b16 %v4622, %v4621
      %4639 = vst [vmem:[#allocation5 + $0x18] sm:$0xff] %v4623
      %4640 = vst [vmem:[#allocation5 + $0x60] sm:$0xff] %v4624
      %4641 = vst [vmem:[#allocation5 + $0xa8] sm:$0xff] %v4625
      %4642 = vst [vmem:[#allocation5 + $0xf0] sm:$0xff] %v4626
      %4643 = vst [vmem:[#allocation5 + $0x138] sm:$0xff] %v4627
      %4644 = vst [vmem:[#allocation5 + $0x180] sm:$0xff] %v4628
      %4645 = vst [vmem:[#allocation5 + $0x1c8] sm:$0xff] %v4629
      %4646 = vst [vmem:[#allocation5 + $0x210] sm:$0xff] %v4630
      %v4647 = vld [vmem:[%s4574] sm:$0xf]
      %v4648 = vld [vmem:[%s4574 + $0x4] sm:$0xf]
      %v4649 = vld [vmem:[%s4574 + $0x8] sm:$0x1]
      %v4650 = vld [vmem:[%s4574 + $0xc] sm:$0xf]
      %v4651 = vld [vmem:[%s4574 + $0x10] sm:$0xf]
      %v4652 = vld [vmem:[%s4574 + $0x14] sm:$0x1]
      %v4653 = vld [vmem:[%s4574 + $0x18] sm:$0xf]
      %v4654 = vld [vmem:[%s4574 + $0x1c] sm:$0xf]
      %v4655 = vld [vmem:[%s4574 + $0x20] sm:$0x1]
      %v4656 = vld [vmem:[%s4574 + $0x24] sm:$0xf]
      %v4657 = vld [vmem:[%s4574 + $0x28] sm:$0xf]
      %v4658 = vld [vmem:[%s4574 + $0x2c] sm:$0x1]
      %v4659 = vld [vmem:[%s4574 + $0x30] sm:$0xf]
      %v4660 = vld [vmem:[%s4574 + $0x34] sm:$0xf]
      %v4661 = vld [vmem:[%s4574 + $0x38] sm:$0x1]
      %v4662 = vld [vmem:[%s4574 + $0x3c] sm:$0xf]
      %v4663 = vld [vmem:[%s4574 + $0x40] sm:$0xf]
      %v4664 = vld [vmem:[%s4574 + $0x44] sm:$0x1]
      %v4665 = vld [vmem:[%s4574 + $0x48] sm:$0xf]
      %v4666 = vld [vmem:[%s4574 + $0x4c] sm:$0xf]
      %v4667 = vld [vmem:[%s4574 + $0x50] sm:$0x1]
      %v4668 = vld [vmem:[%s4574 + $0x54] sm:$0xf]
      %v4669 = vld [vmem:[%s4574 + $0x58] sm:$0xf]
      %v4670 = vld [vmem:[%s4574 + $0x5c] sm:$0x1]
      %v4695 = vunpack.c.l.b16 %v4647
      %v4696 = vunpack.c.l.b16 %v4648
      %v4697 = vunpack.c.l.b16 %v4649
      %v4698 = vunpack.c.l.b16 %v4650
      %v4699 = vunpack.c.l.b16 %v4651
      %v4700 = vunpack.c.l.b16 %v4652
      %v4701 = vunpack.c.l.b16 %v4653
      %v4702 = vunpack.c.l.b16 %v4654
      %v4703 = vunpack.c.l.b16 %v4655
      %v4704 = vunpack.c.l.b16 %v4656
      %v4705 = vunpack.c.l.b16 %v4657
      %v4706 = vunpack.c.l.b16 %v4658
      %v4707 = vunpack.c.l.b16 %v4659
      %v4708 = vunpack.c.l.b16 %v4660
      %v4709 = vunpack.c.l.b16 %v4661
      %v4710 = vunpack.c.l.b16 %v4662
      %v4711 = vunpack.c.l.b16 %v4663
      %v4712 = vunpack.c.l.b16 %v4664
      %v4713 = vunpack.c.l.b16 %v4665
      %v4714 = vunpack.c.l.b16 %v4666
      %v4715 = vunpack.c.l.b16 %v4667
      %v4716 = vunpack.c.l.b16 %v4668
      %v4717 = vunpack.c.l.b16 %v4669
      %v4718 = vunpack.c.l.b16 %v4670
      %v4719 = vpack.c.b16 %v4696, %v4695
      %v4720 = vpack.c.b16 %v4697, %v4697
      %v4721 = vpack.c.b16 %v4699, %v4698
      %v4722 = vpack.c.b16 %v4700, %v4700
      %v4723 = vpack.c.b16 %v4702, %v4701
      %v4724 = vpack.c.b16 %v4703, %v4703
      %v4725 = vpack.c.b16 %v4705, %v4704
      %v4726 = vpack.c.b16 %v4706, %v4706
      %v4727 = vpack.c.b16 %v4708, %v4707
      %v4728 = vpack.c.b16 %v4709, %v4709
      %v4729 = vpack.c.b16 %v4711, %v4710
      %v4730 = vpack.c.b16 %v4712, %v4712
      %v4731 = vpack.c.b16 %v4714, %v4713
      %v4732 = vpack.c.b16 %v4715, %v4715
      %v4733 = vpack.c.b16 %v4717, %v4716
      %v4734 = vpack.c.b16 %v4718, %v4718
      %v4736 = vshrl.u32 %v4719, 16
      %v4738 = vshll.u32 %v4719, 16
      %v4740 = vrot.slane %v4738, 1
      %v4741 = vor.u32 %v4736, %v4740
      %v4743 = vshll.u32 %v4720, 16
      %v4745 = vrot.slane %v4743, 1
      %v4746 = vsel %vm1201, %v4741, %v4745
      %v4748 = vshrl.u32 %v4721, 16
      %v4750 = vshll.u32 %v4721, 16
      %v4752 = vrot.slane %v4750, 1
      %v4753 = vor.u32 %v4748, %v4752
      %v4755 = vshll.u32 %v4722, 16
      %v4757 = vrot.slane %v4755, 1
      %v4758 = vsel %vm1201, %v4753, %v4757
      %v4760 = vshrl.u32 %v4723, 16
      %v4762 = vshll.u32 %v4723, 16
      %v4764 = vrot.slane %v4762, 1
      %v4765 = vor.u32 %v4760, %v4764
      %v4767 = vshll.u32 %v4724, 16
      %v4769 = vrot.slane %v4767, 1
      %v4770 = vsel %vm1201, %v4765, %v4769
      %v4772 = vshrl.u32 %v4725, 16
      %v4774 = vshll.u32 %v4725, 16
      %v4776 = vrot.slane %v4774, 1
      %v4777 = vor.u32 %v4772, %v4776
      %v4779 = vshll.u32 %v4726, 16
      %v4781 = vrot.slane %v4779, 1
      %v4782 = vsel %vm1201, %v4777, %v4781
      %v4784 = vshrl.u32 %v4727, 16
      %v4786 = vshll.u32 %v4727, 16
      %v4788 = vrot.slane %v4786, 1
      %v4789 = vor.u32 %v4784, %v4788
      %v4791 = vshll.u32 %v4728, 16
      %v4793 = vrot.slane %v4791, 1
      %v4794 = vsel %vm1201, %v4789, %v4793
      %v4796 = vshrl.u32 %v4729, 16
      %v4798 = vshll.u32 %v4729, 16
      %v4800 = vrot.slane %v4798, 1
      %v4801 = vor.u32 %v4796, %v4800
      %v4803 = vshll.u32 %v4730, 16
      %v4805 = vrot.slane %v4803, 1
      %v4806 = vsel %vm1201, %v4801, %v4805
      %v4808 = vshrl.u32 %v4731, 16
      %v4810 = vshll.u32 %v4731, 16
      %v4812 = vrot.slane %v4810, 1
      %v4813 = vor.u32 %v4808, %v4812
      %v4815 = vshll.u32 %v4732, 16
      %v4817 = vrot.slane %v4815, 1
      %v4818 = vsel %vm1201, %v4813, %v4817
      %v4820 = vshrl.u32 %v4733, 16
      %v4822 = vshll.u32 %v4733, 16
      %v4824 = vrot.slane %v4822, 1
      %v4825 = vor.u32 %v4820, %v4824
      %v4827 = vshll.u32 %v4734, 16
      %v4829 = vrot.slane %v4827, 1
      %v4830 = vsel %vm1201, %v4825, %v4829
      %4839 = vst [vmem:[#allocation5 + $0x20] sm:$0xff] %v4746
      %4840 = vst [vmem:[#allocation5 + $0x68] sm:$0xff] %v4758
      %4841 = vst [vmem:[#allocation5 + $0xb0] sm:$0xff] %v4770
      %4842 = vst [vmem:[#allocation5 + $0xf8] sm:$0xff] %v4782
      %4843 = vst [vmem:[#allocation5 + $0x140] sm:$0xff] %v4794
      %4844 = vst [vmem:[#allocation5 + $0x188] sm:$0xff] %v4806
      %4845 = vst [vmem:[#allocation5 + $0x1d0] sm:$0xff] %v4818
      %4846 = vst [vmem:[#allocation5 + $0x218] sm:$0xff] %v4830
      %v4847 = vld [vmem:[%s4574] sm:$0xe]
      %v4848 = vld [vmem:[%s4574 + $0x4] sm:$0xf]
      %v4849 = vld [vmem:[%s4574 + $0x8] sm:$0x1]
      %v4850 = vld [vmem:[%s4574 + $0xc] sm:$0xe]
      %v4851 = vld [vmem:[%s4574 + $0x10] sm:$0xf]
      %v4852 = vld [vmem:[%s4574 + $0x14] sm:$0x1]
      %v4853 = vld [vmem:[%s4574 + $0x18] sm:$0xe]
      %v4854 = vld [vmem:[%s4574 + $0x1c] sm:$0xf]
      %v4855 = vld [vmem:[%s4574 + $0x20] sm:$0x1]
      %v4856 = vld [vmem:[%s4574 + $0x24] sm:$0xe]
      %v4857 = vld [vmem:[%s4574 + $0x28] sm:$0xf]
      %v4858 = vld [vmem:[%s4574 + $0x2c] sm:$0x1]
      %v4859 = vld [vmem:[%s4574 + $0x30] sm:$0xe]
      %v4860 = vld [vmem:[%s4574 + $0x34] sm:$0xf]
      %v4861 = vld [vmem:[%s4574 + $0x38] sm:$0x1]
      %v4862 = vld [vmem:[%s4574 + $0x3c] sm:$0xe]
      %v4863 = vld [vmem:[%s4574 + $0x40] sm:$0xf]
      %v4864 = vld [vmem:[%s4574 + $0x44] sm:$0x1]
      %v4865 = vld [vmem:[%s4574 + $0x48] sm:$0xe]
      %v4866 = vld [vmem:[%s4574 + $0x4c] sm:$0xf]
      %v4867 = vld [vmem:[%s4574 + $0x50] sm:$0x1]
      %v4868 = vld [vmem:[%s4574 + $0x54] sm:$0xe]
      %v4869 = vld [vmem:[%s4574 + $0x58] sm:$0xf]
      %v4870 = vld [vmem:[%s4574 + $0x5c] sm:$0x1]
      %v4895 = vunpack.c.l.b16 %v4847
      %v4896 = vunpack.c.l.b16 %v4848
      %v4897 = vunpack.c.l.b16 %v4849
      %v4898 = vunpack.c.l.b16 %v4850
      %v4899 = vunpack.c.l.b16 %v4851
      %v4900 = vunpack.c.l.b16 %v4852
      %v4901 = vunpack.c.l.b16 %v4853
      %v4902 = vunpack.c.l.b16 %v4854
      %v4903 = vunpack.c.l.b16 %v4855
      %v4904 = vunpack.c.l.b16 %v4856
      %v4905 = vunpack.c.l.b16 %v4857
      %v4906 = vunpack.c.l.b16 %v4858
      %v4907 = vunpack.c.l.b16 %v4859
      %v4908 = vunpack.c.l.b16 %v4860
      %v4909 = vunpack.c.l.b16 %v4861
      %v4910 = vunpack.c.l.b16 %v4862
      %v4911 = vunpack.c.l.b16 %v4863
      %v4912 = vunpack.c.l.b16 %v4864
      %v4913 = vunpack.c.l.b16 %v4865
      %v4914 = vunpack.c.l.b16 %v4866
      %v4915 = vunpack.c.l.b16 %v4867
      %v4916 = vunpack.c.l.b16 %v4868
      %v4917 = vunpack.c.l.b16 %v4869
      %v4918 = vunpack.c.l.b16 %v4870
      %v4919 = vpack.c.b16 %v4896, %v4895
      %v4920 = vpack.c.b16 %v4897, %v4897
      %v4921 = vpack.c.b16 %v4899, %v4898
      %v4922 = vpack.c.b16 %v4900, %v4900
      %v4923 = vpack.c.b16 %v4902, %v4901
      %v4924 = vpack.c.b16 %v4903, %v4903
      %v4925 = vpack.c.b16 %v4905, %v4904
      %v4926 = vpack.c.b16 %v4906, %v4906
      %v4927 = vpack.c.b16 %v4908, %v4907
      %v4928 = vpack.c.b16 %v4909, %v4909
      %v4929 = vpack.c.b16 %v4911, %v4910
      %v4930 = vpack.c.b16 %v4912, %v4912
      %v4931 = vpack.c.b16 %v4914, %v4913
      %v4932 = vpack.c.b16 %v4915, %v4915
      %v4933 = vpack.c.b16 %v4917, %v4916
      %v4934 = vpack.c.b16 %v4918, %v4918
      %v4935 = vrot.slane %v4919, 1
      %v4936 = vrot.slane %v4920, 1
      %v4937 = vsel %vm1452, %v4935, %v4936
      %v4938 = vrot.slane %v4921, 1
      %v4939 = vrot.slane %v4922, 1
      %v4940 = vsel %vm1452, %v4938, %v4939
      %v4941 = vrot.slane %v4923, 1
      %v4942 = vrot.slane %v4924, 1
      %v4943 = vsel %vm1452, %v4941, %v4942
      %v4944 = vrot.slane %v4925, 1
      %v4945 = vrot.slane %v4926, 1
      %v4946 = vsel %vm1452, %v4944, %v4945
      %v4947 = vrot.slane %v4927, 1
      %v4948 = vrot.slane %v4928, 1
      %v4949 = vsel %vm1452, %v4947, %v4948
      %v4950 = vrot.slane %v4929, 1
      %v4951 = vrot.slane %v4930, 1
      %v4952 = vsel %vm1452, %v4950, %v4951
      %v4953 = vrot.slane %v4931, 1
      %v4954 = vrot.slane %v4932, 1
      %v4955 = vsel %vm1452, %v4953, %v4954
      %v4956 = vrot.slane %v4933, 1
      %v4957 = vrot.slane %v4934, 1
      %v4958 = vsel %vm1452, %v4956, %v4957
      %4967 = vst [vmem:[#allocation5 + $0x28] sm:$0xff] %v4937
      %4968 = vst [vmem:[#allocation5 + $0x70] sm:$0xff] %v4940
      %4969 = vst [vmem:[#allocation5 + $0xb8] sm:$0xff] %v4943
      %4970 = vst [vmem:[#allocation5 + $0x100] sm:$0xff] %v4946
      %4971 = vst [vmem:[#allocation5 + $0x148] sm:$0xff] %v4949
      %4972 = vst [vmem:[#allocation5 + $0x190] sm:$0xff] %v4952
      %4973 = vst [vmem:[#allocation5 + $0x1d8] sm:$0xff] %v4955
      %4974 = vst [vmem:[#allocation5 + $0x220] sm:$0xff] %v4958
      %s4975 = scalar_lea.vmem [#allocation3], 24
      %v4976 = vld [vmem:[%s4975] sm:$0xf]
      %v4977 = vld [vmem:[%s4975 + $0x4] sm:$0xf]
      %v4978 = vld [vmem:[%s4975 + $0xc] sm:$0xf]
      %v4979 = vld [vmem:[%s4975 + $0x10] sm:$0xf]
      %v4980 = vld [vmem:[%s4975 + $0x18] sm:$0xf]
      %v4981 = vld [vmem:[%s4975 + $0x1c] sm:$0xf]
      %v4982 = vld [vmem:[%s4975 + $0x24] sm:$0xf]
      %v4983 = vld [vmem:[%s4975 + $0x28] sm:$0xf]
      %v4984 = vld [vmem:[%s4975 + $0x30] sm:$0xf]
      %v4985 = vld [vmem:[%s4975 + $0x34] sm:$0xf]
      %v4986 = vld [vmem:[%s4975 + $0x3c] sm:$0xf]
      %v4987 = vld [vmem:[%s4975 + $0x40] sm:$0xf]
      %v4988 = vld [vmem:[%s4975 + $0x48] sm:$0xf]
      %v4989 = vld [vmem:[%s4975 + $0x4c] sm:$0xf]
      %v4990 = vld [vmem:[%s4975 + $0x54] sm:$0xf]
      %v4991 = vld [vmem:[%s4975 + $0x58] sm:$0xf]
      %v5008 = vunpack.c.l.b16 %v4976
      %v5009 = vunpack.c.l.b16 %v4977
      %v5010 = vunpack.c.l.b16 %v4978
      %v5011 = vunpack.c.l.b16 %v4979
      %v5012 = vunpack.c.l.b16 %v4980
      %v5013 = vunpack.c.l.b16 %v4981
      %v5014 = vunpack.c.l.b16 %v4982
      %v5015 = vunpack.c.l.b16 %v4983
      %v5016 = vunpack.c.l.b16 %v4984
      %v5017 = vunpack.c.l.b16 %v4985
      %v5018 = vunpack.c.l.b16 %v4986
      %v5019 = vunpack.c.l.b16 %v4987
      %v5020 = vunpack.c.l.b16 %v4988
      %v5021 = vunpack.c.l.b16 %v4989
      %v5022 = vunpack.c.l.b16 %v4990
      %v5023 = vunpack.c.l.b16 %v4991
      %v5024 = vpack.c.b16 %v5009, %v5008
      %v5025 = vpack.c.b16 %v5011, %v5010
      %v5026 = vpack.c.b16 %v5013, %v5012
      %v5027 = vpack.c.b16 %v5015, %v5014
      %v5028 = vpack.c.b16 %v5017, %v5016
      %v5029 = vpack.c.b16 %v5019, %v5018
      %v5030 = vpack.c.b16 %v5021, %v5020
      %v5031 = vpack.c.b16 %v5023, %v5022
      %5040 = vst [vmem:[#allocation5 + $0x30] sm:$0xff] %v5024
      %5041 = vst [vmem:[#allocation5 + $0x78] sm:$0xff] %v5025
      %5042 = vst [vmem:[#allocation5 + $0xc0] sm:$0xff] %v5026
      %5043 = vst [vmem:[#allocation5 + $0x108] sm:$0xff] %v5027
      %5044 = vst [vmem:[#allocation5 + $0x150] sm:$0xff] %v5028
      %5045 = vst [vmem:[#allocation5 + $0x198] sm:$0xff] %v5029
      %5046 = vst [vmem:[#allocation5 + $0x1e0] sm:$0xff] %v5030
      %5047 = vst [vmem:[#allocation5 + $0x228] sm:$0xff] %v5031
      %v5048 = vld [vmem:[%s4975] sm:$0xf]
      %v5049 = vld [vmem:[%s4975 + $0x4] sm:$0xf]
      %v5050 = vld [vmem:[%s4975 + $0x8] sm:$0x1]
      %v5051 = vld [vmem:[%s4975 + $0xc] sm:$0xf]
      %v5052 = vld [vmem:[%s4975 + $0x10] sm:$0xf]
      %v5053 = vld [vmem:[%s4975 + $0x14] sm:$0x1]
      %v5054 = vld [vmem:[%s4975 + $0x18] sm:$0xf]
      %v5055 = vld [vmem:[%s4975 + $0x1c] sm:$0xf]
      %v5056 = vld [vmem:[%s4975 + $0x20] sm:$0x1]
      %v5057 = vld [vmem:[%s4975 + $0x24] sm:$0xf]
      %v5058 = vld [vmem:[%s4975 + $0x28] sm:$0xf]
      %v5059 = vld [vmem:[%s4975 + $0x2c] sm:$0x1]
      %v5060 = vld [vmem:[%s4975 + $0x30] sm:$0xf]
      %v5061 = vld [vmem:[%s4975 + $0x34] sm:$0xf]
      %v5062 = vld [vmem:[%s4975 + $0x38] sm:$0x1]
      %v5063 = vld [vmem:[%s4975 + $0x3c] sm:$0xf]
      %v5064 = vld [vmem:[%s4975 + $0x40] sm:$0xf]
      %v5065 = vld [vmem:[%s4975 + $0x44] sm:$0x1]
      %v5066 = vld [vmem:[%s4975 + $0x48] sm:$0xf]
      %v5067 = vld [vmem:[%s4975 + $0x4c] sm:$0xf]
      %v5068 = vld [vmem:[%s4975 + $0x50] sm:$0x1]
      %v5069 = vld [vmem:[%s4975 + $0x54] sm:$0xf]
      %v5070 = vld [vmem:[%s4975 + $0x58] sm:$0xf]
      %v5071 = vld [vmem:[%s4975 + $0x5c] sm:$0x1]
      %v5096 = vunpack.c.l.b16 %v5048
      %v5097 = vunpack.c.l.b16 %v5049
      %v5098 = vunpack.c.l.b16 %v5050
      %v5099 = vunpack.c.l.b16 %v5051
      %v5100 = vunpack.c.l.b16 %v5052
      %v5101 = vunpack.c.l.b16 %v5053
      %v5102 = vunpack.c.l.b16 %v5054
      %v5103 = vunpack.c.l.b16 %v5055
      %v5104 = vunpack.c.l.b16 %v5056
      %v5105 = vunpack.c.l.b16 %v5057
      %v5106 = vunpack.c.l.b16 %v5058
      %v5107 = vunpack.c.l.b16 %v5059
      %v5108 = vunpack.c.l.b16 %v5060
      %v5109 = vunpack.c.l.b16 %v5061
      %v5110 = vunpack.c.l.b16 %v5062
      %v5111 = vunpack.c.l.b16 %v5063
      %v5112 = vunpack.c.l.b16 %v5064
      %v5113 = vunpack.c.l.b16 %v5065
      %v5114 = vunpack.c.l.b16 %v5066
      %v5115 = vunpack.c.l.b16 %v5067
      %v5116 = vunpack.c.l.b16 %v5068
      %v5117 = vunpack.c.l.b16 %v5069
      %v5118 = vunpack.c.l.b16 %v5070
      %v5119 = vunpack.c.l.b16 %v5071
      %v5120 = vpack.c.b16 %v5097, %v5096
      %v5121 = vpack.c.b16 %v5098, %v5098
      %v5122 = vpack.c.b16 %v5100, %v5099
      %v5123 = vpack.c.b16 %v5101, %v5101
      %v5124 = vpack.c.b16 %v5103, %v5102
      %v5125 = vpack.c.b16 %v5104, %v5104
      %v5126 = vpack.c.b16 %v5106, %v5105
      %v5127 = vpack.c.b16 %v5107, %v5107
      %v5128 = vpack.c.b16 %v5109, %v5108
      %v5129 = vpack.c.b16 %v5110, %v5110
      %v5130 = vpack.c.b16 %v5112, %v5111
      %v5131 = vpack.c.b16 %v5113, %v5113
      %v5132 = vpack.c.b16 %v5115, %v5114
      %v5133 = vpack.c.b16 %v5116, %v5116
      %v5134 = vpack.c.b16 %v5118, %v5117
      %v5135 = vpack.c.b16 %v5119, %v5119
      %v5137 = vshrl.u32 %v5120, 16
      %v5139 = vshll.u32 %v5120, 16
      %v5141 = vrot.slane %v5139, 1
      %v5142 = vor.u32 %v5137, %v5141
      %v5144 = vshll.u32 %v5121, 16
      %v5146 = vrot.slane %v5144, 1
      %v5147 = vsel %vm1201, %v5142, %v5146
      %v5149 = vshrl.u32 %v5122, 16
      %v5151 = vshll.u32 %v5122, 16
      %v5153 = vrot.slane %v5151, 1
      %v5154 = vor.u32 %v5149, %v5153
      %v5156 = vshll.u32 %v5123, 16
      %v5158 = vrot.slane %v5156, 1
      %v5159 = vsel %vm1201, %v5154, %v5158
      %v5161 = vshrl.u32 %v5124, 16
      %v5163 = vshll.u32 %v5124, 16
      %v5165 = vrot.slane %v5163, 1
      %v5166 = vor.u32 %v5161, %v5165
      %v5168 = vshll.u32 %v5125, 16
      %v5170 = vrot.slane %v5168, 1
      %v5171 = vsel %vm1201, %v5166, %v5170
      %v5173 = vshrl.u32 %v5126, 16
      %v5175 = vshll.u32 %v5126, 16
      %v5177 = vrot.slane %v5175, 1
      %v5178 = vor.u32 %v5173, %v5177
      %v5180 = vshll.u32 %v5127, 16
      %v5182 = vrot.slane %v5180, 1
      %v5183 = vsel %vm1201, %v5178, %v5182
      %v5185 = vshrl.u32 %v5128, 16
      %v5187 = vshll.u32 %v5128, 16
      %v5189 = vrot.slane %v5187, 1
      %v5190 = vor.u32 %v5185, %v5189
      %v5192 = vshll.u32 %v5129, 16
      %v5194 = vrot.slane %v5192, 1
      %v5195 = vsel %vm1201, %v5190, %v5194
      %v5197 = vshrl.u32 %v5130, 16
      %v5199 = vshll.u32 %v5130, 16
      %v5201 = vrot.slane %v5199, 1
      %v5202 = vor.u32 %v5197, %v5201
      %v5204 = vshll.u32 %v5131, 16
      %v5206 = vrot.slane %v5204, 1
      %v5207 = vsel %vm1201, %v5202, %v5206
      %v5209 = vshrl.u32 %v5132, 16
      %v5211 = vshll.u32 %v5132, 16
      %v5213 = vrot.slane %v5211, 1
      %v5214 = vor.u32 %v5209, %v5213
      %v5216 = vshll.u32 %v5133, 16
      %v5218 = vrot.slane %v5216, 1
      %v5219 = vsel %vm1201, %v5214, %v5218
      %v5221 = vshrl.u32 %v5134, 16
      %v5223 = vshll.u32 %v5134, 16
      %v5225 = vrot.slane %v5223, 1
      %v5226 = vor.u32 %v5221, %v5225
      %v5228 = vshll.u32 %v5135, 16
      %v5230 = vrot.slane %v5228, 1
      %v5231 = vsel %vm1201, %v5226, %v5230
      %5240 = vst [vmem:[#allocation5 + $0x38] sm:$0xff] %v5147
      %5241 = vst [vmem:[#allocation5 + $0x80] sm:$0xff] %v5159
      %5242 = vst [vmem:[#allocation5 + $0xc8] sm:$0xff] %v5171
      %5243 = vst [vmem:[#allocation5 + $0x110] sm:$0xff] %v5183
      %5244 = vst [vmem:[#allocation5 + $0x158] sm:$0xff] %v5195
      %5245 = vst [vmem:[#allocation5 + $0x1a0] sm:$0xff] %v5207
      %5246 = vst [vmem:[#allocation5 + $0x1e8] sm:$0xff] %v5219
      %5247 = vst [vmem:[#allocation5 + $0x230] sm:$0xff] %v5231
      %v5248 = vld [vmem:[%s4975] sm:$0xe]
      %v5249 = vld [vmem:[%s4975 + $0x4] sm:$0xf]
      %v5250 = vld [vmem:[%s4975 + $0x8] sm:$0x1]
      %v5251 = vld [vmem:[%s4975 + $0xc] sm:$0xe]
      %v5252 = vld [vmem:[%s4975 + $0x10] sm:$0xf]
      %v5253 = vld [vmem:[%s4975 + $0x14] sm:$0x1]
      %v5254 = vld [vmem:[%s4975 + $0x18] sm:$0xe]
      %v5255 = vld [vmem:[%s4975 + $0x1c] sm:$0xf]
      %v5256 = vld [vmem:[%s4975 + $0x20] sm:$0x1]
      %v5257 = vld [vmem:[%s4975 + $0x24] sm:$0xe]
      %v5258 = vld [vmem:[%s4975 + $0x28] sm:$0xf]
      %v5259 = vld [vmem:[%s4975 + $0x2c] sm:$0x1]
      %v5260 = vld [vmem:[%s4975 + $0x30] sm:$0xe]
      %v5261 = vld [vmem:[%s4975 + $0x34] sm:$0xf]
      %v5262 = vld [vmem:[%s4975 + $0x38] sm:$0x1]
      %v5263 = vld [vmem:[%s4975 + $0x3c] sm:$0xe]
      %v5264 = vld [vmem:[%s4975 + $0x40] sm:$0xf]
      %v5265 = vld [vmem:[%s4975 + $0x44] sm:$0x1]
      %v5266 = vld [vmem:[%s4975 + $0x48] sm:$0xe]
      %v5267 = vld [vmem:[%s4975 + $0x4c] sm:$0xf]
      %v5268 = vld [vmem:[%s4975 + $0x50] sm:$0x1]
      %v5269 = vld [vmem:[%s4975 + $0x54] sm:$0xe]
      %v5270 = vld [vmem:[%s4975 + $0x58] sm:$0xf]
      %v5271 = vld [vmem:[%s4975 + $0x5c] sm:$0x1]
      %v5296 = vunpack.c.l.b16 %v5248
      %v5297 = vunpack.c.l.b16 %v5249
      %v5298 = vunpack.c.l.b16 %v5250
      %v5299 = vunpack.c.l.b16 %v5251
      %v5300 = vunpack.c.l.b16 %v5252
      %v5301 = vunpack.c.l.b16 %v5253
      %v5302 = vunpack.c.l.b16 %v5254
      %v5303 = vunpack.c.l.b16 %v5255
      %v5304 = vunpack.c.l.b16 %v5256
      %v5305 = vunpack.c.l.b16 %v5257
      %v5306 = vunpack.c.l.b16 %v5258
      %v5307 = vunpack.c.l.b16 %v5259
      %v5308 = vunpack.c.l.b16 %v5260
      %v5309 = vunpack.c.l.b16 %v5261
      %v5310 = vunpack.c.l.b16 %v5262
      %v5311 = vunpack.c.l.b16 %v5263
      %v5312 = vunpack.c.l.b16 %v5264
      %v5313 = vunpack.c.l.b16 %v5265
      %v5314 = vunpack.c.l.b16 %v5266
      %v5315 = vunpack.c.l.b16 %v5267
      %v5316 = vunpack.c.l.b16 %v5268
      %v5317 = vunpack.c.l.b16 %v5269
      %v5318 = vunpack.c.l.b16 %v5270
      %v5319 = vunpack.c.l.b16 %v5271
      %v5320 = vpack.c.b16 %v5297, %v5296
      %v5321 = vpack.c.b16 %v5298, %v5298
      %v5322 = vpack.c.b16 %v5300, %v5299
      %v5323 = vpack.c.b16 %v5301, %v5301
      %v5324 = vpack.c.b16 %v5303, %v5302
      %v5325 = vpack.c.b16 %v5304, %v5304
      %v5326 = vpack.c.b16 %v5306, %v5305
      %v5327 = vpack.c.b16 %v5307, %v5307
      %v5328 = vpack.c.b16 %v5309, %v5308
      %v5329 = vpack.c.b16 %v5310, %v5310
      %v5330 = vpack.c.b16 %v5312, %v5311
      %v5331 = vpack.c.b16 %v5313, %v5313
      %v5332 = vpack.c.b16 %v5315, %v5314
      %v5333 = vpack.c.b16 %v5316, %v5316
      %v5334 = vpack.c.b16 %v5318, %v5317
      %v5335 = vpack.c.b16 %v5319, %v5319
      %v5336 = vrot.slane %v5320, 1
      %v5337 = vrot.slane %v5321, 1
      %v5338 = vsel %vm1452, %v5336, %v5337
      %v5339 = vrot.slane %v5322, 1
      %v5340 = vrot.slane %v5323, 1
      %v5341 = vsel %vm1452, %v5339, %v5340
      %v5342 = vrot.slane %v5324, 1
      %v5343 = vrot.slane %v5325, 1
      %v5344 = vsel %vm1452, %v5342, %v5343
      %v5345 = vrot.slane %v5326, 1
      %v5346 = vrot.slane %v5327, 1
      %v5347 = vsel %vm1452, %v5345, %v5346
      %v5348 = vrot.slane %v5328, 1
      %v5349 = vrot.slane %v5329, 1
      %v5350 = vsel %vm1452, %v5348, %v5349
      %v5351 = vrot.slane %v5330, 1
      %v5352 = vrot.slane %v5331, 1
      %v5353 = vsel %vm1452, %v5351, %v5352
      %v5354 = vrot.slane %v5332, 1
      %v5355 = vrot.slane %v5333, 1
      %v5356 = vsel %vm1452, %v5354, %v5355
      %v5357 = vrot.slane %v5334, 1
      %v5358 = vrot.slane %v5335, 1
      %v5359 = vsel %vm1452, %v5357, %v5358
      %5368 = vst [vmem:[#allocation5 + $0x40] sm:$0xff] %v5338
      %5369 = vst [vmem:[#allocation5 + $0x88] sm:$0xff] %v5341
      %5370 = vst [vmem:[#allocation5 + $0xd0] sm:$0xff] %v5344
      %5371 = vst [vmem:[#allocation5 + $0x118] sm:$0xff] %v5347
      %5372 = vst [vmem:[#allocation5 + $0x160] sm:$0xff] %v5350
      %5373 = vst [vmem:[#allocation5 + $0x1a8] sm:$0xff] %v5353
      %5374 = vst [vmem:[#allocation5 + $0x1f0] sm:$0xff] %v5356
      %5375 = vst [vmem:[#allocation5 + $0x238] sm:$0xff] %v5359
      %v5376 = vld [vmem:[#allocation5] sm:$0xff]
      %v5377 = vld [vmem:[#allocation5 + $0x8] sm:$0xff]
      %v5378 = vld [vmem:[#allocation5 + $0x10] sm:$0xff]
      %v5379 = vld [vmem:[#allocation5 + $0x18] sm:$0xff]
      %v5380 = vld [vmem:[#allocation5 + $0x20] sm:$0xff]
      %v5381 = vld [vmem:[#allocation5 + $0x28] sm:$0xff]
      %v5382 = vld [vmem:[#allocation5 + $0x30] sm:$0xff]
      %v5383 = vld [vmem:[#allocation5 + $0x38] sm:$0xff]
      %v5384 = vld [vmem:[#allocation5 + $0x40] sm:$0xff]
      %v5385 = vld [vmem:[#allocation5 + $0x48] sm:$0xff]
      %v5386 = vld [vmem:[#allocation5 + $0x50] sm:$0xff]
      %v5387 = vld [vmem:[#allocation5 + $0x58] sm:$0xff]
      %v5388 = vld [vmem:[#allocation5 + $0x60] sm:$0xff]
      %v5389 = vld [vmem:[#allocation5 + $0x68] sm:$0xff]
      %v5390 = vld [vmem:[#allocation5 + $0x70] sm:$0xff]
      %v5391 = vld [vmem:[#allocation5 + $0x78] sm:$0xff]
      %v5392 = vld [vmem:[#allocation5 + $0x80] sm:$0xff]
      %v5393 = vld [vmem:[#allocation5 + $0x88] sm:$0xff]
      %v5394 = vld [vmem:[#allocation5 + $0x90] sm:$0xff]
      %v5395 = vld [vmem:[#allocation5 + $0x98] sm:$0xff]
      %v5396 = vld [vmem:[#allocation5 + $0xa0] sm:$0xff]
      %v5397 = vld [vmem:[#allocation5 + $0xa8] sm:$0xff]
      %v5398 = vld [vmem:[#allocation5 + $0xb0] sm:$0xff]
      %v5399 = vld [vmem:[#allocation5 + $0xb8] sm:$0xff]
      %v5400 = vld [vmem:[#allocation5 + $0xc0] sm:$0xff]
      %v5401 = vld [vmem:[#allocation5 + $0xc8] sm:$0xff]
      %v5402 = vld [vmem:[#allocation5 + $0xd0] sm:$0xff]
      %v5403 = vld [vmem:[#allocation5 + $0xd8] sm:$0xff]
      %v5404 = vld [vmem:[#allocation5 + $0xe0] sm:$0xff]
      %v5405 = vld [vmem:[#allocation5 + $0xe8] sm:$0xff]
      %v5406 = vld [vmem:[#allocation5 + $0xf0] sm:$0xff]
      %v5407 = vld [vmem:[#allocation5 + $0xf8] sm:$0xff]
      %v5408 = vld [vmem:[#allocation5 + $0x100] sm:$0xff]
      %v5409 = vld [vmem:[#allocation5 + $0x108] sm:$0xff]
      %v5410 = vld [vmem:[#allocation5 + $0x110] sm:$0xff]
      %v5411 = vld [vmem:[#allocation5 + $0x118] sm:$0xff]
      %v5412 = vld [vmem:[#allocation5 + $0x120] sm:$0xff]
      %v5413 = vld [vmem:[#allocation5 + $0x128] sm:$0xff]
      %v5414 = vld [vmem:[#allocation5 + $0x130] sm:$0xff]
      %v5415 = vld [vmem:[#allocation5 + $0x138] sm:$0xff]
      %v5416 = vld [vmem:[#allocation5 + $0x140] sm:$0xff]
      %v5417 = vld [vmem:[#allocation5 + $0x148] sm:$0xff]
      %v5418 = vld [vmem:[#allocation5 + $0x150] sm:$0xff]
      %v5419 = vld [vmem:[#allocation5 + $0x158] sm:$0xff]
      %v5420 = vld [vmem:[#allocation5 + $0x160] sm:$0xff]
      %v5421 = vld [vmem:[#allocation5 + $0x168] sm:$0xff]
      %v5422 = vld [vmem:[#allocation5 + $0x170] sm:$0xff]
      %v5423 = vld [vmem:[#allocation5 + $0x178] sm:$0xff]
      %v5424 = vld [vmem:[#allocation5 + $0x180] sm:$0xff]
      %v5425 = vld [vmem:[#allocation5 + $0x188] sm:$0xff]
      %v5426 = vld [vmem:[#allocation5 + $0x190] sm:$0xff]
      %v5427 = vld [vmem:[#allocation5 + $0x198] sm:$0xff]
      %v5428 = vld [vmem:[#allocation5 + $0x1a0] sm:$0xff]
      %v5429 = vld [vmem:[#allocation5 + $0x1a8] sm:$0xff]
      %v5430 = vld [vmem:[#allocation5 + $0x1b0] sm:$0xff]
      %v5431 = vld [vmem:[#allocation5 + $0x1b8] sm:$0xff]
      %v5432 = vld [vmem:[#allocation5 + $0x1c0] sm:$0xff]
      %v5433 = vld [vmem:[#allocation5 + $0x1c8] sm:$0xff]
      %v5434 = vld [vmem:[#allocation5 + $0x1d0] sm:$0xff]
      %v5435 = vld [vmem:[#allocation5 + $0x1d8] sm:$0xff]
      %v5436 = vld [vmem:[#allocation5 + $0x1e0] sm:$0xff]
      %v5437 = vld [vmem:[#allocation5 + $0x1e8] sm:$0xff]
      %v5438 = vld [vmem:[#allocation5 + $0x1f0] sm:$0xff]
      %v5439 = vld [vmem:[#allocation5 + $0x1f8] sm:$0xff]
      %v5440 = vld [vmem:[#allocation5 + $0x200] sm:$0xff]
      %v5441 = vld [vmem:[#allocation5 + $0x208] sm:$0xff]
      %v5442 = vld [vmem:[#allocation5 + $0x210] sm:$0xff]
      %v5443 = vld [vmem:[#allocation5 + $0x218] sm:$0xff]
      %v5444 = vld [vmem:[#allocation5 + $0x220] sm:$0xff]
      %v5445 = vld [vmem:[#allocation5 + $0x228] sm:$0xff]
      %v5446 = vld [vmem:[#allocation5 + $0x230] sm:$0xff]
      %v5447 = vld [vmem:[#allocation5 + $0x238] sm:$0xff]
      %v5448 = vld [vmem:[%s5] sm:$0xf]
      %v5449 = vld [vmem:[%s5 + $0x4] sm:$0xf]
      %v5450 = vld [vmem:[%s5 + $0x8] sm:$0xf]
      %v5451 = vld [vmem:[%s5 + $0xc] sm:$0xf]
      %v5452 = vld [vmem:[%s5 + $0x10] sm:$0xf]
      %v5453 = vld [vmem:[%s5 + $0x14] sm:$0xf]
      %v5454 = vld [vmem:[%s5 + $0x18] sm:$0xf]
      %v5455 = vld [vmem:[%s5 + $0x1c] sm:$0xf]
      %v5456 = vld [vmem:[%s5 + $0x20] sm:$0xf]
      %v5457 = vld [vmem:[%s5 + $0x24] sm:$0xf]
      %v5458 = vld [vmem:[%s5 + $0x28] sm:$0xf]
      %v5459 = vld [vmem:[%s5 + $0x2c] sm:$0xf]
      %v5460 = vld [vmem:[%s5 + $0x30] sm:$0xf]
      %v5461 = vld [vmem:[%s5 + $0x34] sm:$0xf]
      %v5462 = vld [vmem:[%s5 + $0x38] sm:$0xf]
      %v5463 = vld [vmem:[%s5 + $0x3c] sm:$0xf]
      %v5464 = vld [vmem:[%s5 + $0x40] sm:$0xf]
      %v5465 = vld [vmem:[%s5 + $0x44] sm:$0xf]
      %v5466 = vld [vmem:[%s5 + $0x48] sm:$0xf]
      %v5467 = vld [vmem:[%s5 + $0x4c] sm:$0xf]
      %v5468 = vld [vmem:[%s5 + $0x50] sm:$0xf]
      %v5469 = vld [vmem:[%s5 + $0x54] sm:$0xf]
      %v5470 = vld [vmem:[%s5 + $0x58] sm:$0xf]
      %v5471 = vld [vmem:[%s5 + $0x5c] sm:$0xf]
      %v5472 = vld [vmem:[%s5 + $0x60] sm:$0xf]
      %v5473 = vld [vmem:[%s5 + $0x64] sm:$0xf]
      %v5474 = vld [vmem:[%s5 + $0x68] sm:$0xf]
      %v5475 = vld [vmem:[%s5 + $0x6c] sm:$0xf]
      %v5476 = vld [vmem:[%s5 + $0x70] sm:$0xf]
      %v5477 = vld [vmem:[%s5 + $0x74] sm:$0xf]
      %v5478 = vld [vmem:[%s5 + $0x78] sm:$0xf]
      %v5479 = vld [vmem:[%s5 + $0x7c] sm:$0xf]
      %v5480 = vld [vmem:[%s5 + $0x80] sm:$0xf]
      %v5481 = vld [vmem:[%s5 + $0x84] sm:$0xf]
      %v5482 = vld [vmem:[%s5 + $0x88] sm:$0xf]
      %v5483 = vld [vmem:[%s5 + $0x8c] sm:$0xf]
      %v5484 = vld [vmem:[%s5 + $0x90] sm:$0xf]
      %v5485 = vld [vmem:[%s5 + $0x94] sm:$0xf]
      %v5486 = vld [vmem:[%s5 + $0x98] sm:$0xf]
      %v5487 = vld [vmem:[%s5 + $0x9c] sm:$0xf]
      %v5488 = vld [vmem:[%s5 + $0xa0] sm:$0xf]
      %v5489 = vld [vmem:[%s5 + $0xa4] sm:$0xf]
      %v5490 = vld [vmem:[%s5 + $0xa8] sm:$0xf]
      %v5491 = vld [vmem:[%s5 + $0xac] sm:$0xf]
      %v5492 = vld [vmem:[%s5 + $0xb0] sm:$0xf]
      %v5493 = vld [vmem:[%s5 + $0xb4] sm:$0xf]
      %v5494 = vld [vmem:[%s5 + $0xb8] sm:$0xf]
      %v5495 = vld [vmem:[%s5 + $0xbc] sm:$0xf]
      %v5496 = vld [vmem:[%s5 + $0xc0] sm:$0xf]
      %v5497 = vld [vmem:[%s5 + $0xc4] sm:$0xf]
      %v5498 = vld [vmem:[%s5 + $0xc8] sm:$0xf]
      %v5499 = vld [vmem:[%s5 + $0xcc] sm:$0xf]
      %v5500 = vld [vmem:[%s5 + $0xd0] sm:$0xf]
      %v5501 = vld [vmem:[%s5 + $0xd4] sm:$0xf]
      %v5502 = vld [vmem:[%s5 + $0xd8] sm:$0xf]
      %v5503 = vld [vmem:[%s5 + $0xdc] sm:$0xf]
      %v5504 = vld [vmem:[%s5 + $0xe0] sm:$0xf]
      %v5505 = vld [vmem:[%s5 + $0xe4] sm:$0xf]
      %v5506 = vld [vmem:[%s5 + $0xe8] sm:$0xf]
      %v5507 = vld [vmem:[%s5 + $0xec] sm:$0xf]
      %v5508 = vld [vmem:[%s5 + $0xf0] sm:$0xf]
      %v5509 = vld [vmem:[%s5 + $0xf4] sm:$0xf]
      %v5510 = vld [vmem:[%s5 + $0xf8] sm:$0xf]
      %v5511 = vld [vmem:[%s5 + $0xfc] sm:$0xf]
      %v5512 = vld [vmem:[%s5 + $0x100] sm:$0xf]
      %v5513 = vld [vmem:[%s5 + $0x104] sm:$0xf]
      %v5514 = vld [vmem:[%s5 + $0x108] sm:$0xf]
      %v5515 = vld [vmem:[%s5 + $0x10c] sm:$0xf]
      %v5516 = vld [vmem:[%s5 + $0x110] sm:$0xf]
      %v5517 = vld [vmem:[%s5 + $0x114] sm:$0xf]
      %v5518 = vld [vmem:[%s5 + $0x118] sm:$0xf]
      %v5519 = vld [vmem:[%s5 + $0x11c] sm:$0xf]
      %v5520 = vld [vmem:[%s5 + $0x120] sm:$0xf]
      %v5521 = vld [vmem:[%s5 + $0x124] sm:$0xf]
      %v5522 = vld [vmem:[%s5 + $0x128] sm:$0xf]
      %v5523 = vld [vmem:[%s5 + $0x12c] sm:$0xf]
      %v5524 = vld [vmem:[%s5 + $0x130] sm:$0xf]
      %v5525 = vld [vmem:[%s5 + $0x134] sm:$0xf]
      %v5526 = vld [vmem:[%s5 + $0x138] sm:$0xf]
      %v5527 = vld [vmem:[%s5 + $0x13c] sm:$0xf]
      %v5528 = vld [vmem:[%s5 + $0x140] sm:$0xf]
      %v5529 = vld [vmem:[%s5 + $0x144] sm:$0xf]
      %v5530 = vld [vmem:[%s5 + $0x148] sm:$0xf]
      %v5531 = vld [vmem:[%s5 + $0x14c] sm:$0xf]
      %v5532 = vld [vmem:[%s5 + $0x150] sm:$0xf]
      %v5533 = vld [vmem:[%s5 + $0x154] sm:$0xf]
      %v5534 = vld [vmem:[%s5 + $0x158] sm:$0xf]
      %v5535 = vld [vmem:[%s5 + $0x15c] sm:$0xf]
      %v5536 = vld [vmem:[%s5 + $0x160] sm:$0xf]
      %v5537 = vld [vmem:[%s5 + $0x164] sm:$0xf]
      %v5538 = vld [vmem:[%s5 + $0x168] sm:$0xf]
      %v5539 = vld [vmem:[%s5 + $0x16c] sm:$0xf]
      %v5540 = vld [vmem:[%s5 + $0x170] sm:$0xf]
      %v5541 = vld [vmem:[%s5 + $0x174] sm:$0xf]
      %v5542 = vld [vmem:[%s5 + $0x178] sm:$0xf]
      %v5543 = vld [vmem:[%s5 + $0x17c] sm:$0xf]
      %v5544 = vld [vmem:[%s5 + $0x180] sm:$0xf]
      %v5545 = vld [vmem:[%s5 + $0x184] sm:$0xf]
      %v5546 = vld [vmem:[%s5 + $0x188] sm:$0xf]
      %v5547 = vld [vmem:[%s5 + $0x18c] sm:$0xf]
      %v5548 = vld [vmem:[%s5 + $0x190] sm:$0xf]
      %v5549 = vld [vmem:[%s5 + $0x194] sm:$0xf]
      %v5550 = vld [vmem:[%s5 + $0x198] sm:$0xf]
      %v5551 = vld [vmem:[%s5 + $0x19c] sm:$0xf]
      %v5552 = vld [vmem:[%s5 + $0x1a0] sm:$0xf]
      %v5553 = vld [vmem:[%s5 + $0x1a4] sm:$0xf]
      %v5554 = vld [vmem:[%s5 + $0x1a8] sm:$0xf]
      %v5555 = vld [vmem:[%s5 + $0x1ac] sm:$0xf]
      %v5556 = vld [vmem:[%s5 + $0x1b0] sm:$0xf]
      %v5557 = vld [vmem:[%s5 + $0x1b4] sm:$0xf]
      %v5558 = vld [vmem:[%s5 + $0x1b8] sm:$0xf]
      %v5559 = vld [vmem:[%s5 + $0x1bc] sm:$0xf]
      %v5560 = vld [vmem:[%s5 + $0x1c0] sm:$0xf]
      %v5561 = vld [vmem:[%s5 + $0x1c4] sm:$0xf]
      %v5562 = vld [vmem:[%s5 + $0x1c8] sm:$0xf]
      %v5563 = vld [vmem:[%s5 + $0x1cc] sm:$0xf]
      %v5564 = vld [vmem:[%s5 + $0x1d0] sm:$0xf]
      %v5565 = vld [vmem:[%s5 + $0x1d4] sm:$0xf]
      %v5566 = vld [vmem:[%s5 + $0x1d8] sm:$0xf]
      %v5567 = vld [vmem:[%s5 + $0x1dc] sm:$0xf]
      %v5568 = vld [vmem:[%s5 + $0x1e0] sm:$0xf]
      %v5569 = vld [vmem:[%s5 + $0x1e4] sm:$0xf]
      %v5570 = vld [vmem:[%s5 + $0x1e8] sm:$0xf]
      %v5571 = vld [vmem:[%s5 + $0x1ec] sm:$0xf]
      %v5572 = vld [vmem:[%s5 + $0x1f0] sm:$0xf]
      %v5573 = vld [vmem:[%s5 + $0x1f4] sm:$0xf]
      %v5574 = vld [vmem:[%s5 + $0x1f8] sm:$0xf]
      %v5575 = vld [vmem:[%s5 + $0x1fc] sm:$0xf]
      %v5576 = vld [vmem:[%s5 + $0x200] sm:$0xf]
      %v5577 = vld [vmem:[%s5 + $0x204] sm:$0xf]
      %v5578 = vld [vmem:[%s5 + $0x208] sm:$0xf]
      %v5579 = vld [vmem:[%s5 + $0x20c] sm:$0xf]
      %v5580 = vld [vmem:[%s5 + $0x210] sm:$0xf]
      %v5581 = vld [vmem:[%s5 + $0x214] sm:$0xf]
      %v5582 = vld [vmem:[%s5 + $0x218] sm:$0xf]
      %v5583 = vld [vmem:[%s5 + $0x21c] sm:$0xf]
      %v5584 = vld [vmem:[%s5 + $0x220] sm:$0xf]
      %v5585 = vld [vmem:[%s5 + $0x224] sm:$0xf]
      %v5586 = vld [vmem:[%s5 + $0x228] sm:$0xf]
      %v5587 = vld [vmem:[%s5 + $0x22c] sm:$0xf]
      %v5588 = vld [vmem:[%s5 + $0x230] sm:$0xf]
      %v5589 = vld [vmem:[%s5 + $0x234] sm:$0xf]
      %v5590 = vld [vmem:[%s5 + $0x238] sm:$0xf]
      %v5591 = vld [vmem:[%s5 + $0x23c] sm:$0xf]
      %v5592 = vld [vmem:[%s6] sm:$0x1]
      %v5594 = vlaneseq
      %v5595 = vshrl.u32 %v5594, 7
      %v5596 = vsub.s32 0, %v5595
      %v5597 = vrot.slane %v5592, %v5596
      %v5743 = vunpack.c.l.b16 %v5448
      %v5744 = vunpack.c.l.b16 %v5449
      %v5745 = vunpack.c.l.b16 %v5450
      %v5746 = vunpack.c.l.b16 %v5451
      %v5747 = vunpack.c.l.b16 %v5452
      %v5748 = vunpack.c.l.b16 %v5453
      %v5749 = vunpack.c.l.b16 %v5454
      %v5750 = vunpack.c.l.b16 %v5455
      %v5751 = vunpack.c.l.b16 %v5456
      %v5752 = vunpack.c.l.b16 %v5457
      %v5753 = vunpack.c.l.b16 %v5458
      %v5754 = vunpack.c.l.b16 %v5459
      %v5755 = vunpack.c.l.b16 %v5460
      %v5756 = vunpack.c.l.b16 %v5461
      %v5757 = vunpack.c.l.b16 %v5462
      %v5758 = vunpack.c.l.b16 %v5463
      %v5759 = vunpack.c.l.b16 %v5464
      %v5760 = vunpack.c.l.b16 %v5465
      %v5761 = vunpack.c.l.b16 %v5466
      %v5762 = vunpack.c.l.b16 %v5467
      %v5763 = vunpack.c.l.b16 %v5468
      %v5764 = vunpack.c.l.b16 %v5469
      %v5765 = vunpack.c.l.b16 %v5470
      %v5766 = vunpack.c.l.b16 %v5471
      %v5767 = vunpack.c.l.b16 %v5472
      %v5768 = vunpack.c.l.b16 %v5473
      %v5769 = vunpack.c.l.b16 %v5474
      %v5770 = vunpack.c.l.b16 %v5475
      %v5771 = vunpack.c.l.b16 %v5476
      %v5772 = vunpack.c.l.b16 %v5477
      %v5773 = vunpack.c.l.b16 %v5478
      %v5774 = vunpack.c.l.b16 %v5479
      %v5775 = vunpack.c.l.b16 %v5480
      %v5776 = vunpack.c.l.b16 %v5481
      %v5777 = vunpack.c.l.b16 %v5482
      %v5778 = vunpack.c.l.b16 %v5483
      %v5779 = vunpack.c.l.b16 %v5484
      %v5780 = vunpack.c.l.b16 %v5485
      %v5781 = vunpack.c.l.b16 %v5486
      %v5782 = vunpack.c.l.b16 %v5487
      %v5783 = vunpack.c.l.b16 %v5488
      %v5784 = vunpack.c.l.b16 %v5489
      %v5785 = vunpack.c.l.b16 %v5490
      %v5786 = vunpack.c.l.b16 %v5491
      %v5787 = vunpack.c.l.b16 %v5492
      %v5788 = vunpack.c.l.b16 %v5493
      %v5789 = vunpack.c.l.b16 %v5494
      %v5790 = vunpack.c.l.b16 %v5495
      %v5791 = vunpack.c.l.b16 %v5496
      %v5792 = vunpack.c.l.b16 %v5497
      %v5793 = vunpack.c.l.b16 %v5498
      %v5794 = vunpack.c.l.b16 %v5499
      %v5795 = vunpack.c.l.b16 %v5500
      %v5796 = vunpack.c.l.b16 %v5501
      %v5797 = vunpack.c.l.b16 %v5502
      %v5798 = vunpack.c.l.b16 %v5503
      %v5799 = vunpack.c.l.b16 %v5504
      %v5800 = vunpack.c.l.b16 %v5505
      %v5801 = vunpack.c.l.b16 %v5506
      %v5802 = vunpack.c.l.b16 %v5507
      %v5803 = vunpack.c.l.b16 %v5508
      %v5804 = vunpack.c.l.b16 %v5509
      %v5805 = vunpack.c.l.b16 %v5510
      %v5806 = vunpack.c.l.b16 %v5511
      %v5807 = vunpack.c.l.b16 %v5512
      %v5808 = vunpack.c.l.b16 %v5513
      %v5809 = vunpack.c.l.b16 %v5514
      %v5810 = vunpack.c.l.b16 %v5515
      %v5811 = vunpack.c.l.b16 %v5516
      %v5812 = vunpack.c.l.b16 %v5517
      %v5813 = vunpack.c.l.b16 %v5518
      %v5814 = vunpack.c.l.b16 %v5519
      %v5815 = vunpack.c.l.b16 %v5520
      %v5816 = vunpack.c.l.b16 %v5521
      %v5817 = vunpack.c.l.b16 %v5522
      %v5818 = vunpack.c.l.b16 %v5523
      %v5819 = vunpack.c.l.b16 %v5524
      %v5820 = vunpack.c.l.b16 %v5525
      %v5821 = vunpack.c.l.b16 %v5526
      %v5822 = vunpack.c.l.b16 %v5527
      %v5823 = vunpack.c.l.b16 %v5528
      %v5824 = vunpack.c.l.b16 %v5529
      %v5825 = vunpack.c.l.b16 %v5530
      %v5826 = vunpack.c.l.b16 %v5531
      %v5827 = vunpack.c.l.b16 %v5532
      %v5828 = vunpack.c.l.b16 %v5533
      %v5829 = vunpack.c.l.b16 %v5534
      %v5830 = vunpack.c.l.b16 %v5535
      %v5831 = vunpack.c.l.b16 %v5536
      %v5832 = vunpack.c.l.b16 %v5537
      %v5833 = vunpack.c.l.b16 %v5538
      %v5834 = vunpack.c.l.b16 %v5539
      %v5835 = vunpack.c.l.b16 %v5540
      %v5836 = vunpack.c.l.b16 %v5541
      %v5837 = vunpack.c.l.b16 %v5542
      %v5838 = vunpack.c.l.b16 %v5543
      %v5839 = vunpack.c.l.b16 %v5544
      %v5840 = vunpack.c.l.b16 %v5545
      %v5841 = vunpack.c.l.b16 %v5546
      %v5842 = vunpack.c.l.b16 %v5547
      %v5843 = vunpack.c.l.b16 %v5548
      %v5844 = vunpack.c.l.b16 %v5549
      %v5845 = vunpack.c.l.b16 %v5550
      %v5846 = vunpack.c.l.b16 %v5551
      %v5847 = vunpack.c.l.b16 %v5552
      %v5848 = vunpack.c.l.b16 %v5553
      %v5849 = vunpack.c.l.b16 %v5554
      %v5850 = vunpack.c.l.b16 %v5555
      %v5851 = vunpack.c.l.b16 %v5556
      %v5852 = vunpack.c.l.b16 %v5557
      %v5853 = vunpack.c.l.b16 %v5558
      %v5854 = vunpack.c.l.b16 %v5559
      %v5855 = vunpack.c.l.b16 %v5560
      %v5856 = vunpack.c.l.b16 %v5561
      %v5857 = vunpack.c.l.b16 %v5562
      %v5858 = vunpack.c.l.b16 %v5563
      %v5859 = vunpack.c.l.b16 %v5564
      %v5860 = vunpack.c.l.b16 %v5565
      %v5861 = vunpack.c.l.b16 %v5566
      %v5862 = vunpack.c.l.b16 %v5567
      %v5863 = vunpack.c.l.b16 %v5568
      %v5864 = vunpack.c.l.b16 %v5569
      %v5865 = vunpack.c.l.b16 %v5570
      %v5866 = vunpack.c.l.b16 %v5571
      %v5867 = vunpack.c.l.b16 %v5572
      %v5868 = vunpack.c.l.b16 %v5573
      %v5869 = vunpack.c.l.b16 %v5574
      %v5870 = vunpack.c.l.b16 %v5575
      %v5871 = vunpack.c.l.b16 %v5576
      %v5872 = vunpack.c.l.b16 %v5577
      %v5873 = vunpack.c.l.b16 %v5578
      %v5874 = vunpack.c.l.b16 %v5579
      %v5875 = vunpack.c.l.b16 %v5580
      %v5876 = vunpack.c.l.b16 %v5581
      %v5877 = vunpack.c.l.b16 %v5582
      %v5878 = vunpack.c.l.b16 %v5583
      %v5879 = vunpack.c.l.b16 %v5584
      %v5880 = vunpack.c.l.b16 %v5585
      %v5881 = vunpack.c.l.b16 %v5586
      %v5882 = vunpack.c.l.b16 %v5587
      %v5883 = vunpack.c.l.b16 %v5588
      %v5884 = vunpack.c.l.b16 %v5589
      %v5885 = vunpack.c.l.b16 %v5590
      %v5886 = vunpack.c.l.b16 %v5591
      %v5887 = vpack.c.b16 %v5744, %v5743
      %v5888 = vpack.c.b16 %v5746, %v5745
      %v5889 = vpack.c.b16 %v5748, %v5747
      %v5890 = vpack.c.b16 %v5750, %v5749
      %v5891 = vpack.c.b16 %v5752, %v5751
      %v5892 = vpack.c.b16 %v5754, %v5753
      %v5893 = vpack.c.b16 %v5756, %v5755
      %v5894 = vpack.c.b16 %v5758, %v5757
      %v5895 = vpack.c.b16 %v5760, %v5759
      %v5896 = vpack.c.b16 %v5762, %v5761
      %v5897 = vpack.c.b16 %v5764, %v5763
      %v5898 = vpack.c.b16 %v5766, %v5765
      %v5899 = vpack.c.b16 %v5768, %v5767
      %v5900 = vpack.c.b16 %v5770, %v5769
      %v5901 = vpack.c.b16 %v5772, %v5771
      %v5902 = vpack.c.b16 %v5774, %v5773
      %v5903 = vpack.c.b16 %v5776, %v5775
      %v5904 = vpack.c.b16 %v5778, %v5777
      %v5905 = vpack.c.b16 %v5780, %v5779
      %v5906 = vpack.c.b16 %v5782, %v5781
      %v5907 = vpack.c.b16 %v5784, %v5783
      %v5908 = vpack.c.b16 %v5786, %v5785
      %v5909 = vpack.c.b16 %v5788, %v5787
      %v5910 = vpack.c.b16 %v5790, %v5789
      %v5911 = vpack.c.b16 %v5792, %v5791
      %v5912 = vpack.c.b16 %v5794, %v5793
      %v5913 = vpack.c.b16 %v5796, %v5795
      %v5914 = vpack.c.b16 %v5798, %v5797
      %v5915 = vpack.c.b16 %v5800, %v5799
      %v5916 = vpack.c.b16 %v5802, %v5801
      %v5917 = vpack.c.b16 %v5804, %v5803
      %v5918 = vpack.c.b16 %v5806, %v5805
      %v5919 = vpack.c.b16 %v5808, %v5807
      %v5920 = vpack.c.b16 %v5810, %v5809
      %v5921 = vpack.c.b16 %v5812, %v5811
      %v5922 = vpack.c.b16 %v5814, %v5813
      %v5923 = vpack.c.b16 %v5816, %v5815
      %v5924 = vpack.c.b16 %v5818, %v5817
      %v5925 = vpack.c.b16 %v5820, %v5819
      %v5926 = vpack.c.b16 %v5822, %v5821
      %v5927 = vpack.c.b16 %v5824, %v5823
      %v5928 = vpack.c.b16 %v5826, %v5825
      %v5929 = vpack.c.b16 %v5828, %v5827
      %v5930 = vpack.c.b16 %v5830, %v5829
      %v5931 = vpack.c.b16 %v5832, %v5831
      %v5932 = vpack.c.b16 %v5834, %v5833
      %v5933 = vpack.c.b16 %v5836, %v5835
      %v5934 = vpack.c.b16 %v5838, %v5837
      %v5935 = vpack.c.b16 %v5840, %v5839
      %v5936 = vpack.c.b16 %v5842, %v5841
      %v5937 = vpack.c.b16 %v5844, %v5843
      %v5938 = vpack.c.b16 %v5846, %v5845
      %v5939 = vpack.c.b16 %v5848, %v5847
      %v5940 = vpack.c.b16 %v5850, %v5849
      %v5941 = vpack.c.b16 %v5852, %v5851
      %v5942 = vpack.c.b16 %v5854, %v5853
      %v5943 = vpack.c.b16 %v5856, %v5855
      %v5944 = vpack.c.b16 %v5858, %v5857
      %v5945 = vpack.c.b16 %v5860, %v5859
      %v5946 = vpack.c.b16 %v5862, %v5861
      %v5947 = vpack.c.b16 %v5864, %v5863
      %v5948 = vpack.c.b16 %v5866, %v5865
      %v5949 = vpack.c.b16 %v5868, %v5867
      %v5950 = vpack.c.b16 %v5870, %v5869
      %v5951 = vpack.c.b16 %v5872, %v5871
      %v5952 = vpack.c.b16 %v5874, %v5873
      %v5953 = vpack.c.b16 %v5876, %v5875
      %v5954 = vpack.c.b16 %v5878, %v5877
      %v5955 = vpack.c.b16 %v5880, %v5879
      %v5956 = vpack.c.b16 %v5882, %v5881
      %v5957 = vpack.c.b16 %v5884, %v5883
      %v5958 = vpack.c.b16 %v5886, %v5885
      %6031 = vmatprep.subr.bf16.mxu0 0
      %6032 = vmatpush1.bf16.msra.mxu0 %v5887
      %6033 = vmatprep.subr.bf16.mxu0 0
      %6034 = vmatpush1.bf16.msra.mxu0 %v5888
      %6035 = vmatprep.subr.bf16.mxu0 0
      %6036 = vmatpush1.bf16.msra.mxu0 %v5889
      %6037 = vmatprep.subr.bf16.mxu0 0
      %6038 = vmatpush1.bf16.msra.mxu0 %v5890
      %6039 = vmatprep.subr.bf16.mxu0 0
      %6040 = vmatpush1.bf16.msra.mxu0 %v5891
      %6041 = vmatprep.subr.bf16.mxu0 0
      %6042 = vmatpush1.bf16.msra.mxu0 %v5892
      %6043 = vmatprep.subr.bf16.mxu0 0
      %6044 = vmatpush1.bf16.msra.mxu0 %v5893
      %6045 = vmatprep.subr.bf16.mxu0 0
      %6046 = vmatpush1.bf16.msra.mxu0 %v5894
      %6047 = vmatprep.subr.bf16.mxu0 0
      %6048 = vmatpush1.bf16.msra.mxu0 %v5895
      %6049 = vmatprep.subr.bf16.mxu0 0
      %6050 = vmatpush1.bf16.msra.mxu0 %v5896
      %6051 = vmatprep.subr.bf16.mxu0 0
      %6052 = vmatpush1.bf16.msra.mxu0 %v5897
      %6053 = vmatprep.subr.bf16.mxu0 0
      %6054 = vmatpush1.bf16.msra.mxu0 %v5898
      %6055 = vmatprep.subr.bf16.mxu0 0
      %6056 = vmatpush1.bf16.msra.mxu0 %v5899
      %6057 = vmatprep.subr.bf16.mxu0 0
      %6058 = vmatpush1.bf16.msra.mxu0 %v5900
      %6059 = vmatprep.subr.bf16.mxu0 0
      %6060 = vmatpush1.bf16.msra.mxu0 %v5901
      %6061 = vmatprep.subr.bf16.mxu0 0
      %6062 = vmatpush1.bf16.msra.mxu0 %v5902
      %6063 = vmatprep.mubr.bf16.mxu0 %v5377
      %6064 = vmatmul.mubr.bf16.gmra.mrb[0].mxu0 %v5376
      %v6065 = vpop.f32.mrb[0].mxu0
      %v6066 = vadd.f32 %v5597, %v6065
      %v6067 = vpop.f32.mrb[0].mxu0
      %v6068 = vpop.f32.mrb[0].mxu0
      %v6069 = vadd.f32 %v5597, %v6068
      %v6070 = vpop.f32.mrb[0].mxu0
      %6071 = vmatprep.mubr.bf16.mxu0 %v5386
      %6072 = vmatmul.mubr.bf16.gmra.mrb[0].mxu0 %v5385
      %v6073 = vpop.f32.mrb[0].mxu0
      %v6074 = vadd.f32 %v5597, %v6073
      %v6075 = vpop.f32.mrb[0].mxu0
      %v6076 = vpop.f32.mrb[0].mxu0
      %v6077 = vadd.f32 %v5597, %v6076
      %v6078 = vpop.f32.mrb[0].mxu0
      %6079 = vmatprep.mubr.bf16.mxu0 %v5395
      %6080 = vmatmul.mubr.bf16.gmra.mrb[0].mxu0 %v5394
      %v6081 = vpop.f32.mrb[0].mxu0
      %v6082 = vadd.f32 %v5597, %v6081
      %v6083 = vpop.f32.mrb[0].mxu0
      %v6084 = vpop.f32.mrb[0].mxu0
      %v6085 = vadd.f32 %v5597, %v6084
      %v6086 = vpop.f32.mrb[0].mxu0
      %6087 = vmatprep.mubr.bf16.mxu0 %v5404
      %6088 = vmatmul.mubr.bf16.gmra.mrb[0].mxu0 %v5403
      %v6089 = vpop.f32.mrb[0].mxu0
      %v6090 = vadd.f32 %v5597, %v6089
      %v6091 = vpop.f32.mrb[0].mxu0
      %v6092 = vpop.f32.mrb[0].mxu0
      %v6093 = vadd.f32 %v5597, %v6092
      %v6094 = vpop.f32.mrb[0].mxu0
      %6095 = vmatprep.mubr.bf16.mxu0 %v5413
      %6096 = vmatmul.mubr.bf16.gmra.mrb[0].mxu0 %v5412
      %v6097 = vpop.f32.mrb[0].mxu0
      %v6098 = vadd.f32 %v5597, %v6097
      %v6099 = vpop.f32.mrb[0].mxu0
      %v6100 = vpop.f32.mrb[0].mxu0
      %v6101 = vadd.f32 %v5597, %v6100
      %v6102 = vpop.f32.mrb[0].mxu0
      %6103 = vmatprep.mubr.bf16.mxu0 %v5422
      %6104 = vmatmul.mubr.bf16.gmra.mrb[0].mxu0 %v5421
      %v6105 = vpop.f32.mrb[0].mxu0
      %v6106 = vadd.f32 %v5597, %v6105
      %v6107 = vpop.f32.mrb[0].mxu0
      %v6108 = vpop.f32.mrb[0].mxu0
      %v6109 = vadd.f32 %v5597, %v6108
      %v6110 = vpop.f32.mrb[0].mxu0
      %6111 = vmatprep.mubr.bf16.mxu0 %v5431
      %6112 = vmatmul.mubr.bf16.gmra.mrb[0].mxu0 %v5430
      %v6113 = vpop.f32.mrb[0].mxu0
      %v6114 = vadd.f32 %v5597, %v6113
      %v6115 = vpop.f32.mrb[0].mxu0
      %v6116 = vpop.f32.mrb[0].mxu0
      %v6117 = vadd.f32 %v5597, %v6116
      %v6118 = vpop.f32.mrb[0].mxu0
      %6119 = vmatprep.mubr.bf16.mxu0 %v5440
      %6120 = vmatmul.mubr.bf16.gmra.mrb[0].mxu0 %v5439
      %v6121 = vpop.f32.mrb[0].mxu0
      %v6122 = vadd.f32 %v5597, %v6121
      %v6123 = vpop.f32.mrb[0].mxu0
      %v6124 = vpop.f32.mrb[0].mxu0
      %v6125 = vadd.f32 %v5597, %v6124
      %v6126 = vpop.f32.mrb[0].mxu0
      %6127 = vdwg.mxu0
      %6128 = vmatprep.subr.bf16.mxu0 0
      %6129 = vmatpush1.bf16.msra.mxu0 %v5903
      %6130 = vmatprep.subr.bf16.mxu0 0
      %6131 = vmatpush1.bf16.msra.mxu0 %v5904
      %6132 = vmatprep.subr.bf16.mxu0 0
      %6133 = vmatpush1.bf16.msra.mxu0 %v5905
      %6134 = vmatprep.subr.bf16.mxu0 0
      %6135 = vmatpush1.bf16.msra.mxu0 %v5906
      %6136 = vmatprep.subr.bf16.mxu0 0
      %6137 = vmatpush1.bf16.msra.mxu0 %v5907
      %6138 = vmatprep.subr.bf16.mxu0 0
      %6139 = vmatpush1.bf16.msra.mxu0 %v5908
      %6140 = vmatprep.subr.bf16.mxu0 0
      %6141 = vmatpush1.bf16.msra.mxu0 %v5909
      %6142 = vmatprep.subr.bf16.mxu0 0
      %6143 = vmatpush1.bf16.msra.mxu0 %v5910
      %6144 = vmatprep.subr.bf16.mxu0 0
      %6145 = vmatpush1.bf16.msra.mxu0 %v5911
      %6146 = vmatprep.subr.bf16.mxu0 0
      %6147 = vmatpush1.bf16.msra.mxu0 %v5912
      %6148 = vmatprep.subr.bf16.mxu0 0
      %6149 = vmatpush1.bf16.msra.mxu0 %v5913
      %6150 = vmatprep.subr.bf16.mxu0 0
      %6151 = vmatpush1.bf16.msra.mxu0 %v5914
      %6152 = vmatprep.subr.bf16.mxu0 0
      %6153 = vmatpush1.bf16.msra.mxu0 %v5915
      %6154 = vmatprep.subr.bf16.mxu0 0
      %6155 = vmatpush1.bf16.msra.mxu0 %v5916
      %6156 = vmatprep.subr.bf16.mxu0 0
      %6157 = vmatpush1.bf16.msra.mxu0 %v5917
      %6158 = vmatprep.subr.bf16.mxu0 0
      %6159 = vmatpush1.bf16.msra.mxu0 %v5918
      %6160 = vmatprep.mubr.bf16.mxu0 %v5379
      %6161 = vmatmul.mubr.bf16.gmra.mrb[0].mxu0 %v5378
      %v6162 = vpop.f32.mrb[0].mxu0
      %v6163 = vadd.f32 %v6066, %v6162
      %v6164 = vpop.f32.mrb[0].mxu0
      %v6165 = vpop.f32.mrb[0].mxu0
      %v6166 = vadd.f32 %v6069, %v6165
      %v6167 = vpop.f32.mrb[0].mxu0
      %6168 = vmatprep.mubr.bf16.mxu0 %v5388
      %6169 = vmatmul.mubr.bf16.gmra.mrb[0].mxu0 %v5387
      %v6170 = vpop.f32.mrb[0].mxu0
      %v6171 = vadd.f32 %v6074, %v6170
      %v6172 = vpop.f32.mrb[0].mxu0
      %v6173 = vpop.f32.mrb[0].mxu0
      %v6174 = vadd.f32 %v6077, %v6173
      %v6175 = vpop.f32.mrb[0].mxu0
      %6176 = vmatprep.mubr.bf16.mxu0 %v5397
      %6177 = vmatmul.mubr.bf16.gmra.mrb[0].mxu0 %v5396
      %v6178 = vpop.f32.mrb[0].mxu0
      %v6179 = vadd.f32 %v6082, %v6178
      %v6180 = vpop.f32.mrb[0].mxu0
      %v6181 = vpop.f32.mrb[0].mxu0
      %v6182 = vadd.f32 %v6085, %v6181
      %v6183 = vpop.f32.mrb[0].mxu0
      %6184 = vmatprep.mubr.bf16.mxu0 %v5406
      %6185 = vmatmul.mubr.bf16.gmra.mrb[0].mxu0 %v5405
      %v6186 = vpop.f32.mrb[0].mxu0
      %v6187 = vadd.f32 %v6090, %v6186
      %v6188 = vpop.f32.mrb[0].mxu0
      %v6189 = vpop.f32.mrb[0].mxu0
      %v6190 = vadd.f32 %v6093, %v6189
      %v6191 = vpop.f32.mrb[0].mxu0
      %6192 = vmatprep.mubr.bf16.mxu0 %v5415
      %6193 = vmatmul.mubr.bf16.gmra.mrb[0].mxu0 %v5414
      %v6194 = vpop.f32.mrb[0].mxu0
      %v6195 = vadd.f32 %v6098, %v6194
      %v6196 = vpop.f32.mrb[0].mxu0
      %v6197 = vpop.f32.mrb[0].mxu0
      %v6198 = vadd.f32 %v6101, %v6197
      %v6199 = vpop.f32.mrb[0].mxu0
      %6200 = vmatprep.mubr.bf16.mxu0 %v5424
      %6201 = vmatmul.mubr.bf16.gmra.mrb[0].mxu0 %v5423
      %v6202 = vpop.f32.mrb[0].mxu0
      %v6203 = vadd.f32 %v6106, %v6202
      %v6204 = vpop.f32.mrb[0].mxu0
      %v6205 = vpop.f32.mrb[0].mxu0
      %v6206 = vadd.f32 %v6109, %v6205
      %v6207 = vpop.f32.mrb[0].mxu0
      %6208 = vmatprep.mubr.bf16.mxu0 %v5433
      %6209 = vmatmul.mubr.bf16.gmra.mrb[0].mxu0 %v5432
      %v6210 = vpop.f32.mrb[0].mxu0
      %v6211 = vadd.f32 %v6114, %v6210
      %v6212 = vpop.f32.mrb[0].mxu0
      %v6213 = vpop.f32.mrb[0].mxu0
      %v6214 = vadd.f32 %v6117, %v6213
      %v6215 = vpop.f32.mrb[0].mxu0
      %6216 = vmatprep.mubr.bf16.mxu0 %v5442
      %6217 = vmatmul.mubr.bf16.gmra.mrb[0].mxu0 %v5441
      %v6218 = vpop.f32.mrb[0].mxu0
      %v6219 = vadd.f32 %v6122, %v6218
      %v6220 = vpop.f32.mrb[0].mxu0
      %v6221 = vpop.f32.mrb[0].mxu0
      %v6222 = vadd.f32 %v6125, %v6221
      %v6223 = vpop.f32.mrb[0].mxu0
      %6224 = vdwg.mxu0
      %6225 = vmatprep.subr.bf16.mxu0 0
      %6226 = vmatpush1.bf16.msra.mxu0 %v5919
      %6227 = vmatprep.subr.bf16.mxu0 0
      %6228 = vmatpush1.bf16.msra.mxu0 %v5920
      %6229 = vmatprep.subr.bf16.mxu0 0
      %6230 = vmatpush1.bf16.msra.mxu0 %v5921
      %6231 = vmatprep.subr.bf16.mxu0 0
      %6232 = vmatpush1.bf16.msra.mxu0 %v5922
      %6233 = vmatprep.subr.bf16.mxu0 0
      %6234 = vmatpush1.bf16.msra.mxu0 %v5923
      %6235 = vmatprep.subr.bf16.mxu0 0
      %6236 = vmatpush1.bf16.msra.mxu0 %v5924
      %6237 = vmatprep.subr.bf16.mxu0 0
      %6238 = vmatpush1.bf16.msra.mxu0 %v5925
      %6239 = vmatprep.subr.bf16.mxu0 0
      %6240 = vmatpush1.bf16.msra.mxu0 %v5926
      %6241 = vmatprep.subr.bf16.mxu0 0
      %6242 = vmatpush1.bf16.msra.mxu0 %v5927
      %6243 = vmatprep.subr.bf16.mxu0 0
      %6244 = vmatpush1.bf16.msra.mxu0 %v5928
      %6245 = vmatprep.subr.bf16.mxu0 0
      %6246 = vmatpush1.bf16.msra.mxu0 %v5929
      %6247 = vmatprep.subr.bf16.mxu0 0
      %6248 = vmatpush1.bf16.msra.mxu0 %v5930
      %6249 = vmatprep.subr.bf16.mxu0 0
      %6250 = vmatpush1.bf16.msra.mxu0 %v5931
      %6251 = vmatprep.subr.bf16.mxu0 0
      %6252 = vmatpush1.bf16.msra.mxu0 %v5932
      %6253 = vmatprep.subr.bf16.mxu0 0
      %6254 = vmatpush1.bf16.msra.mxu0 %v5933
      %6255 = vmatprep.subr.bf16.mxu0 0
      %6256 = vmatpush1.bf16.msra.mxu0 %v5934
      %6257 = vmatprep.mubr.bf16.mxu0 %v5381
      %6258 = vmatmul.mubr.bf16.gmra.mrb[0].mxu0 %v5380
      %v6259 = vpop.f32.mrb[0].mxu0
      %v6260 = vadd.f32 %v6163, %v6259
      %v6261 = vpop.f32.mrb[0].mxu0
      %v6262 = vpop.f32.mrb[0].mxu0
      %v6263 = vadd.f32 %v6166, %v6262
      %v6264 = vpop.f32.mrb[0].mxu0
      %6265 = vmatprep.mubr.bf16.mxu0 %v5390
      %6266 = vmatmul.mubr.bf16.gmra.mrb[0].mxu0 %v5389
      %v6267 = vpop.f32.mrb[0].mxu0
      %v6268 = vadd.f32 %v6171, %v6267
      %v6269 = vpop.f32.mrb[0].mxu0
      %v6270 = vpop.f32.mrb[0].mxu0
      %v6271 = vadd.f32 %v6174, %v6270
      %v6272 = vpop.f32.mrb[0].mxu0
      %6273 = vmatprep.mubr.bf16.mxu0 %v5399
      %6274 = vmatmul.mubr.bf16.gmra.mrb[0].mxu0 %v5398
      %v6275 = vpop.f32.mrb[0].mxu0
      %v6276 = vadd.f32 %v6179, %v6275
      %v6277 = vpop.f32.mrb[0].mxu0
      %v6278 = vpop.f32.mrb[0].mxu0
      %v6279 = vadd.f32 %v6182, %v6278
      %v6280 = vpop.f32.mrb[0].mxu0
      %6281 = vmatprep.mubr.bf16.mxu0 %v5408
      %6282 = vmatmul.mubr.bf16.gmra.mrb[0].mxu0 %v5407
      %v6283 = vpop.f32.mrb[0].mxu0
      %v6284 = vadd.f32 %v6187, %v6283
      %v6285 = vpop.f32.mrb[0].mxu0
      %v6286 = vpop.f32.mrb[0].mxu0
      %v6287 = vadd.f32 %v6190, %v6286
      %v6288 = vpop.f32.mrb[0].mxu0
      %6289 = vmatprep.mubr.bf16.mxu0 %v5417
      %6290 = vmatmul.mubr.bf16.gmra.mrb[0].mxu0 %v5416
      %v6291 = vpop.f32.mrb[0].mxu0
      %v6292 = vadd.f32 %v6195, %v6291
      %v6293 = vpop.f32.mrb[0].mxu0
      %v6294 = vpop.f32.mrb[0].mxu0
      %v6295 = vadd.f32 %v6198, %v6294
      %v6296 = vpop.f32.mrb[0].mxu0
      %6297 = vmatprep.mubr.bf16.mxu0 %v5426
      %6298 = vmatmul.mubr.bf16.gmra.mrb[0].mxu0 %v5425
      %v6299 = vpop.f32.mrb[0].mxu0
      %v6300 = vadd.f32 %v6203, %v6299
      %v6301 = vpop.f32.mrb[0].mxu0
      %v6302 = vpop.f32.mrb[0].mxu0
      %v6303 = vadd.f32 %v6206, %v6302
      %v6304 = vpop.f32.mrb[0].mxu0
      %6305 = vmatprep.mubr.bf16.mxu0 %v5435
      %6306 = vmatmul.mubr.bf16.gmra.mrb[0].mxu0 %v5434
      %v6307 = vpop.f32.mrb[0].mxu0
      %v6308 = vadd.f32 %v6211, %v6307
      %v6309 = vpop.f32.mrb[0].mxu0
      %v6310 = vpop.f32.mrb[0].mxu0
      %v6311 = vadd.f32 %v6214, %v6310
      %v6312 = vpop.f32.mrb[0].mxu0
      %6313 = vmatprep.mubr.bf16.mxu0 %v5444
      %6314 = vmatmul.mubr.bf16.gmra.mrb[0].mxu0 %v5443
      %v6315 = vpop.f32.mrb[0].mxu0
      %v6316 = vadd.f32 %v6219, %v6315
      %v6317 = vpop.f32.mrb[0].mxu0
      %v6318 = vpop.f32.mrb[0].mxu0
      %v6319 = vadd.f32 %v6222, %v6318
      %v6320 = vpop.f32.mrb[0].mxu0
      %6321 = vdwg.mxu0
      %6322 = vmatprep.subr.bf16.mxu0 0
      %6323 = vmatpush1.bf16.msra.mxu0 %v5935
      %6324 = vmatprep.subr.bf16.mxu0 0
      %6325 = vmatpush1.bf16.msra.mxu0 %v5936
      %6326 = vmatprep.subr.bf16.mxu0 0
      %6327 = vmatpush1.bf16.msra.mxu0 %v5937
      %6328 = vmatprep.subr.bf16.mxu0 0
      %6329 = vmatpush1.bf16.msra.mxu0 %v5938
      %6330 = vmatprep.subr.bf16.mxu0 0
      %6331 = vmatpush1.bf16.msra.mxu0 %v5939
      %6332 = vmatprep.subr.bf16.mxu0 0
      %6333 = vmatpush1.bf16.msra.mxu0 %v5940
      %6334 = vmatprep.subr.bf16.mxu0 0
      %6335 = vmatpush1.bf16.msra.mxu0 %v5941
      %6336 = vmatprep.subr.bf16.mxu0 0
      %6337 = vmatpush1.bf16.msra.mxu0 %v5942
      %6338 = vmatprep.subr.bf16.mxu0 0
      %6339 = vmatpush1.bf16.msra.mxu0 %v5943
      %6340 = vmatprep.subr.bf16.mxu0 0
      %6341 = vmatpush1.bf16.msra.mxu0 %v5944
      %6342 = vmatprep.subr.bf16.mxu0 0
      %6343 = vmatpush1.bf16.msra.mxu0 %v5945
      %6344 = vmatprep.subr.bf16.mxu0 0
      %6345 = vmatpush1.bf16.msra.mxu0 %v5946
      %6346 = vmatprep.subr.bf16.mxu0 0
      %6347 = vmatpush1.bf16.msra.mxu0 %v5947
      %6348 = vmatprep.subr.bf16.mxu0 0
      %6349 = vmatpush1.bf16.msra.mxu0 %v5948
      %6350 = vmatprep.subr.bf16.mxu0 0
      %6351 = vmatpush1.bf16.msra.mxu0 %v5949
      %6352 = vmatprep.subr.bf16.mxu0 0
      %6353 = vmatpush1.bf16.msra.mxu0 %v5950
      %6354 = vmatprep.mubr.bf16.mxu0 %v5383
      %6355 = vmatmul.mubr.bf16.gmra.mrb[0].mxu0 %v5382
      %v6356 = vpop.f32.mrb[0].mxu0
      %v6357 = vadd.f32 %v6260, %v6356
      %v6358 = vpop.f32.mrb[0].mxu0
      %v6359 = vpop.f32.mrb[0].mxu0
      %v6360 = vadd.f32 %v6263, %v6359
      %v6361 = vpop.f32.mrb[0].mxu0
      %6362 = vmatprep.mubr.bf16.mxu0 %v5392
      %6363 = vmatmul.mubr.bf16.gmra.mrb[0].mxu0 %v5391
      %v6364 = vpop.f32.mrb[0].mxu0
      %v6365 = vadd.f32 %v6268, %v6364
      %v6366 = vpop.f32.mrb[0].mxu0
      %v6367 = vpop.f32.mrb[0].mxu0
      %v6368 = vadd.f32 %v6271, %v6367
      %v6369 = vpop.f32.mrb[0].mxu0
      %6370 = vmatprep.mubr.bf16.mxu0 %v5401
      %6371 = vmatmul.mubr.bf16.gmra.mrb[0].mxu0 %v5400
      %v6372 = vpop.f32.mrb[0].mxu0
      %v6373 = vadd.f32 %v6276, %v6372
      %v6374 = vpop.f32.mrb[0].mxu0
      %v6375 = vpop.f32.mrb[0].mxu0
      %v6376 = vadd.f32 %v6279, %v6375
      %v6377 = vpop.f32.mrb[0].mxu0
      %6378 = vmatprep.mubr.bf16.mxu0 %v5410
      %6379 = vmatmul.mubr.bf16.gmra.mrb[0].mxu0 %v5409
      %v6380 = vpop.f32.mrb[0].mxu0
      %v6381 = vadd.f32 %v6284, %v6380
      %v6382 = vpop.f32.mrb[0].mxu0
      %v6383 = vpop.f32.mrb[0].mxu0
      %v6384 = vadd.f32 %v6287, %v6383
      %v6385 = vpop.f32.mrb[0].mxu0
      %6386 = vmatprep.mubr.bf16.mxu0 %v5419
      %6387 = vmatmul.mubr.bf16.gmra.mrb[0].mxu0 %v5418
      %v6388 = vpop.f32.mrb[0].mxu0
      %v6389 = vadd.f32 %v6292, %v6388
      %v6390 = vpop.f32.mrb[0].mxu0
      %v6391 = vpop.f32.mrb[0].mxu0
      %v6392 = vadd.f32 %v6295, %v6391
      %v6393 = vpop.f32.mrb[0].mxu0
      %6394 = vmatprep.mubr.bf16.mxu0 %v5428
      %6395 = vmatmul.mubr.bf16.gmra.mrb[0].mxu0 %v5427
      %v6396 = vpop.f32.mrb[0].mxu0
      %v6397 = vadd.f32 %v6300, %v6396
      %v6398 = vpop.f32.mrb[0].mxu0
      %v6399 = vpop.f32.mrb[0].mxu0
      %v6400 = vadd.f32 %v6303, %v6399
      %v6401 = vpop.f32.mrb[0].mxu0
      %6402 = vmatprep.mubr.bf16.mxu0 %v5437
      %6403 = vmatmul.mubr.bf16.gmra.mrb[0].mxu0 %v5436
      %v6404 = vpop.f32.mrb[0].mxu0
      %v6405 = vadd.f32 %v6308, %v6404
      %v6406 = vpop.f32.mrb[0].mxu0
      %v6407 = vpop.f32.mrb[0].mxu0
      %v6408 = vadd.f32 %v6311, %v6407
      %v6409 = vpop.f32.mrb[0].mxu0
      %6410 = vmatprep.mubr.bf16.mxu0 %v5446
      %6411 = vmatmul.mubr.bf16.gmra.mrb[0].mxu0 %v5445
      %v6412 = vpop.f32.mrb[0].mxu0
      %v6413 = vadd.f32 %v6316, %v6412
      %v6414 = vpop.f32.mrb[0].mxu0
      %v6415 = vpop.f32.mrb[0].mxu0
      %v6416 = vadd.f32 %v6319, %v6415
      %v6417 = vpop.f32.mrb[0].mxu0
      %6418 = vdwg.mxu0
      %6419 = vmatprep.subr.bf16.mxu0 0
      %6420 = vmatpush1.bf16.msra.mxu0 %v5951
      %6421 = vmatprep.subr.bf16.mxu0 0
      %6422 = vmatpush1.bf16.msra.mxu0 %v5952
      %6423 = vmatprep.subr.bf16.mxu0 0
      %6424 = vmatpush1.bf16.msra.mxu0 %v5953
      %6425 = vmatprep.subr.bf16.mxu0 0
      %6426 = vmatpush1.bf16.msra.mxu0 %v5954
      %6427 = vmatprep.subr.bf16.mxu0 0
      %6428 = vmatpush1.bf16.msra.mxu0 %v5955
      %6429 = vmatprep.subr.bf16.mxu0 0
      %6430 = vmatpush1.bf16.msra.mxu0 %v5956
      %6431 = vmatprep.subr.bf16.mxu0 0
      %6432 = vmatpush1.bf16.msra.mxu0 %v5957
      %6433 = vmatprep.subr.bf16.mxu0 0
      %6434 = vmatpush1.bf16.msra.mxu0 %v5958
      %6435 = vmatprep.subr.bf16.mxu0 0
      %6436 = vmatpush1.bf16.msra.mxu0 0
      %6437 = vmatprep.subr.bf16.mxu0 0
      %6438 = vmatpush1.bf16.msra.mxu0 0
      %6439 = vmatprep.subr.bf16.mxu0 0
      %6440 = vmatpush1.bf16.msra.mxu0 0
      %6441 = vmatprep.subr.bf16.mxu0 0
      %6442 = vmatpush1.bf16.msra.mxu0 0
      %6443 = vmatprep.subr.bf16.mxu0 0
      %6444 = vmatpush1.bf16.msra.mxu0 0
      %6445 = vmatprep.subr.bf16.mxu0 0
      %6446 = vmatpush1.bf16.msra.mxu0 0
      %6447 = vmatprep.subr.bf16.mxu0 0
      %6448 = vmatpush1.bf16.msra.mxu0 0
      %6449 = vmatprep.subr.bf16.mxu0 0
      %6450 = vmatpush1.bf16.msra.mxu0 0
      %6451 = vmatprep.mubr.bf16.mxu0 0
      %6452 = vmatmul.mubr.bf16.gmra.mrb[0].mxu0 %v5384
      %v6453 = vpop.f32.mrb[0].mxu0
      %v6454 = vadd.f32 %v6357, %v6453
      %v6455 = vpop.f32.mrb[0].mxu0
      %v6456 = vpop.f32.mrb[0].mxu0
      %v6457 = vadd.f32 %v6360, %v6456
      %v6458 = vpop.f32.mrb[0].mxu0
      %6459 = vmatprep.mubr.bf16.mxu0 0
      %6460 = vmatmul.mubr.bf16.gmra.mrb[0].mxu0 %v5393
      %v6461 = vpop.f32.mrb[0].mxu0
      %v6462 = vadd.f32 %v6365, %v6461
      %v6463 = vpop.f32.mrb[0].mxu0
      %v6464 = vpop.f32.mrb[0].mxu0
      %v6465 = vadd.f32 %v6368, %v6464
      %v6466 = vpop.f32.mrb[0].mxu0
      %6467 = vmatprep.mubr.bf16.mxu0 0
      %6468 = vmatmul.mubr.bf16.gmra.mrb[0].mxu0 %v5402
      %v6469 = vpop.f32.mrb[0].mxu0
      %v6470 = vadd.f32 %v6373, %v6469
      %v6471 = vpop.f32.mrb[0].mxu0
      %v6472 = vpop.f32.mrb[0].mxu0
      %v6473 = vadd.f32 %v6376, %v6472
      %v6474 = vpop.f32.mrb[0].mxu0
      %6475 = vmatprep.mubr.bf16.mxu0 0
      %6476 = vmatmul.mubr.bf16.gmra.mrb[0].mxu0 %v5411
      %v6477 = vpop.f32.mrb[0].mxu0
      %v6478 = vadd.f32 %v6381, %v6477
      %v6479 = vpop.f32.mrb[0].mxu0
      %v6480 = vpop.f32.mrb[0].mxu0
      %v6481 = vadd.f32 %v6384, %v6480
      %v6482 = vpop.f32.mrb[0].mxu0
      %6483 = vmatprep.mubr.bf16.mxu0 0
      %6484 = vmatmul.mubr.bf16.gmra.mrb[0].mxu0 %v5420
      %v6485 = vpop.f32.mrb[0].mxu0
      %v6486 = vadd.f32 %v6389, %v6485
      %v6487 = vpop.f32.mrb[0].mxu0
      %v6488 = vpop.f32.mrb[0].mxu0
      %v6489 = vadd.f32 %v6392, %v6488
      %v6490 = vpop.f32.mrb[0].mxu0
      %6491 = vmatprep.mubr.bf16.mxu0 0
      %6492 = vmatmul.mubr.bf16.gmra.mrb[0].mxu0 %v5429
      %v6493 = vpop.f32.mrb[0].mxu0
      %v6494 = vadd.f32 %v6397, %v6493
      %v6495 = vpop.f32.mrb[0].mxu0
      %v6496 = vpop.f32.mrb[0].mxu0
      %v6497 = vadd.f32 %v6400, %v6496
      %v6498 = vpop.f32.mrb[0].mxu0
      %6499 = vmatprep.mubr.bf16.mxu0 0
      %6500 = vmatmul.mubr.bf16.gmra.mrb[0].mxu0 %v5438
      %v6501 = vpop.f32.mrb[0].mxu0
      %v6502 = vadd.f32 %v6405, %v6501
      %v6503 = vpop.f32.mrb[0].mxu0
      %v6504 = vpop.f32.mrb[0].mxu0
      %v6505 = vadd.f32 %v6408, %v6504
      %v6506 = vpop.f32.mrb[0].mxu0
      %6507 = vmatprep.mubr.bf16.mxu0 0
      %6508 = vmatmul.mubr.bf16.gmra.mrb[0].mxu0 %v5447
      %v6509 = vpop.f32.mrb[0].mxu0
      %v6510 = vadd.f32 %v6413, %v6509
      %v6511 = vpop.f32.mrb[0].mxu0
      %v6512 = vpop.f32.mrb[0].mxu0
      %v6513 = vadd.f32 %v6416, %v6512
      %v6514 = vpop.f32.mrb[0].mxu0
      %6515 = vdwg.mxu0
      %v6516 = vadd.f32 %v6454, %v482
      %v6517 = vadd.f32 %v6457, %v483
      %v6518 = vadd.f32 %v6462, %v484
      %v6519 = vadd.f32 %v6465, %v485
      %v6520 = vadd.f32 %v6470, %v486
      %v6521 = vadd.f32 %v6473, %v487
      %v6522 = vadd.f32 %v6478, %v488
      %v6523 = vadd.f32 %v6481, %v489
      %v6524 = vadd.f32 %v6486, %v490
      %v6525 = vadd.f32 %v6489, %v491
      %v6526 = vadd.f32 %v6494, %v492
      %v6527 = vadd.f32 %v6497, %v493
      %v6528 = vadd.f32 %v6502, %v494
      %v6529 = vadd.f32 %v6505, %v495
      %v6530 = vadd.f32 %v6510, %v496
      %v6531 = vadd.f32 %v6513, %v497
      %v6532 = vmax.f32 %v6516, 0.0
      %v6533 = vmax.f32 %v6517, 0.0
      %v6534 = vmax.f32 %v6518, 0.0
      %v6535 = vmax.f32 %v6519, 0.0
      %v6536 = vmax.f32 %v6520, 0.0
      %v6537 = vmax.f32 %v6521, 0.0
      %v6538 = vmax.f32 %v6522, 0.0
      %v6539 = vmax.f32 %v6523, 0.0
      %v6540 = vmax.f32 %v6524, 0.0
      %v6541 = vmax.f32 %v6525, 0.0
      %v6542 = vmax.f32 %v6526, 0.0
      %v6543 = vmax.f32 %v6527, 0.0
      %v6544 = vmax.f32 %v6528, 0.0
      %v6545 = vmax.f32 %v6529, 0.0
      %v6546 = vmax.f32 %v6530, 0.0
      %v6547 = vmax.f32 %v6531, 0.0
      %6548 = vst.msk [vmem:[%s455] sm:$0xff] %vm510, %v6532
      %6549 = vst.msk [vmem:[%s455 + $0x8] sm:$0xff] %vm510, %v6533
      %6550 = vst.msk [vmem:[%s455 + $0x10] sm:$0xff] %vm510, %v6534
      %6551 = vst.msk [vmem:[%s455 + $0x18] sm:$0xff] %vm510, %v6535
      %6552 = vst.msk [vmem:[%s455 + $0x20] sm:$0xff] %vm510, %v6536
      %6553 = vst.msk [vmem:[%s455 + $0x28] sm:$0xff] %vm510, %v6537
      %6554 = vst.msk [vmem:[%s455 + $0x30] sm:$0xff] %vm510, %v6538
      %6555 = vst.msk [vmem:[%s455 + $0x38] sm:$0xff] %vm510, %v6539
      %6556 = vst.msk [vmem:[%s455 + $0x40] sm:$0xff] %vm510, %v6540
      %6557 = vst.msk [vmem:[%s455 + $0x48] sm:$0xff] %vm510, %v6541
      %6558 = vst.msk [vmem:[%s455 + $0x50] sm:$0xff] %vm510, %v6542
      %6559 = vst.msk [vmem:[%s455 + $0x58] sm:$0xff] %vm510, %v6543
      %6560 = vst.msk [vmem:[%s455 + $0x60] sm:$0xff] %vm510, %v6544
      %6561 = vst.msk [vmem:[%s455 + $0x68] sm:$0xff] %vm510, %v6545
      %6562 = vst.msk [vmem:[%s455 + $0x70] sm:$0xff] %vm510, %v6546
      %6563 = vst.msk [vmem:[%s455 + $0x78] sm:$0xff] %vm510, %v6547
      %s6564 = smul.u32 8, %s23
      %p6565 = scmp.lt.s32.totalorder %s22, 1
      %s6566 = scalar_select %p6565, %s22, 1
      %p6567 = scmp.lt.s32.totalorder %s6564, 15
      %s6568 = scalar_select %p6567, %s6564, 15
      %s6569 = smul.addr %s6568, 2
      %s6570 = smul.addr %s6566, 32
      %s6571 = sadd.s32 %s6569, %s6570
      %s6572 = smul.addr %s6571, 8
      %s6573 = scalar_lea.vmem %s7, %s6572
      // Predicated region
      $region57: #{tpu_custom_call.1} parent=47 // pred_check
        %p6574 = pneg %p234
      $region58: #{tpu_custom_call.1} parent=47 // pred_check_branch
        %6576 = sbr.rel (%p6574) target = $region60
      $region59: #{tpu_custom_call.1} parent=47 // pred_region
        %s6577 = smul.u32 8, %s23
      $region60: #{tpu_custom_call.1} parent=47 // pred_fallthru
        _
    $region48: #{tpu_custom_call.1} parent=5 // pred_fallthru
      _
    %p6578 = scmp.le.s32.totalorder 2, %s13
    // Predicated region
    $region61: #{tpu_custom_call.1} parent=5 // pred_check
      %p6579 = pneg %p6578
    $region62: #{tpu_custom_call.1} parent=5 // pred_check_branch
      %6581 = sbr.rel (%p6579) target = $region64
    $region63: #{tpu_custom_call.1} parent=5 // pred_region
      %s6582 = ssub.s32 %s13, 2
      // Predicated region
      $region65: #{tpu_custom_call.1} parent=63 // pred_check
        %p6583 = pneg %p240
      $region66: #{tpu_custom_call.1} parent=63 // pred_check_branch
        %6585 = sbr.rel (%p6583) target = $region68
      $region67: #{tpu_custom_call.1} parent=63 // pred_region
        %s6586 = smul.u32 8, %s25
        %p6587 = scmp.lt.s32.totalorder %s24, 1
        %s6588 = scalar_select %p6587, %s24, 1
        %p6589 = scmp.lt.s32.totalorder %s6586, 15
        %s6590 = scalar_select %p6589, %s6586, 15
        %s6591 = smul.addr %s6590, 2
        %s6592 = smul.addr %s6588, 32
        %s6593 = sadd.s32 %s6591, %s6592
        %s6594 = smul.addr %s6593, 8
        %s6595 = scalar_lea.vmem %s7, %s6594
      $region68: #{tpu_custom_call.1} parent=63 // pred_fallthru
        _
    $region64: #{tpu_custom_call.1} parent=5 // pred_fallthru
      _
  $region6: #{tpu_custom_call.1} parent=0 // loop_footer
    %s17 = sadd.s32 1, %s13
  $region7: #{tpu_custom_call.1} parent=0 // loop_footer_branch
    %12 = sbr.rel target = $region3
  $region8: #{tpu_custom_call.1} parent=0 // loop_exit
    _

</llo_original>
